<compile_context>
chip_gen: v6e
topology: v6e:2x2x1
jax: 0.10.0
libtpu: 0.0.40
codegen_flags: <defaults>
</compile_context>

<pallas_src>
from functools import partial

import numpy as np
import jax
import jax.numpy as jnp
from jax.experimental import pallas as pl
from jax.experimental.pallas import tpu as pltpu

EPS = 1e-5  # PyTorch LayerNorm default eps
F32 = jnp.float32
BF16 = jnp.bfloat16


def _layernorm(h, gamma, beta):
    # Single-pass LayerNorm: the two lane reductions are independent (shorter
    # XLU chain than mean -> subtract -> square -> mean).  f32 throughout.
    inv_d = 1.0 / h.shape[-1]
    s1 = jnp.sum(h, axis=-1, keepdims=True)
    s2 = jnp.sum(h * h, axis=-1, keepdims=True)
    mu = s1 * inv_d
    var = s2 * inv_d - mu * mu
    return (h - mu) * jax.lax.rsqrt(var + EPS) * gamma + beta


# ---------------------------------------------------------------- kernel -----

def protein_net_kernel(
        idx_ref,        # (N, 1)  int32  token ids
        src_ref,        # (E, 1)  int32  edge_index[0]
        dst_ref,        # (E, 1)  int32  edge_index[1]
        dst_t_ref,      # (1, E)  int32  edge_index[1] (lane layout, for scatter)
        ea_raw_ref,     # (E, A)  f32    raw edge features
        embx_tab_ref,   # (V, H)  bf16   folded relu(Embedding) @ W + b
        embx_g_ref, embx_beta_ref,                       # (1, H) f32
        emba_w1_ref, emba_b1_ref,                        # (A, H) bf16, (1, H) f32
        emba_w2_ref, emba_b2_ref,                        # (H, H) bf16, (1, H) f32
        emba_g_ref, emba_beta_ref,                       # (1, H) f32
        cw1_node_ref,   # (L, H, 4H) bf16  [W1_xi | W1_xj]
        cw1_ea_ref,     # (L, H, 2H) bf16  W1_ea
        cb1_ref,        # (L, 1, 2H) f32
        cw2_ref,        # (L, 2H, H) bf16
        cb2_ref,        # (L, 1, H)  f32
        cgx_ref, cbx_ref, cge_ref, cbe_ref,              # (L, 1, H) f32 each
        out_w_ref,      # (H, OUT_PAD) bf16 (zero-padded to 128 lanes)
        out_b_ref,      # (1, OUT_PAD) f32
        out_ref,        # (N, OUT_PAD) f32
        *, hidden, n_layers):
    n = idx_ref.shape[0]
    e = src_ref.shape[0]
    v = embx_tab_ref.shape[0]
    h2 = 2 * hidden

    # ---- gather / scatter operators: built ONCE, directly in bf16 -----------
    # oh_ij[e, l] = (dst[e]==l) for l<N, (src[e]==l-N) for l>=N, so that
    # oh_ij @ [[p_i];[p_j]] == x_i @ W1_xi + x_j @ W1_xj (reassociated gather).
    lane2n = jax.lax.broadcasted_iota(jnp.int32, (e, 2 * n), 1)
    oh_ij = ((dst_ref[...] == lane2n) |
             (src_ref[...] == (lane2n - n))).astype(BF16)            # (E, 2N)
    sub_node = jax.lax.broadcasted_iota(jnp.int32, (n, e), 0)
    oh_agg = (dst_t_ref[...] == sub_node).astype(BF16)               # (N, E) scatter-add

    # ---- embed_x: folded Embedding->ReLU->Linear lookup + LayerNorm ----------
    lane_v = jax.lax.broadcasted_iota(jnp.int32, (n, v), 1)
    oh_tok = (idx_ref[...] == lane_v).astype(BF16)                   # (N, V)
    hx = jnp.dot(oh_tok, embx_tab_ref[...], preferred_element_type=F32)
    x = _layernorm(hx, embx_g_ref[...], embx_beta_ref[...])          # (N, H) f32

    # ---- embed_adj: Linear -> ReLU -> Linear -> LayerNorm ---------------------
    ha = jnp.dot(ea_raw_ref[...].astype(BF16), emba_w1_ref[...],
                 preferred_element_type=F32) + emba_b1_ref[...]
    ha = jnp.maximum(ha, 0.0)
    ha = jnp.dot(ha.astype(BF16), emba_w2_ref[...],
                 preferred_element_type=F32) + emba_b2_ref[...]
    ea = _layernorm(ha, emba_g_ref[...], emba_beta_ref[...])         # (E, H) f32

    # ---- graph-conv layers (activations resident across layers) --------------
    for layer in range(n_layers):
        # Node-level, lane-dense matmul: p = x @ [W1_xi | W1_xj]  (N, 4H).
        p = jnp.dot(x.astype(BF16), cw1_node_ref[layer],
                    preferred_element_type=F32)
        # Stack [p_i ; p_j] along sublanes (lane halves via XLU roll + aligned
        # slices, both start-aligned).
        p_lo = p[:, :h2]
        p_hi = pltpu.roll(p, shift=h2, axis=1)[:, :h2]
        p_stacked = jnp.concatenate([p_lo, p_hi], axis=0).astype(BF16)  # (2N, 2H)

        # ONE gather matmul + edge-attr term + bias.
        hmsg = (jnp.dot(oh_ij, p_stacked, preferred_element_type=F32)
                + jnp.dot(ea.astype(BF16), cw1_ea_ref[layer],
                          preferred_element_type=F32)
                + cb1_ref[layer])                                     # (E, 2H)
        hmsg = jnp.maximum(hmsg, 0.0)
        msg = jnp.dot(hmsg.astype(BF16), cw2_ref[layer],
                      preferred_element_type=F32) + cb2_ref[layer]    # (E, H)

        # Scatter-add messages to the target node (aggr='add').
        x_agg = jnp.dot(oh_agg, msg.astype(BF16),
                        preferred_element_type=F32)                   # (N, H)

        x = x + _layernorm(x_agg, cgx_ref[layer], cbx_ref[layer])
        ea = ea + _layernorm(msg, cge_ref[layer], cbe_ref[layer])
        if layer < n_layers - 1:        # ReLU after residual, except last conv
            x = jnp.maximum(x, 0.0)
            ea = jnp.maximum(ea, 0.0)

    # ---- linear_out (lane-dense padded output, unmasked stores) --------------
    out_ref[...] = (jnp.dot(x.astype(BF16), out_w_ref[...],
                            preferred_element_type=F32) + out_b_ref[...])


# --------------------------------------------------------------- weights -----

def init_params(key, x_vocab, adj_in, hidden, out_size):
    keys = iter(jax.random.split(key, 64))

    def lin(din, dout):
        w = jax.random.normal(next(keys), (din, dout), F32) / jnp.sqrt(float(din))
        b = jax.random.normal(next(keys), (1, dout), F32) * 0.01
        return w, b

    ones = jnp.ones((1, hidden), F32)
    zeros = jnp.zeros((1, hidden), F32)

    p = {}
    p["emb_table"] = jax.random.normal(next(keys), (x_vocab, hidden), F32)
    p["embx_w"], p["embx_b"] = lin(hidden, hidden)
    p["embx_g"], p["embx_beta"] = ones, zeros

    p["emba_w1"], p["emba_b1"] = lin(adj_in, hidden)
    p["emba_w2"], p["emba_b2"] = lin(hidden, hidden)
    p["emba_g"], p["emba_beta"] = ones, zeros

    convs = []
    for _ in range(4):
        cin = 3 * hidden                    # (2 + bool(adj_input_size)) * hidden
        w1, b1 = lin(cin, 2 * hidden)
        w2, b2 = lin(2 * hidden, hidden)
        convs.append(dict(w1=w1, b1=b1, w2=w2, b2=b2,
                          gx=ones, bx=zeros, ge=ones, be=zeros))
    p["convs"] = convs

    p["out_w"], p["out_b"] = lin(hidden, out_size)
    return p


# --------------------------------------------------------------- forward -----

def protein_net_forward(params, x_idx, edge_index, edge_attr, hidden, out_size):
    n = x_idx.shape[0]
    e = edge_index.shape[1]
    lanes = 128
    out_pad = ((out_size + lanes - 1) // lanes) * lanes
    h = hidden

    idx = x_idx.reshape(n, 1).astype(jnp.int32)
    src = edge_index[0].reshape(e, 1).astype(jnp.int32)
    dst = edge_index[1].reshape(e, 1).astype(jnp.int32)
    dst_t = edge_index[1].reshape(1, e).astype(jnp.int32)

    # Fold Embedding -> ReLU -> Linear into a single bf16 (V, H) table (host).
    embx_tab = (jnp.maximum(params["emb_table"], 0.0) @ params["embx_w"]
                + params["embx_b"]).astype(BF16)

    # Lane-dense (128-wide) output projection, pre-cast to bf16; unpadded after.
    out_w = (jnp.zeros((hidden, out_pad), F32)
             .at[:, :out_size].set(params["out_w"])).astype(BF16)
    out_b = jnp.zeros((1, out_pad), F32).at[:, :out_size].set(params["out_b"])

    # Pre-split + pre-cast conv weights on host (no in-kernel slices / casts):
    #   cw1_node = [W1_xi | W1_xj]  (L, H, 4H) bf16,   cw1_ea = W1_ea (L, H, 2H).
    convs = params["convs"]
    cw1_node = jnp.stack(
        [jnp.concatenate([c["w1"][:h, :], c["w1"][h:2 * h, :]], axis=1)
         for c in convs], axis=0).astype(BF16)
    cw1_ea = jnp.stack([c["w1"][2 * h:3 * h, :] for c in convs], axis=0).astype(BF16)
    cb1 = jnp.stack([c["b1"] for c in convs], axis=0)
    cw2 = jnp.stack([c["w2"] for c in convs], axis=0).astype(BF16)
    cb2 = jnp.stack([c["b2"] for c in convs], axis=0)
    cgx = jnp.stack([c["gx"] for c in convs], axis=0)
    cbx = jnp.stack([c["bx"] for c in convs], axis=0)
    cge = jnp.stack([c["ge"] for c in convs], axis=0)
    cbe = jnp.stack([c["be"] for c in convs], axis=0)

    args = (idx, src, dst, dst_t, edge_attr.astype(F32),
            embx_tab, params["embx_g"], params["embx_beta"],
            params["emba_w1"].astype(BF16), params["emba_b1"],
            params["emba_w2"].astype(BF16), params["emba_b2"],
            params["emba_g"], params["emba_beta"],
            cw1_node, cw1_ea, cb1, cw2, cb2,
            cgx, cbx, cge, cbe,
            out_w, out_b)

    kernel = partial(protein_net_kernel, hidden=hidden, n_layers=len(convs))
    out_padded = pl.pallas_call(
        kernel,
        out_shape=jax.ShapeDtypeStruct((n, out_pad), F32),
        in_specs=[pl.BlockSpec(memory_space=pltpu.MemorySpace.VMEM) for _ in args],
        out_specs=pl.BlockSpec(memory_space=pltpu.MemorySpace.VMEM),
        compiler_params=pltpu.CompilerParams(
            # Right-sized: working set < 1 MiB at these shapes; also well under
            # v7x's 64 MiB per-TensorCore VMEM.
            vmem_limit_bytes=8 * 1024 * 1024,
        ),
    )(*args)
    return out_padded[:, :out_size]


# ------------------------------------------------------------------ main -----

if __name__ == "__main__":
    x_vocab, adj_in, hidden, out_size = 20, 4, 32, 20
    n_nodes = 8

    # Fully-connected directed graph WITHOUT self loops (remove_self_loops by
    # construction).
    s, d = np.meshgrid(np.arange(n_nodes), np.arange(n_nodes), indexing="ij")
    keep = s.ravel() != d.ravel()
    edge_index = jnp.asarray(np.stack([s.ravel()[keep], d.ravel()[keep]], axis=0),
                             dtype=jnp.int32)                      # (2, 56)
    n_edges = int(edge_index.shape[1])

    key = jax.random.PRNGKey(0)
    k_idx, k_ea, k_par = jax.random.split(key, 3)
    x_idx = jax.random.randint(k_idx, (n_nodes,), 0, x_vocab, dtype=jnp.int32)
    edge_attr = jax.random.normal(k_ea, (n_edges, adj_in), F32)
    params = init_params(k_par, x_vocab, adj_in, hidden, out_size)

    out = protein_net_forward(params, x_idx, edge_index, edge_attr, hidden, out_size)
    jax.block_until_ready(out)
    assert out.shape == (n_nodes, out_size)
    print("KERNEL_OK")
</pallas_src>

<mosaic_0001>
module attributes {stable_mosaic.version = 11 : i64} {
  func.func @protein_net_kernel(%arg0: memref<8x1xi32, #tpu.memory_space<vmem>>, %arg1: memref<56x1xi32, #tpu.memory_space<vmem>>, %arg2: memref<56x1xi32, #tpu.memory_space<vmem>>, %arg3: memref<1x56xi32, #tpu.memory_space<vmem>>, %arg4: memref<56x4xf32, #tpu.memory_space<vmem>>, %arg5: memref<20x32xbf16, #tpu.memory_space<vmem>>, %arg6: memref<1x32xf32, #tpu.memory_space<vmem>>, %arg7: memref<1x32xf32, #tpu.memory_space<vmem>>, %arg8: memref<4x32xbf16, #tpu.memory_space<vmem>>, %arg9: memref<1x32xf32, #tpu.memory_space<vmem>>, %arg10: memref<32x32xbf16, #tpu.memory_space<vmem>>, %arg11: memref<1x32xf32, #tpu.memory_space<vmem>>, %arg12: memref<1x32xf32, #tpu.memory_space<vmem>>, %arg13: memref<1x32xf32, #tpu.memory_space<vmem>>, %arg14: memref<4x32x128xbf16, #tpu.memory_space<vmem>>, %arg15: memref<4x32x64xbf16, #tpu.memory_space<vmem>>, %arg16: memref<4x1x64xf32, #tpu.memory_space<vmem>>, %arg17: memref<4x64x32xbf16, #tpu.memory_space<vmem>>, %arg18: memref<4x1x32xf32, #tpu.memory_space<vmem>>, %arg19: memref<4x1x32xf32, #tpu.memory_space<vmem>>, %arg20: memref<4x1x32xf32, #tpu.memory_space<vmem>>, %arg21: memref<4x1x32xf32, #tpu.memory_space<vmem>>, %arg22: memref<4x1x32xf32, #tpu.memory_space<vmem>>, %arg23: memref<32x128xbf16, #tpu.memory_space<vmem>>, %arg24: memref<1x128xf32, #tpu.memory_space<vmem>>, %arg25: memref<8x128xf32, #tpu.memory_space<vmem>>) attributes {dimension_semantics = [], scalar_prefetch = 0 : i64, scratch_operands = 0 : i64, tpu.core_type = #tpu.core_type<tc>} {
    %0 = tpu.iota {dimensions = array<i32: 1>} : vector<56x16xi32>
    %c0 = arith.constant 0 : index
    %c0_0 = arith.constant 0 : index
    %1 = vector.load %arg2[%c0, %c0_0] : memref<56x1xi32, #tpu.memory_space<vmem>>, vector<56x1xi32>
    %2 = vector.broadcast %1 : vector<56x1xi32> to vector<56x16xi32>
    %3 = arith.cmpi eq, %2, %0 : vector<56x16xi32>
    %c0_1 = arith.constant 0 : index
    %c0_2 = arith.constant 0 : index
    %4 = vector.load %arg1[%c0_1, %c0_2] : memref<56x1xi32, #tpu.memory_space<vmem>>, vector<56x1xi32>
    %c8_i32 = arith.constant 8 : i32
    %5 = vector.broadcast %c8_i32 : i32 to vector<56x16xi32>
    %6 = arith.subi %0, %5 : vector<56x16xi32>
    %7 = vector.broadcast %4 : vector<56x1xi32> to vector<56x16xi32>
    %8 = arith.cmpi eq, %7, %6 : vector<56x16xi32>
    %9 = arith.ori %3, %8 : vector<56x16xi1>
    %10 = arith.extui %9 : vector<56x16xi1> to vector<56x16xi32>
    %11 = arith.sitofp %10 : vector<56x16xi32> to vector<56x16xf32>
    %12 = arith.truncf %11 : vector<56x16xf32> to vector<56x16xbf16>
    %13 = tpu.iota {dimensions = array<i32: 0>} : vector<8x56xi32>
    %c0_3 = arith.constant 0 : index
    %c0_4 = arith.constant 0 : index
    %14 = vector.load %arg3[%c0_3, %c0_4] : memref<1x56xi32, #tpu.memory_space<vmem>>, vector<1x56xi32>
    %15 = vector.broadcast %14 : vector<1x56xi32> to vector<8x56xi32>
    %16 = arith.cmpi eq, %15, %13 : vector<8x56xi32>
    %17 = arith.extui %16 : vector<8x56xi1> to vector<8x56xi32>
    %18 = arith.sitofp %17 : vector<8x56xi32> to vector<8x56xf32>
    %19 = arith.truncf %18 : vector<8x56xf32> to vector<8x56xbf16>
    %20 = tpu.iota {dimensions = array<i32: 1>} : vector<8x20xi32>
    %c0_5 = arith.constant 0 : index
    %c0_6 = arith.constant 0 : index
    %21 = vector.load %arg0[%c0_5, %c0_6] : memref<8x1xi32, #tpu.memory_space<vmem>>, vector<8x1xi32>
    %22 = vector.broadcast %21 : vector<8x1xi32> to vector<8x20xi32>
    %23 = arith.cmpi eq, %22, %20 : vector<8x20xi32>
    %24 = arith.extui %23 : vector<8x20xi1> to vector<8x20xi32>
    %25 = arith.sitofp %24 : vector<8x20xi32> to vector<8x20xf32>
    %26 = arith.truncf %25 : vector<8x20xf32> to vector<8x20xbf16>
    %c0_7 = arith.constant 0 : index
    %c0_8 = arith.constant 0 : index
    %27 = vector.load %arg5[%c0_7, %c0_8] : memref<20x32xbf16, #tpu.memory_space<vmem>>, vector<20x32xbf16>
    %cst = arith.constant dense<0.000000e+00> : vector<8x32xf32>
    %28 = tpu.matmul %26, %27, %cst {dimension_numbers = #tpu.dot_dimension_numbers<[1], [0], [0], [1], [0, 0, 1, 1], [], []>} : vector<8x20xbf16>, vector<20x32xbf16>, vector<8x32xf32> -> vector<8x32xf32>
    %c0_9 = arith.constant 0 : index
    %c0_10 = arith.constant 0 : index
    %29 = vector.load %arg6[%c0_9, %c0_10] : memref<1x32xf32, #tpu.memory_space<vmem>>, vector<1x32xf32>
    %c0_11 = arith.constant 0 : index
    %c0_12 = arith.constant 0 : index
    %30 = vector.load %arg7[%c0_11, %c0_12] : memref<1x32xf32, #tpu.memory_space<vmem>>, vector<1x32xf32>
    %cst_13 = arith.constant dense<0.000000e+00> : vector<8xf32>
    %31 = vector.multi_reduction <add>, %28, %cst_13 [1] : vector<8x32xf32> to vector<8xf32>
    %32 = vector.shape_cast %31 : vector<8xf32> to vector<8x1xf32>
    %33 = arith.mulf %28, %28 : vector<8x32xf32>
    %cst_14 = arith.constant dense<0.000000e+00> : vector<8xf32>
    %34 = vector.multi_reduction <add>, %33, %cst_14 [1] : vector<8x32xf32> to vector<8xf32>
    %35 = vector.shape_cast %34 : vector<8xf32> to vector<8x1xf32>
    %cst_15 = arith.constant 3.125000e-02 : f32
    %36 = vector.broadcast %cst_15 : f32 to vector<8x1xf32>
    %37 = arith.mulf %32, %36 : vector<8x1xf32>
    %cst_16 = arith.constant 3.125000e-02 : f32
    %38 = vector.broadcast %cst_16 : f32 to vector<8x1xf32>
    %39 = arith.mulf %35, %38 : vector<8x1xf32>
    %40 = arith.mulf %37, %37 : vector<8x1xf32>
    %41 = arith.subf %39, %40 : vector<8x1xf32>
    %42 = vector.broadcast %37 : vector<8x1xf32> to vector<8x32xf32>
    %43 = arith.subf %28, %42 : vector<8x32xf32>
    %cst_17 = arith.constant 9.99999974E-6 : f32
    %44 = vector.broadcast %cst_17 : f32 to vector<8x1xf32>
    %45 = arith.addf %41, %44 : vector<8x1xf32>
    %46 = math.rsqrt %45 : vector<8x1xf32>
    %47 = vector.broadcast %46 : vector<8x1xf32> to vector<8x32xf32>
    %48 = arith.mulf %43, %47 : vector<8x32xf32>
    %49 = vector.broadcast %29 : vector<1x32xf32> to vector<8x32xf32>
    %50 = arith.mulf %48, %49 : vector<8x32xf32>
    %51 = vector.broadcast %30 : vector<1x32xf32> to vector<8x32xf32>
    %52 = arith.addf %50, %51 : vector<8x32xf32>
    %c0_18 = arith.constant 0 : index
    %c0_19 = arith.constant 0 : index
    %53 = vector.load %arg4[%c0_18, %c0_19] : memref<56x4xf32, #tpu.memory_space<vmem>>, vector<56x4xf32>
    %54 = arith.truncf %53 : vector<56x4xf32> to vector<56x4xbf16>
    %c0_20 = arith.constant 0 : index
    %c0_21 = arith.constant 0 : index
    %55 = vector.load %arg8[%c0_20, %c0_21] : memref<4x32xbf16, #tpu.memory_space<vmem>>, vector<4x32xbf16>
    %cst_22 = arith.constant dense<0.000000e+00> : vector<56x32xf32>
    %56 = tpu.matmul %54, %55, %cst_22 {dimension_numbers = #tpu.dot_dimension_numbers<[1], [0], [0], [1], [0, 0, 1, 1], [], []>} : vector<56x4xbf16>, vector<4x32xbf16>, vector<56x32xf32> -> vector<56x32xf32>
    %c0_23 = arith.constant 0 : index
    %c0_24 = arith.constant 0 : index
    %57 = vector.load %arg9[%c0_23, %c0_24] : memref<1x32xf32, #tpu.memory_space<vmem>>, vector<1x32xf32>
    %58 = vector.broadcast %57 : vector<1x32xf32> to vector<56x32xf32>
    %59 = arith.addf %56, %58 : vector<56x32xf32>
    %cst_25 = arith.constant 0.000000e+00 : f32
    %60 = vector.broadcast %cst_25 : f32 to vector<56x32xf32>
    %61 = arith.maximumf %59, %60 : vector<56x32xf32>
    %62 = arith.truncf %61 : vector<56x32xf32> to vector<56x32xbf16>
    %c0_26 = arith.constant 0 : index
    %c0_27 = arith.constant 0 : index
    %63 = vector.load %arg10[%c0_26, %c0_27] : memref<32x32xbf16, #tpu.memory_space<vmem>>, vector<32x32xbf16>
    %cst_28 = arith.constant dense<0.000000e+00> : vector<56x32xf32>
    %64 = tpu.matmul %62, %63, %cst_28 {dimension_numbers = #tpu.dot_dimension_numbers<[1], [0], [0], [1], [0, 0, 1, 1], [], []>} : vector<56x32xbf16>, vector<32x32xbf16>, vector<56x32xf32> -> vector<56x32xf32>
    %c0_29 = arith.constant 0 : index
    %c0_30 = arith.constant 0 : index
    %65 = vector.load %arg11[%c0_29, %c0_30] : memref<1x32xf32, #tpu.memory_space<vmem>>, vector<1x32xf32>
    %66 = vector.broadcast %65 : vector<1x32xf32> to vector<56x32xf32>
    %67 = arith.addf %64, %66 : vector<56x32xf32>
    %c0_31 = arith.constant 0 : index
    %c0_32 = arith.constant 0 : index
    %68 = vector.load %arg12[%c0_31, %c0_32] : memref<1x32xf32, #tpu.memory_space<vmem>>, vector<1x32xf32>
    %c0_33 = arith.constant 0 : index
    %c0_34 = arith.constant 0 : index
    %69 = vector.load %arg13[%c0_33, %c0_34] : memref<1x32xf32, #tpu.memory_space<vmem>>, vector<1x32xf32>
    %cst_35 = arith.constant dense<0.000000e+00> : vector<56xf32>
    %70 = vector.multi_reduction <add>, %67, %cst_35 [1] : vector<56x32xf32> to vector<56xf32>
    %71 = vector.shape_cast %70 : vector<56xf32> to vector<56x1xf32>
    %72 = arith.mulf %67, %67 : vector<56x32xf32>
    %cst_36 = arith.constant dense<0.000000e+00> : vector<56xf32>
    %73 = vector.multi_reduction <add>, %72, %cst_36 [1] : vector<56x32xf32> to vector<56xf32>
    %74 = vector.shape_cast %73 : vector<56xf32> to vector<56x1xf32>
    %cst_37 = arith.constant 3.125000e-02 : f32
    %75 = vector.broadcast %cst_37 : f32 to vector<56x1xf32>
    %76 = arith.mulf %71, %75 : vector<56x1xf32>
    %cst_38 = arith.constant 3.125000e-02 : f32
    %77 = vector.broadcast %cst_38 : f32 to vector<56x1xf32>
    %78 = arith.mulf %74, %77 : vector<56x1xf32>
    %79 = arith.mulf %76, %76 : vector<56x1xf32>
    %80 = arith.subf %78, %79 : vector<56x1xf32>
    %81 = vector.broadcast %76 : vector<56x1xf32> to vector<56x32xf32>
    %82 = arith.subf %67, %81 : vector<56x32xf32>
    %cst_39 = arith.constant 9.99999974E-6 : f32
    %83 = vector.broadcast %cst_39 : f32 to vector<56x1xf32>
    %84 = arith.addf %80, %83 : vector<56x1xf32>
    %85 = math.rsqrt %84 : vector<56x1xf32>
    %86 = vector.broadcast %85 : vector<56x1xf32> to vector<56x32xf32>
    %87 = arith.mulf %82, %86 : vector<56x32xf32>
    %88 = vector.broadcast %68 : vector<1x32xf32> to vector<56x32xf32>
    %89 = arith.mulf %87, %88 : vector<56x32xf32>
    %90 = vector.broadcast %69 : vector<1x32xf32> to vector<56x32xf32>
    %91 = arith.addf %89, %90 : vector<56x32xf32>
    %92 = arith.truncf %52 : vector<8x32xf32> to vector<8x32xbf16>
    %c0_40 = arith.constant 0 : index
    %c0_41 = arith.constant 0 : index
    %c0_42 = arith.constant 0 : index
    %93 = vector.load %arg14[%c0_40, %c0_41, %c0_42] : memref<4x32x128xbf16, #tpu.memory_space<vmem>>, vector<1x32x128xbf16>
    %94 = vector.shape_cast %93 : vector<1x32x128xbf16> to vector<32x128xbf16>
    %cst_43 = arith.constant dense<0.000000e+00> : vector<8x128xf32>
    %95 = tpu.matmul %92, %94, %cst_43 {dimension_numbers = #tpu.dot_dimension_numbers<[1], [0], [0], [1], [0, 0, 1, 1], [], []>} : vector<8x32xbf16>, vector<32x128xbf16>, vector<8x128xf32> -> vector<8x128xf32>
    %96 = vector.extract_strided_slice %95 {offsets = [0, 0], sizes = [8, 64], strides = [1, 1]} : vector<8x128xf32> to vector<8x64xf32>
    %c64_i32 = arith.constant 64 : i32
    %97 = tpu.dynamic_rotate %95 by %c64_i32 dim 1 : vector<8x128xf32>, i32 -> vector<8x128xf32>
    %98 = vector.extract_strided_slice %97 {offsets = [0, 0], sizes = [8, 64], strides = [1, 1]} : vector<8x128xf32> to vector<8x64xf32>
    %99 = tpu.concatenate %96, %98 in 0 : vector<8x64xf32>, vector<8x64xf32> -> vector<16x64xf32>
    %100 = arith.truncf %99 : vector<16x64xf32> to vector<16x64xbf16>
    %cst_44 = arith.constant dense<0.000000e+00> : vector<56x64xf32>
    %101 = tpu.matmul %12, %100, %cst_44 {dimension_numbers = #tpu.dot_dimension_numbers<[1], [0], [0], [1], [0, 0, 1, 1], [], []>} : vector<56x16xbf16>, vector<16x64xbf16>, vector<56x64xf32> -> vector<56x64xf32>
    %102 = arith.truncf %91 : vector<56x32xf32> to vector<56x32xbf16>
    %c0_45 = arith.constant 0 : index
    %c0_46 = arith.constant 0 : index
    %c0_47 = arith.constant 0 : index
    %103 = vector.load %arg15[%c0_45, %c0_46, %c0_47] : memref<4x32x64xbf16, #tpu.memory_space<vmem>>, vector<1x32x64xbf16>
    %104 = vector.shape_cast %103 : vector<1x32x64xbf16> to vector<32x64xbf16>
    %cst_48 = arith.constant dense<0.000000e+00> : vector<56x64xf32>
    %105 = tpu.matmul %102, %104, %cst_48 {dimension_numbers = #tpu.dot_dimension_numbers<[1], [0], [0], [1], [0, 0, 1, 1], [], []>} : vector<56x32xbf16>, vector<32x64xbf16>, vector<56x64xf32> -> vector<56x64xf32>
    %106 = arith.addf %101, %105 : vector<56x64xf32>
    %c0_49 = arith.constant 0 : index
    %c0_50 = arith.constant 0 : index
    %c0_51 = arith.constant 0 : index
    %107 = vector.load %arg16[%c0_49, %c0_50, %c0_51] : memref<4x1x64xf32, #tpu.memory_space<vmem>>, vector<1x1x64xf32>
    %108 = vector.shape_cast %107 : vector<1x1x64xf32> to vector<1x64xf32>
    %109 = vector.broadcast %108 : vector<1x64xf32> to vector<56x64xf32>
    %110 = arith.addf %106, %109 : vector<56x64xf32>
    %cst_52 = arith.constant 0.000000e+00 : f32
    %111 = vector.broadcast %cst_52 : f32 to vector<56x64xf32>
    %112 = arith.maximumf %110, %111 : vector<56x64xf32>
    %113 = arith.truncf %112 : vector<56x64xf32> to vector<56x64xbf16>
    %c0_53 = arith.constant 0 : index
    %c0_54 = arith.constant 0 : index
    %c0_55 = arith.constant 0 : index
    %114 = vector.load %arg17[%c0_53, %c0_54, %c0_55] : memref<4x64x32xbf16, #tpu.memory_space<vmem>>, vector<1x64x32xbf16>
    %115 = vector.shape_cast %114 : vector<1x64x32xbf16> to vector<64x32xbf16>
    %cst_56 = arith.constant dense<0.000000e+00> : vector<56x32xf32>
    %116 = tpu.matmul %113, %115, %cst_56 {dimension_numbers = #tpu.dot_dimension_numbers<[1], [0], [0], [1], [0, 0, 1, 1], [], []>} : vector<56x64xbf16>, vector<64x32xbf16>, vector<56x32xf32> -> vector<56x32xf32>
    %c0_57 = arith.constant 0 : index
    %c0_58 = arith.constant 0 : index
    %c0_59 = arith.constant 0 : index
    %117 = vector.load %arg18[%c0_57, %c0_58, %c0_59] : memref<4x1x32xf32, #tpu.memory_space<vmem>>, vector<1x1x32xf32>
    %118 = vector.shape_cast %117 : vector<1x1x32xf32> to vector<1x32xf32>
    %119 = vector.broadcast %118 : vector<1x32xf32> to vector<56x32xf32>
    %120 = arith.addf %116, %119 : vector<56x32xf32>
    %121 = arith.truncf %120 : vector<56x32xf32> to vector<56x32xbf16>
    %cst_60 = arith.constant dense<0.000000e+00> : vector<8x32xf32>
    %122 = tpu.matmul %19, %121, %cst_60 {dimension_numbers = #tpu.dot_dimension_numbers<[1], [0], [0], [1], [0, 0, 1, 1], [], []>} : vector<8x56xbf16>, vector<56x32xbf16>, vector<8x32xf32> -> vector<8x32xf32>
    %c0_61 = arith.constant 0 : index
    %c0_62 = arith.constant 0 : index
    %c0_63 = arith.constant 0 : index
    %123 = vector.load %arg19[%c0_61, %c0_62, %c0_63] : memref<4x1x32xf32, #tpu.memory_space<vmem>>, vector<1x1x32xf32>
    %124 = vector.shape_cast %123 : vector<1x1x32xf32> to vector<1x32xf32>
    %c0_64 = arith.constant 0 : index
    %c0_65 = arith.constant 0 : index
    %c0_66 = arith.constant 0 : index
    %125 = vector.load %arg20[%c0_64, %c0_65, %c0_66] : memref<4x1x32xf32, #tpu.memory_space<vmem>>, vector<1x1x32xf32>
    %126 = vector.shape_cast %125 : vector<1x1x32xf32> to vector<1x32xf32>
    %cst_67 = arith.constant dense<0.000000e+00> : vector<8xf32>
    %127 = vector.multi_reduction <add>, %122, %cst_67 [1] : vector<8x32xf32> to vector<8xf32>
    %128 = vector.shape_cast %127 : vector<8xf32> to vector<8x1xf32>
    %129 = arith.mulf %122, %122 : vector<8x32xf32>
    %cst_68 = arith.constant dense<0.000000e+00> : vector<8xf32>
    %130 = vector.multi_reduction <add>, %129, %cst_68 [1] : vector<8x32xf32> to vector<8xf32>
    %131 = vector.shape_cast %130 : vector<8xf32> to vector<8x1xf32>
    %cst_69 = arith.constant 3.125000e-02 : f32
    %132 = vector.broadcast %cst_69 : f32 to vector<8x1xf32>
    %133 = arith.mulf %128, %132 : vector<8x1xf32>
    %cst_70 = arith.constant 3.125000e-02 : f32
    %134 = vector.broadcast %cst_70 : f32 to vector<8x1xf32>
    %135 = arith.mulf %131, %134 : vector<8x1xf32>
    %136 = arith.mulf %133, %133 : vector<8x1xf32>
    %137 = arith.subf %135, %136 : vector<8x1xf32>
    %138 = vector.broadcast %133 : vector<8x1xf32> to vector<8x32xf32>
    %139 = arith.subf %122, %138 : vector<8x32xf32>
    %cst_71 = arith.constant 9.99999974E-6 : f32
    %140 = vector.broadcast %cst_71 : f32 to vector<8x1xf32>
    %141 = arith.addf %137, %140 : vector<8x1xf32>
    %142 = math.rsqrt %141 : vector<8x1xf32>
    %143 = vector.broadcast %142 : vector<8x1xf32> to vector<8x32xf32>
    %144 = arith.mulf %139, %143 : vector<8x32xf32>
    %145 = vector.broadcast %124 : vector<1x32xf32> to vector<8x32xf32>
    %146 = arith.mulf %144, %145 : vector<8x32xf32>
    %147 = vector.broadcast %126 : vector<1x32xf32> to vector<8x32xf32>
    %148 = arith.addf %146, %147 : vector<8x32xf32>
    %149 = arith.addf %52, %148 : vector<8x32xf32>
    %c0_72 = arith.constant 0 : index
    %c0_73 = arith.constant 0 : index
    %c0_74 = arith.constant 0 : index
    %150 = vector.load %arg21[%c0_72, %c0_73, %c0_74] : memref<4x1x32xf32, #tpu.memory_space<vmem>>, vector<1x1x32xf32>
    %151 = vector.shape_cast %150 : vector<1x1x32xf32> to vector<1x32xf32>
    %c0_75 = arith.constant 0 : index
    %c0_76 = arith.constant 0 : index
    %c0_77 = arith.constant 0 : index
    %152 = vector.load %arg22[%c0_75, %c0_76, %c0_77] : memref<4x1x32xf32, #tpu.memory_space<vmem>>, vector<1x1x32xf32>
    %153 = vector.shape_cast %152 : vector<1x1x32xf32> to vector<1x32xf32>
    %cst_78 = arith.constant dense<0.000000e+00> : vector<56xf32>
    %154 = vector.multi_reduction <add>, %120, %cst_78 [1] : vector<56x32xf32> to vector<56xf32>
    %155 = vector.shape_cast %154 : vector<56xf32> to vector<56x1xf32>
    %156 = arith.mulf %120, %120 : vector<56x32xf32>
    %cst_79 = arith.constant dense<0.000000e+00> : vector<56xf32>
    %157 = vector.multi_reduction <add>, %156, %cst_79 [1] : vector<56x32xf32> to vector<56xf32>
    %158 = vector.shape_cast %157 : vector<56xf32> to vector<56x1xf32>
    %cst_80 = arith.constant 3.125000e-02 : f32
    %159 = vector.broadcast %cst_80 : f32 to vector<56x1xf32>
    %160 = arith.mulf %155, %159 : vector<56x1xf32>
    %cst_81 = arith.constant 3.125000e-02 : f32
    %161 = vector.broadcast %cst_81 : f32 to vector<56x1xf32>
    %162 = arith.mulf %158, %161 : vector<56x1xf32>
    %163 = arith.mulf %160, %160 : vector<56x1xf32>
    %164 = arith.subf %162, %163 : vector<56x1xf32>
    %165 = vector.broadcast %160 : vector<56x1xf32> to vector<56x32xf32>
    %166 = arith.subf %120, %165 : vector<56x32xf32>
    %cst_82 = arith.constant 9.99999974E-6 : f32
    %167 = vector.broadcast %cst_82 : f32 to vector<56x1xf32>
    %168 = arith.addf %164, %167 : vector<56x1xf32>
    %169 = math.rsqrt %168 : vector<56x1xf32>
    %170 = vector.broadcast %169 : vector<56x1xf32> to vector<56x32xf32>
    %171 = arith.mulf %166, %170 : vector<56x32xf32>
    %172 = vector.broadcast %151 : vector<1x32xf32> to vector<56x32xf32>
    %173 = arith.mulf %171, %172 : vector<56x32xf32>
    %174 = vector.broadcast %153 : vector<1x32xf32> to vector<56x32xf32>
    %175 = arith.addf %173, %174 : vector<56x32xf32>
    %176 = arith.addf %91, %175 : vector<56x32xf32>
    %cst_83 = arith.constant 0.000000e+00 : f32
    %177 = vector.broadcast %cst_83 : f32 to vector<8x32xf32>
    %178 = arith.maximumf %149, %177 : vector<8x32xf32>
    %cst_84 = arith.constant 0.000000e+00 : f32
    %179 = vector.broadcast %cst_84 : f32 to vector<56x32xf32>
    %180 = arith.maximumf %176, %179 : vector<56x32xf32>
    %181 = arith.truncf %178 : vector<8x32xf32> to vector<8x32xbf16>
    %c1 = arith.constant 1 : index
    %c0_85 = arith.constant 0 : index
    %c0_86 = arith.constant 0 : index
    %182 = vector.load %arg14[%c1, %c0_85, %c0_86] : memref<4x32x128xbf16, #tpu.memory_space<vmem>>, vector<1x32x128xbf16>
    %183 = vector.shape_cast %182 : vector<1x32x128xbf16> to vector<32x128xbf16>
    %cst_87 = arith.constant dense<0.000000e+00> : vector<8x128xf32>
    %184 = tpu.matmul %181, %183, %cst_87 {dimension_numbers = #tpu.dot_dimension_numbers<[1], [0], [0], [1], [0, 0, 1, 1], [], []>} : vector<8x32xbf16>, vector<32x128xbf16>, vector<8x128xf32> -> vector<8x128xf32>
    %185 = vector.extract_strided_slice %184 {offsets = [0, 0], sizes = [8, 64], strides = [1, 1]} : vector<8x128xf32> to vector<8x64xf32>
    %c64_i32_88 = arith.constant 64 : i32
    %186 = tpu.dynamic_rotate %184 by %c64_i32_88 dim 1 : vector<8x128xf32>, i32 -> vector<8x128xf32>
    %187 = vector.extract_strided_slice %186 {offsets = [0, 0], sizes = [8, 64], strides = [1, 1]} : vector<8x128xf32> to vector<8x64xf32>
    %188 = tpu.concatenate %185, %187 in 0 : vector<8x64xf32>, vector<8x64xf32> -> vector<16x64xf32>
    %189 = arith.truncf %188 : vector<16x64xf32> to vector<16x64xbf16>
    %cst_89 = arith.constant dense<0.000000e+00> : vector<56x64xf32>
    %190 = tpu.matmul %12, %189, %cst_89 {dimension_numbers = #tpu.dot_dimension_numbers<[1], [0], [0], [1], [0, 0, 1, 1], [], []>} : vector<56x16xbf16>, vector<16x64xbf16>, vector<56x64xf32> -> vector<56x64xf32>
    %191 = arith.truncf %180 : vector<56x32xf32> to vector<56x32xbf16>
    %c1_90 = arith.constant 1 : index
    %c0_91 = arith.constant 0 : index
    %c0_92 = arith.constant 0 : index
    %192 = vector.load %arg15[%c1_90, %c0_91, %c0_92] : memref<4x32x64xbf16, #tpu.memory_space<vmem>>, vector<1x32x64xbf16>
    %193 = vector.shape_cast %192 : vector<1x32x64xbf16> to vector<32x64xbf16>
    %cst_93 = arith.constant dense<0.000000e+00> : vector<56x64xf32>
    %194 = tpu.matmul %191, %193, %cst_93 {dimension_numbers = #tpu.dot_dimension_numbers<[1], [0], [0], [1], [0, 0, 1, 1], [], []>} : vector<56x32xbf16>, vector<32x64xbf16>, vector<56x64xf32> -> vector<56x64xf32>
    %195 = arith.addf %190, %194 : vector<56x64xf32>
    %c1_94 = arith.constant 1 : index
    %c0_95 = arith.constant 0 : index
    %c0_96 = arith.constant 0 : index
    %196 = vector.load %arg16[%c1_94, %c0_95, %c0_96] : memref<4x1x64xf32, #tpu.memory_space<vmem>>, vector<1x1x64xf32>
    %197 = vector.shape_cast %196 : vector<1x1x64xf32> to vector<1x64xf32>
    %198 = vector.broadcast %197 : vector<1x64xf32> to vector<56x64xf32>
    %199 = arith.addf %195, %198 : vector<56x64xf32>
    %cst_97 = arith.constant 0.000000e+00 : f32
    %200 = vector.broadcast %cst_97 : f32 to vector<56x64xf32>
    %201 = arith.maximumf %199, %200 : vector<56x64xf32>
    %202 = arith.truncf %201 : vector<56x64xf32> to vector<56x64xbf16>
    %c1_98 = arith.constant 1 : index
    %c0_99 = arith.constant 0 : index
    %c0_100 = arith.constant 0 : index
    %203 = vector.load %arg17[%c1_98, %c0_99, %c0_100] : memref<4x64x32xbf16, #tpu.memory_space<vmem>>, vector<1x64x32xbf16>
    %204 = vector.shape_cast %203 : vector<1x64x32xbf16> to vector<64x32xbf16>
    %cst_101 = arith.constant dense<0.000000e+00> : vector<56x32xf32>
    %205 = tpu.matmul %202, %204, %cst_101 {dimension_numbers = #tpu.dot_dimension_numbers<[1], [0], [0], [1], [0, 0, 1, 1], [], []>} : vector<56x64xbf16>, vector<64x32xbf16>, vector<56x32xf32> -> vector<56x32xf32>
    %c1_102 = arith.constant 1 : index
    %c0_103 = arith.constant 0 : index
    %c0_104 = arith.constant 0 : index
    %206 = vector.load %arg18[%c1_102, %c0_103, %c0_104] : memref<4x1x32xf32, #tpu.memory_space<vmem>>, vector<1x1x32xf32>
    %207 = vector.shape_cast %206 : vector<1x1x32xf32> to vector<1x32xf32>
    %208 = vector.broadcast %207 : vector<1x32xf32> to vector<56x32xf32>
    %209 = arith.addf %205, %208 : vector<56x32xf32>
    %210 = arith.truncf %209 : vector<56x32xf32> to vector<56x32xbf16>
    %cst_105 = arith.constant dense<0.000000e+00> : vector<8x32xf32>
    %211 = tpu.matmul %19, %210, %cst_105 {dimension_numbers = #tpu.dot_dimension_numbers<[1], [0], [0], [1], [0, 0, 1, 1], [], []>} : vector<8x56xbf16>, vector<56x32xbf16>, vector<8x32xf32> -> vector<8x32xf32>
    %c1_106 = arith.constant 1 : index
    %c0_107 = arith.constant 0 : index
    %c0_108 = arith.constant 0 : index
    %212 = vector.load %arg19[%c1_106, %c0_107, %c0_108] : memref<4x1x32xf32, #tpu.memory_space<vmem>>, vector<1x1x32xf32>
    %213 = vector.shape_cast %212 : vector<1x1x32xf32> to vector<1x32xf32>
    %c1_109 = arith.constant 1 : index
    %c0_110 = arith.constant 0 : index
    %c0_111 = arith.constant 0 : index
    %214 = vector.load %arg20[%c1_109, %c0_110, %c0_111] : memref<4x1x32xf32, #tpu.memory_space<vmem>>, vector<1x1x32xf32>
    %215 = vector.shape_cast %214 : vector<1x1x32xf32> to vector<1x32xf32>
    %cst_112 = arith.constant dense<0.000000e+00> : vector<8xf32>
    %216 = vector.multi_reduction <add>, %211, %cst_112 [1] : vector<8x32xf32> to vector<8xf32>
    %217 = vector.shape_cast %216 : vector<8xf32> to vector<8x1xf32>
    %218 = arith.mulf %211, %211 : vector<8x32xf32>
    %cst_113 = arith.constant dense<0.000000e+00> : vector<8xf32>
    %219 = vector.multi_reduction <add>, %218, %cst_113 [1] : vector<8x32xf32> to vector<8xf32>
    %220 = vector.shape_cast %219 : vector<8xf32> to vector<8x1xf32>
    %cst_114 = arith.constant 3.125000e-02 : f32
    %221 = vector.broadcast %cst_114 : f32 to vector<8x1xf32>
    %222 = arith.mulf %217, %221 : vector<8x1xf32>
    %cst_115 = arith.constant 3.125000e-02 : f32
    %223 = vector.broadcast %cst_115 : f32 to vector<8x1xf32>
    %224 = arith.mulf %220, %223 : vector<8x1xf32>
    %225 = arith.mulf %222, %222 : vector<8x1xf32>
    %226 = arith.subf %224, %225 : vector<8x1xf32>
    %227 = vector.broadcast %222 : vector<8x1xf32> to vector<8x32xf32>
    %228 = arith.subf %211, %227 : vector<8x32xf32>
    %cst_116 = arith.constant 9.99999974E-6 : f32
    %229 = vector.broadcast %cst_116 : f32 to vector<8x1xf32>
    %230 = arith.addf %226, %229 : vector<8x1xf32>
    %231 = math.rsqrt %230 : vector<8x1xf32>
    %232 = vector.broadcast %231 : vector<8x1xf32> to vector<8x32xf32>
    %233 = arith.mulf %228, %232 : vector<8x32xf32>
    %234 = vector.broadcast %213 : vector<1x32xf32> to vector<8x32xf32>
    %235 = arith.mulf %233, %234 : vector<8x32xf32>
    %236 = vector.broadcast %215 : vector<1x32xf32> to vector<8x32xf32>
    %237 = arith.addf %235, %236 : vector<8x32xf32>
    %238 = arith.addf %178, %237 : vector<8x32xf32>
    %c1_117 = arith.constant 1 : index
    %c0_118 = arith.constant 0 : index
    %c0_119 = arith.constant 0 : index
    %239 = vector.load %arg21[%c1_117, %c0_118, %c0_119] : memref<4x1x32xf32, #tpu.memory_space<vmem>>, vector<1x1x32xf32>
    %240 = vector.shape_cast %239 : vector<1x1x32xf32> to vector<1x32xf32>
    %c1_120 = arith.constant 1 : index
    %c0_121 = arith.constant 0 : index
    %c0_122 = arith.constant 0 : index
    %241 = vector.load %arg22[%c1_120, %c0_121, %c0_122] : memref<4x1x32xf32, #tpu.memory_space<vmem>>, vector<1x1x32xf32>
    %242 = vector.shape_cast %241 : vector<1x1x32xf32> to vector<1x32xf32>
    %cst_123 = arith.constant dense<0.000000e+00> : vector<56xf32>
    %243 = vector.multi_reduction <add>, %209, %cst_123 [1] : vector<56x32xf32> to vector<56xf32>
    %244 = vector.shape_cast %243 : vector<56xf32> to vector<56x1xf32>
    %245 = arith.mulf %209, %209 : vector<56x32xf32>
    %cst_124 = arith.constant dense<0.000000e+00> : vector<56xf32>
    %246 = vector.multi_reduction <add>, %245, %cst_124 [1] : vector<56x32xf32> to vector<56xf32>
    %247 = vector.shape_cast %246 : vector<56xf32> to vector<56x1xf32>
    %cst_125 = arith.constant 3.125000e-02 : f32
    %248 = vector.broadcast %cst_125 : f32 to vector<56x1xf32>
    %249 = arith.mulf %244, %248 : vector<56x1xf32>
    %cst_126 = arith.constant 3.125000e-02 : f32
    %250 = vector.broadcast %cst_126 : f32 to vector<56x1xf32>
    %251 = arith.mulf %247, %250 : vector<56x1xf32>
    %252 = arith.mulf %249, %249 : vector<56x1xf32>
    %253 = arith.subf %251, %252 : vector<56x1xf32>
    %254 = vector.broadcast %249 : vector<56x1xf32> to vector<56x32xf32>
    %255 = arith.subf %209, %254 : vector<56x32xf32>
    %cst_127 = arith.constant 9.99999974E-6 : f32
    %256 = vector.broadcast %cst_127 : f32 to vector<56x1xf32>
    %257 = arith.addf %253, %256 : vector<56x1xf32>
    %258 = math.rsqrt %257 : vector<56x1xf32>
    %259 = vector.broadcast %258 : vector<56x1xf32> to vector<56x32xf32>
    %260 = arith.mulf %255, %259 : vector<56x32xf32>
    %261 = vector.broadcast %240 : vector<1x32xf32> to vector<56x32xf32>
    %262 = arith.mulf %260, %261 : vector<56x32xf32>
    %263 = vector.broadcast %242 : vector<1x32xf32> to vector<56x32xf32>
    %264 = arith.addf %262, %263 : vector<56x32xf32>
    %265 = arith.addf %180, %264 : vector<56x32xf32>
    %cst_128 = arith.constant 0.000000e+00 : f32
    %266 = vector.broadcast %cst_128 : f32 to vector<8x32xf32>
    %267 = arith.maximumf %238, %266 : vector<8x32xf32>
    %cst_129 = arith.constant 0.000000e+00 : f32
    %268 = vector.broadcast %cst_129 : f32 to vector<56x32xf32>
    %269 = arith.maximumf %265, %268 : vector<56x32xf32>
    %270 = arith.truncf %267 : vector<8x32xf32> to vector<8x32xbf16>
    %c2 = arith.constant 2 : index
    %c0_130 = arith.constant 0 : index
    %c0_131 = arith.constant 0 : index
    %271 = vector.load %arg14[%c2, %c0_130, %c0_131] : memref<4x32x128xbf16, #tpu.memory_space<vmem>>, vector<1x32x128xbf16>
    %272 = vector.shape_cast %271 : vector<1x32x128xbf16> to vector<32x128xbf16>
    %cst_132 = arith.constant dense<0.000000e+00> : vector<8x128xf32>
    %273 = tpu.matmul %270, %272, %cst_132 {dimension_numbers = #tpu.dot_dimension_numbers<[1], [0], [0], [1], [0, 0, 1, 1], [], []>} : vector<8x32xbf16>, vector<32x128xbf16>, vector<8x128xf32> -> vector<8x128xf32>
    %274 = vector.extract_strided_slice %273 {offsets = [0, 0], sizes = [8, 64], strides = [1, 1]} : vector<8x128xf32> to vector<8x64xf32>
    %c64_i32_133 = arith.constant 64 : i32
    %275 = tpu.dynamic_rotate %273 by %c64_i32_133 dim 1 : vector<8x128xf32>, i32 -> vector<8x128xf32>
    %276 = vector.extract_strided_slice %275 {offsets = [0, 0], sizes = [8, 64], strides = [1, 1]} : vector<8x128xf32> to vector<8x64xf32>
    %277 = tpu.concatenate %274, %276 in 0 : vector<8x64xf32>, vector<8x64xf32> -> vector<16x64xf32>
    %278 = arith.truncf %277 : vector<16x64xf32> to vector<16x64xbf16>
    %cst_134 = arith.constant dense<0.000000e+00> : vector<56x64xf32>
    %279 = tpu.matmul %12, %278, %cst_134 {dimension_numbers = #tpu.dot_dimension_numbers<[1], [0], [0], [1], [0, 0, 1, 1], [], []>} : vector<56x16xbf16>, vector<16x64xbf16>, vector<56x64xf32> -> vector<56x64xf32>
    %280 = arith.truncf %269 : vector<56x32xf32> to vector<56x32xbf16>
    %c2_135 = arith.constant 2 : index
    %c0_136 = arith.constant 0 : index
    %c0_137 = arith.constant 0 : index
    %281 = vector.load %arg15[%c2_135, %c0_136, %c0_137] : memref<4x32x64xbf16, #tpu.memory_space<vmem>>, vector<1x32x64xbf16>
    %282 = vector.shape_cast %281 : vector<1x32x64xbf16> to vector<32x64xbf16>
    %cst_138 = arith.constant dense<0.000000e+00> : vector<56x64xf32>
    %283 = tpu.matmul %280, %282, %cst_138 {dimension_numbers = #tpu.dot_dimension_numbers<[1], [0], [0], [1], [0, 0, 1, 1], [], []>} : vector<56x32xbf16>, vector<32x64xbf16>, vector<56x64xf32> -> vector<56x64xf32>
    %284 = arith.addf %279, %283 : vector<56x64xf32>
    %c2_139 = arith.constant 2 : index
    %c0_140 = arith.constant 0 : index
    %c0_141 = arith.constant 0 : index
    %285 = vector.load %arg16[%c2_139, %c0_140, %c0_141] : memref<4x1x64xf32, #tpu.memory_space<vmem>>, vector<1x1x64xf32>
    %286 = vector.shape_cast %285 : vector<1x1x64xf32> to vector<1x64xf32>
    %287 = vector.broadcast %286 : vector<1x64xf32> to vector<56x64xf32>
    %288 = arith.addf %284, %287 : vector<56x64xf32>
    %cst_142 = arith.constant 0.000000e+00 : f32
    %289 = vector.broadcast %cst_142 : f32 to vector<56x64xf32>
    %290 = arith.maximumf %288, %289 : vector<56x64xf32>
    %291 = arith.truncf %290 : vector<56x64xf32> to vector<56x64xbf16>
    %c2_143 = arith.constant 2 : index
    %c0_144 = arith.constant 0 : index
    %c0_145 = arith.constant 0 : index
    %292 = vector.load %arg17[%c2_143, %c0_144, %c0_145] : memref<4x64x32xbf16, #tpu.memory_space<vmem>>, vector<1x64x32xbf16>
    %293 = vector.shape_cast %292 : vector<1x64x32xbf16> to vector<64x32xbf16>
    %cst_146 = arith.constant dense<0.000000e+00> : vector<56x32xf32>
    %294 = tpu.matmul %291, %293, %cst_146 {dimension_numbers = #tpu.dot_dimension_numbers<[1], [0], [0], [1], [0, 0, 1, 1], [], []>} : vector<56x64xbf16>, vector<64x32xbf16>, vector<56x32xf32> -> vector<56x32xf32>
    %c2_147 = arith.constant 2 : index
    %c0_148 = arith.constant 0 : index
    %c0_149 = arith.constant 0 : index
    %295 = vector.load %arg18[%c2_147, %c0_148, %c0_149] : memref<4x1x32xf32, #tpu.memory_space<vmem>>, vector<1x1x32xf32>
    %296 = vector.shape_cast %295 : vector<1x1x32xf32> to vector<1x32xf32>
    %297 = vector.broadcast %296 : vector<1x32xf32> to vector<56x32xf32>
    %298 = arith.addf %294, %297 : vector<56x32xf32>
    %299 = arith.truncf %298 : vector<56x32xf32> to vector<56x32xbf16>
    %cst_150 = arith.constant dense<0.000000e+00> : vector<8x32xf32>
    %300 = tpu.matmul %19, %299, %cst_150 {dimension_numbers = #tpu.dot_dimension_numbers<[1], [0], [0], [1], [0, 0, 1, 1], [], []>} : vector<8x56xbf16>, vector<56x32xbf16>, vector<8x32xf32> -> vector<8x32xf32>
    %c2_151 = arith.constant 2 : index
    %c0_152 = arith.constant 0 : index
    %c0_153 = arith.constant 0 : index
    %301 = vector.load %arg19[%c2_151, %c0_152, %c0_153] : memref<4x1x32xf32, #tpu.memory_space<vmem>>, vector<1x1x32xf32>
    %302 = vector.shape_cast %301 : vector<1x1x32xf32> to vector<1x32xf32>
    %c2_154 = arith.constant 2 : index
    %c0_155 = arith.constant 0 : index
    %c0_156 = arith.constant 0 : index
    %303 = vector.load %arg20[%c2_154, %c0_155, %c0_156] : memref<4x1x32xf32, #tpu.memory_space<vmem>>, vector<1x1x32xf32>
    %304 = vector.shape_cast %303 : vector<1x1x32xf32> to vector<1x32xf32>
    %cst_157 = arith.constant dense<0.000000e+00> : vector<8xf32>
    %305 = vector.multi_reduction <add>, %300, %cst_157 [1] : vector<8x32xf32> to vector<8xf32>
    %306 = vector.shape_cast %305 : vector<8xf32> to vector<8x1xf32>
    %307 = arith.mulf %300, %300 : vector<8x32xf32>
    %cst_158 = arith.constant dense<0.000000e+00> : vector<8xf32>
    %308 = vector.multi_reduction <add>, %307, %cst_158 [1] : vector<8x32xf32> to vector<8xf32>
    %309 = vector.shape_cast %308 : vector<8xf32> to vector<8x1xf32>
    %cst_159 = arith.constant 3.125000e-02 : f32
    %310 = vector.broadcast %cst_159 : f32 to vector<8x1xf32>
    %311 = arith.mulf %306, %310 : vector<8x1xf32>
    %cst_160 = arith.constant 3.125000e-02 : f32
    %312 = vector.broadcast %cst_160 : f32 to vector<8x1xf32>
    %313 = arith.mulf %309, %312 : vector<8x1xf32>
    %314 = arith.mulf %311, %311 : vector<8x1xf32>
    %315 = arith.subf %313, %314 : vector<8x1xf32>
    %316 = vector.broadcast %311 : vector<8x1xf32> to vector<8x32xf32>
    %317 = arith.subf %300, %316 : vector<8x32xf32>
    %cst_161 = arith.constant 9.99999974E-6 : f32
    %318 = vector.broadcast %cst_161 : f32 to vector<8x1xf32>
    %319 = arith.addf %315, %318 : vector<8x1xf32>
    %320 = math.rsqrt %319 : vector<8x1xf32>
    %321 = vector.broadcast %320 : vector<8x1xf32> to vector<8x32xf32>
    %322 = arith.mulf %317, %321 : vector<8x32xf32>
    %323 = vector.broadcast %302 : vector<1x32xf32> to vector<8x32xf32>
    %324 = arith.mulf %322, %323 : vector<8x32xf32>
    %325 = vector.broadcast %304 : vector<1x32xf32> to vector<8x32xf32>
    %326 = arith.addf %324, %325 : vector<8x32xf32>
    %327 = arith.addf %267, %326 : vector<8x32xf32>
    %c2_162 = arith.constant 2 : index
    %c0_163 = arith.constant 0 : index
    %c0_164 = arith.constant 0 : index
    %328 = vector.load %arg21[%c2_162, %c0_163, %c0_164] : memref<4x1x32xf32, #tpu.memory_space<vmem>>, vector<1x1x32xf32>
    %329 = vector.shape_cast %328 : vector<1x1x32xf32> to vector<1x32xf32>
    %c2_165 = arith.constant 2 : index
    %c0_166 = arith.constant 0 : index
    %c0_167 = arith.constant 0 : index
    %330 = vector.load %arg22[%c2_165, %c0_166, %c0_167] : memref<4x1x32xf32, #tpu.memory_space<vmem>>, vector<1x1x32xf32>
    %331 = vector.shape_cast %330 : vector<1x1x32xf32> to vector<1x32xf32>
    %cst_168 = arith.constant dense<0.000000e+00> : vector<56xf32>
    %332 = vector.multi_reduction <add>, %298, %cst_168 [1] : vector<56x32xf32> to vector<56xf32>
    %333 = vector.shape_cast %332 : vector<56xf32> to vector<56x1xf32>
    %334 = arith.mulf %298, %298 : vector<56x32xf32>
    %cst_169 = arith.constant dense<0.000000e+00> : vector<56xf32>
    %335 = vector.multi_reduction <add>, %334, %cst_169 [1] : vector<56x32xf32> to vector<56xf32>
    %336 = vector.shape_cast %335 : vector<56xf32> to vector<56x1xf32>
    %cst_170 = arith.constant 3.125000e-02 : f32
    %337 = vector.broadcast %cst_170 : f32 to vector<56x1xf32>
    %338 = arith.mulf %333, %337 : vector<56x1xf32>
    %cst_171 = arith.constant 3.125000e-02 : f32
    %339 = vector.broadcast %cst_171 : f32 to vector<56x1xf32>
    %340 = arith.mulf %336, %339 : vector<56x1xf32>
    %341 = arith.mulf %338, %338 : vector<56x1xf32>
    %342 = arith.subf %340, %341 : vector<56x1xf32>
    %343 = vector.broadcast %338 : vector<56x1xf32> to vector<56x32xf32>
    %344 = arith.subf %298, %343 : vector<56x32xf32>
    %cst_172 = arith.constant 9.99999974E-6 : f32
    %345 = vector.broadcast %cst_172 : f32 to vector<56x1xf32>
    %346 = arith.addf %342, %345 : vector<56x1xf32>
    %347 = math.rsqrt %346 : vector<56x1xf32>
    %348 = vector.broadcast %347 : vector<56x1xf32> to vector<56x32xf32>
    %349 = arith.mulf %344, %348 : vector<56x32xf32>
    %350 = vector.broadcast %329 : vector<1x32xf32> to vector<56x32xf32>
    %351 = arith.mulf %349, %350 : vector<56x32xf32>
    %352 = vector.broadcast %331 : vector<1x32xf32> to vector<56x32xf32>
    %353 = arith.addf %351, %352 : vector<56x32xf32>
    %354 = arith.addf %269, %353 : vector<56x32xf32>
    %cst_173 = arith.constant 0.000000e+00 : f32
    %355 = vector.broadcast %cst_173 : f32 to vector<8x32xf32>
    %356 = arith.maximumf %327, %355 : vector<8x32xf32>
    %cst_174 = arith.constant 0.000000e+00 : f32
    %357 = vector.broadcast %cst_174 : f32 to vector<56x32xf32>
    %358 = arith.maximumf %354, %357 : vector<56x32xf32>
    %359 = arith.truncf %356 : vector<8x32xf32> to vector<8x32xbf16>
    %c3 = arith.constant 3 : index
    %c0_175 = arith.constant 0 : index
    %c0_176 = arith.constant 0 : index
    %360 = vector.load %arg14[%c3, %c0_175, %c0_176] : memref<4x32x128xbf16, #tpu.memory_space<vmem>>, vector<1x32x128xbf16>
    %361 = vector.shape_cast %360 : vector<1x32x128xbf16> to vector<32x128xbf16>
    %cst_177 = arith.constant dense<0.000000e+00> : vector<8x128xf32>
    %362 = tpu.matmul %359, %361, %cst_177 {dimension_numbers = #tpu.dot_dimension_numbers<[1], [0], [0], [1], [0, 0, 1, 1], [], []>} : vector<8x32xbf16>, vector<32x128xbf16>, vector<8x128xf32> -> vector<8x128xf32>
    %363 = vector.extract_strided_slice %362 {offsets = [0, 0], sizes = [8, 64], strides = [1, 1]} : vector<8x128xf32> to vector<8x64xf32>
    %c64_i32_178 = arith.constant 64 : i32
    %364 = tpu.dynamic_rotate %362 by %c64_i32_178 dim 1 : vector<8x128xf32>, i32 -> vector<8x128xf32>
    %365 = vector.extract_strided_slice %364 {offsets = [0, 0], sizes = [8, 64], strides = [1, 1]} : vector<8x128xf32> to vector<8x64xf32>
    %366 = tpu.concatenate %363, %365 in 0 : vector<8x64xf32>, vector<8x64xf32> -> vector<16x64xf32>
    %367 = arith.truncf %366 : vector<16x64xf32> to vector<16x64xbf16>
    %cst_179 = arith.constant dense<0.000000e+00> : vector<56x64xf32>
    %368 = tpu.matmul %12, %367, %cst_179 {dimension_numbers = #tpu.dot_dimension_numbers<[1], [0], [0], [1], [0, 0, 1, 1], [], []>} : vector<56x16xbf16>, vector<16x64xbf16>, vector<56x64xf32> -> vector<56x64xf32>
    %369 = arith.truncf %358 : vector<56x32xf32> to vector<56x32xbf16>
    %c3_180 = arith.constant 3 : index
    %c0_181 = arith.constant 0 : index
    %c0_182 = arith.constant 0 : index
    %370 = vector.load %arg15[%c3_180, %c0_181, %c0_182] : memref<4x32x64xbf16, #tpu.memory_space<vmem>>, vector<1x32x64xbf16>
    %371 = vector.shape_cast %370 : vector<1x32x64xbf16> to vector<32x64xbf16>
    %cst_183 = arith.constant dense<0.000000e+00> : vector<56x64xf32>
    %372 = tpu.matmul %369, %371, %cst_183 {dimension_numbers = #tpu.dot_dimension_numbers<[1], [0], [0], [1], [0, 0, 1, 1], [], []>} : vector<56x32xbf16>, vector<32x64xbf16>, vector<56x64xf32> -> vector<56x64xf32>
    %373 = arith.addf %368, %372 : vector<56x64xf32>
    %c3_184 = arith.constant 3 : index
    %c0_185 = arith.constant 0 : index
    %c0_186 = arith.constant 0 : index
    %374 = vector.load %arg16[%c3_184, %c0_185, %c0_186] : memref<4x1x64xf32, #tpu.memory_space<vmem>>, vector<1x1x64xf32>
    %375 = vector.shape_cast %374 : vector<1x1x64xf32> to vector<1x64xf32>
    %376 = vector.broadcast %375 : vector<1x64xf32> to vector<56x64xf32>
    %377 = arith.addf %373, %376 : vector<56x64xf32>
    %cst_187 = arith.constant 0.000000e+00 : f32
    %378 = vector.broadcast %cst_187 : f32 to vector<56x64xf32>
    %379 = arith.maximumf %377, %378 : vector<56x64xf32>
    %380 = arith.truncf %379 : vector<56x64xf32> to vector<56x64xbf16>
    %c3_188 = arith.constant 3 : index
    %c0_189 = arith.constant 0 : index
    %c0_190 = arith.constant 0 : index
    %381 = vector.load %arg17[%c3_188, %c0_189, %c0_190] : memref<4x64x32xbf16, #tpu.memory_space<vmem>>, vector<1x64x32xbf16>
    %382 = vector.shape_cast %381 : vector<1x64x32xbf16> to vector<64x32xbf16>
    %cst_191 = arith.constant dense<0.000000e+00> : vector<56x32xf32>
    %383 = tpu.matmul %380, %382, %cst_191 {dimension_numbers = #tpu.dot_dimension_numbers<[1], [0], [0], [1], [0, 0, 1, 1], [], []>} : vector<56x64xbf16>, vector<64x32xbf16>, vector<56x32xf32> -> vector<56x32xf32>
    %c3_192 = arith.constant 3 : index
    %c0_193 = arith.constant 0 : index
    %c0_194 = arith.constant 0 : index
    %384 = vector.load %arg18[%c3_192, %c0_193, %c0_194] : memref<4x1x32xf32, #tpu.memory_space<vmem>>, vector<1x1x32xf32>
    %385 = vector.shape_cast %384 : vector<1x1x32xf32> to vector<1x32xf32>
    %386 = vector.broadcast %385 : vector<1x32xf32> to vector<56x32xf32>
    %387 = arith.addf %383, %386 : vector<56x32xf32>
    %388 = arith.truncf %387 : vector<56x32xf32> to vector<56x32xbf16>
    %cst_195 = arith.constant dense<0.000000e+00> : vector<8x32xf32>
    %389 = tpu.matmul %19, %388, %cst_195 {dimension_numbers = #tpu.dot_dimension_numbers<[1], [0], [0], [1], [0, 0, 1, 1], [], []>} : vector<8x56xbf16>, vector<56x32xbf16>, vector<8x32xf32> -> vector<8x32xf32>
    %c3_196 = arith.constant 3 : index
    %c0_197 = arith.constant 0 : index
    %c0_198 = arith.constant 0 : index
    %390 = vector.load %arg19[%c3_196, %c0_197, %c0_198] : memref<4x1x32xf32, #tpu.memory_space<vmem>>, vector<1x1x32xf32>
    %391 = vector.shape_cast %390 : vector<1x1x32xf32> to vector<1x32xf32>
    %c3_199 = arith.constant 3 : index
    %c0_200 = arith.constant 0 : index
    %c0_201 = arith.constant 0 : index
    %392 = vector.load %arg20[%c3_199, %c0_200, %c0_201] : memref<4x1x32xf32, #tpu.memory_space<vmem>>, vector<1x1x32xf32>
    %393 = vector.shape_cast %392 : vector<1x1x32xf32> to vector<1x32xf32>
    %cst_202 = arith.constant dense<0.000000e+00> : vector<8xf32>
    %394 = vector.multi_reduction <add>, %389, %cst_202 [1] : vector<8x32xf32> to vector<8xf32>
    %395 = vector.shape_cast %394 : vector<8xf32> to vector<8x1xf32>
    %396 = arith.mulf %389, %389 : vector<8x32xf32>
    %cst_203 = arith.constant dense<0.000000e+00> : vector<8xf32>
    %397 = vector.multi_reduction <add>, %396, %cst_203 [1] : vector<8x32xf32> to vector<8xf32>
    %398 = vector.shape_cast %397 : vector<8xf32> to vector<8x1xf32>
    %cst_204 = arith.constant 3.125000e-02 : f32
    %399 = vector.broadcast %cst_204 : f32 to vector<8x1xf32>
    %400 = arith.mulf %395, %399 : vector<8x1xf32>
    %cst_205 = arith.constant 3.125000e-02 : f32
    %401 = vector.broadcast %cst_205 : f32 to vector<8x1xf32>
    %402 = arith.mulf %398, %401 : vector<8x1xf32>
    %403 = arith.mulf %400, %400 : vector<8x1xf32>
    %404 = arith.subf %402, %403 : vector<8x1xf32>
    %405 = vector.broadcast %400 : vector<8x1xf32> to vector<8x32xf32>
    %406 = arith.subf %389, %405 : vector<8x32xf32>
    %cst_206 = arith.constant 9.99999974E-6 : f32
    %407 = vector.broadcast %cst_206 : f32 to vector<8x1xf32>
    %408 = arith.addf %404, %407 : vector<8x1xf32>
    %409 = math.rsqrt %408 : vector<8x1xf32>
    %410 = vector.broadcast %409 : vector<8x1xf32> to vector<8x32xf32>
    %411 = arith.mulf %406, %410 : vector<8x32xf32>
    %412 = vector.broadcast %391 : vector<1x32xf32> to vector<8x32xf32>
    %413 = arith.mulf %411, %412 : vector<8x32xf32>
    %414 = vector.broadcast %393 : vector<1x32xf32> to vector<8x32xf32>
    %415 = arith.addf %413, %414 : vector<8x32xf32>
    %416 = arith.addf %356, %415 : vector<8x32xf32>
    %417 = arith.truncf %416 : vector<8x32xf32> to vector<8x32xbf16>
    %c0_207 = arith.constant 0 : index
    %c0_208 = arith.constant 0 : index
    %418 = vector.load %arg23[%c0_207, %c0_208] : memref<32x128xbf16, #tpu.memory_space<vmem>>, vector<32x128xbf16>
    %cst_209 = arith.constant dense<0.000000e+00> : vector<8x128xf32>
    %419 = tpu.matmul %417, %418, %cst_209 {dimension_numbers = #tpu.dot_dimension_numbers<[1], [0], [0], [1], [0, 0, 1, 1], [], []>} : vector<8x32xbf16>, vector<32x128xbf16>, vector<8x128xf32> -> vector<8x128xf32>
    %c0_210 = arith.constant 0 : index
    %c0_211 = arith.constant 0 : index
    %420 = vector.load %arg24[%c0_210, %c0_211] : memref<1x128xf32, #tpu.memory_space<vmem>>, vector<1x128xf32>
    %421 = vector.broadcast %420 : vector<1x128xf32> to vector<8x128xf32>
    %422 = arith.addf %419, %421 : vector<8x128xf32>
    %c0_212 = arith.constant 0 : index
    %c0_213 = arith.constant 0 : index
    %423 = vector.load %arg25[%c0_212, %c0_213] : memref<8x128xf32, #tpu.memory_space<vmem>>, vector<8x128xf32>
    tpu.vector_store %arg25[%c0_212, %c0_213], %422 {strides = array<i32>} : memref<8x128xf32, #tpu.memory_space<vmem>>, vector<8x128xf32>,
    return
  }
}

</mosaic_0001>

<llo_original>
// kernel: tpu_custom_call.1
$region0: #{tpu_custom_call.1}
  #allocation0 [shape = 'u32[]', space=smem, size = 0x4, offset = 0x4, fixed_abs, tag = 'smem constant byte address 0x4 - core index']
  #allocation1 [shape = 'u32[144,128]{1,0:T(1,128)}', space=vmem, size = 0x12000, scoped, tag = 'internal scratch']
  %s0 = inlined_call_operand.vmem [shape: s32[8,1], index: 0, kind: input, shape index: {}]
  %s1 = inlined_call_operand.vmem [shape: s32[56,1], index: 1, kind: input, shape index: {}]
  %s2 = inlined_call_operand.vmem [shape: s32[56,1], index: 2, kind: input, shape index: {}]
  %s3 = inlined_call_operand.vmem [shape: s32[1,56], index: 3, kind: input, shape index: {}]
  %s4 = inlined_call_operand.vmem [shape: f32[56,4], index: 4, kind: input, shape index: {}]
  %s5 = inlined_call_operand.vmem [shape: bf16[20,32], index: 5, kind: input, shape index: {}]
  %s6 = inlined_call_operand.vmem [shape: f32[1,32], index: 6, kind: input, shape index: {}]
  %s7 = inlined_call_operand.vmem [shape: f32[1,32], index: 7, kind: input, shape index: {}]
  %s8 = inlined_call_operand.vmem [shape: bf16[4,32], index: 8, kind: input, shape index: {}]
  %s9 = inlined_call_operand.vmem [shape: f32[1,32], index: 9, kind: input, shape index: {}]
  %s10 = inlined_call_operand.vmem [shape: bf16[32,32], index: 10, kind: input, shape index: {}]
  %s11 = inlined_call_operand.vmem [shape: f32[1,32], index: 11, kind: input, shape index: {}]
  %s12 = inlined_call_operand.vmem [shape: f32[1,32], index: 12, kind: input, shape index: {}]
  %s13 = inlined_call_operand.vmem [shape: f32[1,32], index: 13, kind: input, shape index: {}]
  %s14 = inlined_call_operand.vmem [shape: bf16[4,32,128], index: 14, kind: input, shape index: {}]
  %s15 = inlined_call_operand.vmem [shape: bf16[4,32,64], index: 15, kind: input, shape index: {}]
  %s16 = inlined_call_operand.vmem [shape: f32[4,1,64], index: 16, kind: input, shape index: {}]
  %s17 = inlined_call_operand.vmem [shape: bf16[4,64,32], index: 17, kind: input, shape index: {}]
  %s18 = inlined_call_operand.vmem [shape: f32[4,1,32], index: 18, kind: input, shape index: {}]
  %s19 = inlined_call_operand.vmem [shape: f32[4,1,32], index: 19, kind: input, shape index: {}]
  %s20 = inlined_call_operand.vmem [shape: f32[4,1,32], index: 20, kind: input, shape index: {}]
  %s21 = inlined_call_operand.vmem [shape: f32[4,1,32], index: 21, kind: input, shape index: {}]
  %s22 = inlined_call_operand.vmem [shape: f32[4,1,32], index: 22, kind: input, shape index: {}]
  %s23 = inlined_call_operand.vmem [shape: bf16[32,128], index: 23, kind: input, shape index: {}]
  %s24 = inlined_call_operand.vmem [shape: f32[1,128], index: 24, kind: input, shape index: {}]
  %s25 = inlined_call_operand.hbm [shape: f32[8,128], index: 25, kind: output, shape index: {}]
  %s26 = sld [smem:[#allocation0]]
  $region110: #{tpu_custom_call.1} parent=0
    _
  %s28 = ssub.s32 1, %s26
  %s29 = scalar_select 0, %s28, %s26
  $region1: #{tpu_custom_call.1} parent=0
    #allocation2 [shape = 'u8[4096]{0}', space=vmem, size = 0x1000, scoped, tag = 'output window, operand 0, single buffered']
    #allocation3 [shape = 's32[1]{0}', space=sflag, size = 0x4, scoped, tag = 'scoped memory for tpu_custom_call.1']
    %30 = vsyncpa [#allocation3], 0
    // Predicated region
    $region2: #{tpu_custom_call.1} parent=1 // pred_check
      _
    $region3: #{tpu_custom_call.1} parent=1 // pred_check_branch
      %32 = sbr.rel (0) target = $region5
    $region4: #{tpu_custom_call.1} parent=1 // pred_region
      _
    $region5: #{tpu_custom_call.1} parent=1 // pred_fallthru
      _
    // Predicated region
    $region6: #{tpu_custom_call.1} parent=1 // pred_check
      _
    $region7: #{tpu_custom_call.1} parent=1 // pred_check_branch
      %34 = sbr.rel (0) target = $region9
    $region8: #{tpu_custom_call.1} parent=1 // pred_region
      _
    $region9: #{tpu_custom_call.1} parent=1 // pred_fallthru
      _
    // Predicated region
    $region10: #{tpu_custom_call.1} parent=1 // pred_check
      _
    $region11: #{tpu_custom_call.1} parent=1 // pred_check_branch
      %36 = sbr.rel (0) target = $region13
    $region12: #{tpu_custom_call.1} parent=1 // pred_region
      _
    $region13: #{tpu_custom_call.1} parent=1 // pred_fallthru
      _
    // Predicated region
    $region14: #{tpu_custom_call.1} parent=1 // pred_check
      _
    $region15: #{tpu_custom_call.1} parent=1 // pred_check_branch
      %38 = sbr.rel (0) target = $region17
    $region16: #{tpu_custom_call.1} parent=1 // pred_region
      _
    $region17: #{tpu_custom_call.1} parent=1 // pred_fallthru
      _
    // Predicated region
    $region18: #{tpu_custom_call.1} parent=1 // pred_check
      _
    $region19: #{tpu_custom_call.1} parent=1 // pred_check_branch
      %40 = sbr.rel (0) target = $region21
    $region20: #{tpu_custom_call.1} parent=1 // pred_region
      _
    $region21: #{tpu_custom_call.1} parent=1 // pred_fallthru
      _
    // Predicated region
    $region22: #{tpu_custom_call.1} parent=1 // pred_check
      _
    $region23: #{tpu_custom_call.1} parent=1 // pred_check_branch
      %42 = sbr.rel (0) target = $region25
    $region24: #{tpu_custom_call.1} parent=1 // pred_region
      _
    $region25: #{tpu_custom_call.1} parent=1 // pred_fallthru
      _
    // Predicated region
    $region26: #{tpu_custom_call.1} parent=1 // pred_check
      _
    $region27: #{tpu_custom_call.1} parent=1 // pred_check_branch
      %44 = sbr.rel (0) target = $region29
    $region28: #{tpu_custom_call.1} parent=1 // pred_region
      _
    $region29: #{tpu_custom_call.1} parent=1 // pred_fallthru
      _
    // Predicated region
    $region30: #{tpu_custom_call.1} parent=1 // pred_check
      _
    $region31: #{tpu_custom_call.1} parent=1 // pred_check_branch
      %46 = sbr.rel (0) target = $region33
    $region32: #{tpu_custom_call.1} parent=1 // pred_region
      _
    $region33: #{tpu_custom_call.1} parent=1 // pred_fallthru
      _
    // Predicated region
    $region34: #{tpu_custom_call.1} parent=1 // pred_check
      _
    $region35: #{tpu_custom_call.1} parent=1 // pred_check_branch
      %48 = sbr.rel (0) target = $region37
    $region36: #{tpu_custom_call.1} parent=1 // pred_region
      _
    $region37: #{tpu_custom_call.1} parent=1 // pred_fallthru
      _
    // Predicated region
    $region38: #{tpu_custom_call.1} parent=1 // pred_check
      _
    $region39: #{tpu_custom_call.1} parent=1 // pred_check_branch
      %50 = sbr.rel (0) target = $region41
    $region40: #{tpu_custom_call.1} parent=1 // pred_region
      _
    $region41: #{tpu_custom_call.1} parent=1 // pred_fallthru
      _
    // Predicated region
    $region42: #{tpu_custom_call.1} parent=1 // pred_check
      _
    $region43: #{tpu_custom_call.1} parent=1 // pred_check_branch
      %52 = sbr.rel (0) target = $region45
    $region44: #{tpu_custom_call.1} parent=1 // pred_region
      _
    $region45: #{tpu_custom_call.1} parent=1 // pred_fallthru
      _
    // Predicated region
    $region46: #{tpu_custom_call.1} parent=1 // pred_check
      _
    $region47: #{tpu_custom_call.1} parent=1 // pred_check_branch
      %54 = sbr.rel (0) target = $region49
    $region48: #{tpu_custom_call.1} parent=1 // pred_region
      _
    $region49: #{tpu_custom_call.1} parent=1 // pred_fallthru
      _
    // Predicated region
    $region50: #{tpu_custom_call.1} parent=1 // pred_check
      _
    $region51: #{tpu_custom_call.1} parent=1 // pred_check_branch
      %56 = sbr.rel (0) target = $region53
    $region52: #{tpu_custom_call.1} parent=1 // pred_region
      _
    $region53: #{tpu_custom_call.1} parent=1 // pred_fallthru
      _
    // Predicated region
    $region54: #{tpu_custom_call.1} parent=1 // pred_check
      _
    $region55: #{tpu_custom_call.1} parent=1 // pred_check_branch
      %58 = sbr.rel (0) target = $region57
    $region56: #{tpu_custom_call.1} parent=1 // pred_region
      _
    $region57: #{tpu_custom_call.1} parent=1 // pred_fallthru
      _
    // Predicated region
    $region58: #{tpu_custom_call.1} parent=1 // pred_check
      _
    $region59: #{tpu_custom_call.1} parent=1 // pred_check_branch
      %60 = sbr.rel (0) target = $region61
    $region60: #{tpu_custom_call.1} parent=1 // pred_region
      _
    $region61: #{tpu_custom_call.1} parent=1 // pred_fallthru
      _
    // Predicated region
    $region62: #{tpu_custom_call.1} parent=1 // pred_check
      _
    $region63: #{tpu_custom_call.1} parent=1 // pred_check_branch
      %62 = sbr.rel (0) target = $region65
    $region64: #{tpu_custom_call.1} parent=1 // pred_region
      _
    $region65: #{tpu_custom_call.1} parent=1 // pred_fallthru
      _
    // Predicated region
    $region66: #{tpu_custom_call.1} parent=1 // pred_check
      _
    $region67: #{tpu_custom_call.1} parent=1 // pred_check_branch
      %64 = sbr.rel (0) target = $region69
    $region68: #{tpu_custom_call.1} parent=1 // pred_region
      _
    $region69: #{tpu_custom_call.1} parent=1 // pred_fallthru
      _
    // Predicated region
    $region70: #{tpu_custom_call.1} parent=1 // pred_check
      _
    $region71: #{tpu_custom_call.1} parent=1 // pred_check_branch
      %66 = sbr.rel (0) target = $region73
    $region72: #{tpu_custom_call.1} parent=1 // pred_region
      _
    $region73: #{tpu_custom_call.1} parent=1 // pred_fallthru
      _
    // Predicated region
    $region74: #{tpu_custom_call.1} parent=1 // pred_check
      _
    $region75: #{tpu_custom_call.1} parent=1 // pred_check_branch
      %68 = sbr.rel (0) target = $region77
    $region76: #{tpu_custom_call.1} parent=1 // pred_region
      _
    $region77: #{tpu_custom_call.1} parent=1 // pred_fallthru
      _
    // Predicated region
    $region78: #{tpu_custom_call.1} parent=1 // pred_check
      _
    $region79: #{tpu_custom_call.1} parent=1 // pred_check_branch
      %70 = sbr.rel (0) target = $region81
    $region80: #{tpu_custom_call.1} parent=1 // pred_region
      _
    $region81: #{tpu_custom_call.1} parent=1 // pred_fallthru
      _
    // Predicated region
    $region82: #{tpu_custom_call.1} parent=1 // pred_check
      _
    $region83: #{tpu_custom_call.1} parent=1 // pred_check_branch
      %72 = sbr.rel (0) target = $region85
    $region84: #{tpu_custom_call.1} parent=1 // pred_region
      _
    $region85: #{tpu_custom_call.1} parent=1 // pred_fallthru
      _
    // Predicated region
    $region86: #{tpu_custom_call.1} parent=1 // pred_check
      _
    $region87: #{tpu_custom_call.1} parent=1 // pred_check_branch
      %74 = sbr.rel (0) target = $region89
    $region88: #{tpu_custom_call.1} parent=1 // pred_region
      _
    $region89: #{tpu_custom_call.1} parent=1 // pred_fallthru
      _
    // Predicated region
    $region90: #{tpu_custom_call.1} parent=1 // pred_check
      _
    $region91: #{tpu_custom_call.1} parent=1 // pred_check_branch
      %76 = sbr.rel (0) target = $region93
    $region92: #{tpu_custom_call.1} parent=1 // pred_region
      _
    $region93: #{tpu_custom_call.1} parent=1 // pred_fallthru
      _
    // Predicated region
    $region94: #{tpu_custom_call.1} parent=1 // pred_check
      _
    $region95: #{tpu_custom_call.1} parent=1 // pred_check_branch
      %78 = sbr.rel (0) target = $region97
    $region96: #{tpu_custom_call.1} parent=1 // pred_region
      _
    $region97: #{tpu_custom_call.1} parent=1 // pred_fallthru
      _
    // Predicated region
    $region98: #{tpu_custom_call.1} parent=1 // pred_check
      _
    $region99: #{tpu_custom_call.1} parent=1 // pred_check_branch
      %80 = sbr.rel (0) target = $region101
    $region100: #{tpu_custom_call.1} parent=1 // pred_region
      _
    $region101: #{tpu_custom_call.1} parent=1 // pred_fallthru
      _
    %v82 = vlaneseq
    %v83 = vand.u32 %v82, 127
    %v84 = vld [vmem:[%s2] sm:$0xff]
    %v85 = vld [vmem:[%s2 + $0x8] sm:$0xff]
    %v86 = vld [vmem:[%s2 + $0x10] sm:$0xff]
    %v87 = vld [vmem:[%s2 + $0x18] sm:$0xff]
    %v88 = vld [vmem:[%s2 + $0x20] sm:$0xff]
    %v89 = vld [vmem:[%s2 + $0x28] sm:$0xff]
    %v90 = vld [vmem:[%s2 + $0x30] sm:$0xff]
    %91 = vset.pattern.permute.xlu0 0
    %92 = vperm.xlu0 %91, %v84
    %v93 = vpop.permute.xlu0 %92
    %94 = vset.pattern.permute.xlu0 0
    %95 = vperm.xlu0 %94, %v85
    %v96 = vpop.permute.xlu0 %95
    %97 = vset.pattern.permute.xlu0 0
    %98 = vperm.xlu0 %97, %v86
    %v99 = vpop.permute.xlu0 %98
    %100 = vset.pattern.permute.xlu0 0
    %101 = vperm.xlu0 %100, %v87
    %v102 = vpop.permute.xlu0 %101
    %103 = vset.pattern.permute.xlu0 0
    %104 = vperm.xlu0 %103, %v88
    %v105 = vpop.permute.xlu0 %104
    %106 = vset.pattern.permute.xlu0 0
    %107 = vperm.xlu0 %106, %v89
    %v108 = vpop.permute.xlu0 %107
    %109 = vset.pattern.permute.xlu0 0
    %110 = vperm.xlu0 %109, %v90
    %v111 = vpop.permute.xlu0 %110
    %vm112 = vcmp.eq.s32.totalorder %v93, %v83
    %vm113 = vcmp.eq.s32.totalorder %v96, %v83
    %vm114 = vcmp.eq.s32.totalorder %v99, %v83
    %vm115 = vcmp.eq.s32.totalorder %v102, %v83
    %vm116 = vcmp.eq.s32.totalorder %v105, %v83
    %vm117 = vcmp.eq.s32.totalorder %v108, %v83
    %vm118 = vcmp.eq.s32.totalorder %v111, %v83
    %v119 = vld [vmem:[%s1] sm:$0xff]
    %v120 = vld [vmem:[%s1 + $0x8] sm:$0xff]
    %v121 = vld [vmem:[%s1 + $0x10] sm:$0xff]
    %v122 = vld [vmem:[%s1 + $0x18] sm:$0xff]
    %v123 = vld [vmem:[%s1 + $0x20] sm:$0xff]
    %v124 = vld [vmem:[%s1 + $0x28] sm:$0xff]
    %v125 = vld [vmem:[%s1 + $0x30] sm:$0xff]
    %v126 = vsub.s32 %v83, 8
    %127 = vset.pattern.permute.xlu0 0
    %128 = vperm.xlu0 %127, %v119
    %v129 = vpop.permute.xlu0 %128
    %130 = vset.pattern.permute.xlu0 0
    %131 = vperm.xlu0 %130, %v120
    %v132 = vpop.permute.xlu0 %131
    %133 = vset.pattern.permute.xlu0 0
    %134 = vperm.xlu0 %133, %v121
    %v135 = vpop.permute.xlu0 %134
    %136 = vset.pattern.permute.xlu0 0
    %137 = vperm.xlu0 %136, %v122
    %v138 = vpop.permute.xlu0 %137
    %139 = vset.pattern.permute.xlu0 0
    %140 = vperm.xlu0 %139, %v123
    %v141 = vpop.permute.xlu0 %140
    %142 = vset.pattern.permute.xlu0 0
    %143 = vperm.xlu0 %142, %v124
    %v144 = vpop.permute.xlu0 %143
    %145 = vset.pattern.permute.xlu0 0
    %146 = vperm.xlu0 %145, %v125
    %v147 = vpop.permute.xlu0 %146
    %vm148 = vcmp.eq.s32.totalorder %v129, %v126
    %vm149 = vcmp.eq.s32.totalorder %v132, %v126
    %vm150 = vcmp.eq.s32.totalorder %v135, %v126
    %vm151 = vcmp.eq.s32.totalorder %v138, %v126
    %vm152 = vcmp.eq.s32.totalorder %v141, %v126
    %vm153 = vcmp.eq.s32.totalorder %v144, %v126
    %vm154 = vcmp.eq.s32.totalorder %v147, %v126
    %vm155 = vmor %vm112, %vm148
    %vm156 = vmor %vm113, %vm149
    %vm157 = vmor %vm114, %vm150
    %vm158 = vmor %vm115, %vm151
    %vm159 = vmor %vm116, %vm152
    %vm160 = vmor %vm117, %vm153
    %vm161 = vmor %vm118, %vm154
    %v162 = vsel %vm155, 1, 0
    %v163 = vsel %vm156, 1, 0
    %v164 = vsel %vm157, 1, 0
    %v165 = vsel %vm158, 1, 0
    %v166 = vsel %vm159, 1, 0
    %v167 = vsel %vm160, 1, 0
    %v168 = vsel %vm161, 1, 0
    %v169 = vcvt.s32.f32 %v162
    %v170 = vcvt.s32.f32 %v163
    %v171 = vcvt.s32.f32 %v164
    %v172 = vcvt.s32.f32 %v165
    %v173 = vcvt.s32.f32 %v166
    %v174 = vcvt.s32.f32 %v167
    %v175 = vcvt.s32.f32 %v168
    %v176 = vpack.c.bf16 %v170, %v169
    %v177 = vpack.c.bf16 %v172, %v171
    %v178 = vpack.c.bf16 %v174, %v173
    %v179 = vpack.c.bf16 %v175, %v175
    %v180 = vlaneseq
    %v181 = vshrl.u32 %v180, 7
    %v182 = vld [vmem:[%s3] sm:$0x1]
    %v183 = vlaneseq
    %v184 = vshrl.u32 %v183, 7
    %v185 = vsub.s32 0, %v184
    %v186 = vrot.slane %v182, %v185
    %vm187 = vcmp.eq.s32.totalorder %v186, %v181
    %v188 = vsel %vm187, 1, 0
    %v189 = vcvt.s32.f32 %v188
    %v190 = vpack.c.bf16 %v189, %v189
    %v191 = vld [vmem:[%s0] sm:$0xff]
    %192 = vset.pattern.permute.xlu0 0
    %193 = vperm.xlu0 %192, %v191
    %v194 = vpop.permute.xlu0 %193
    %vm195 = vcmp.eq.s32.totalorder %v194, %v83
    %v196 = vsel %vm195, 1, 0
    %v197 = vcvt.s32.f32 %v196
    %v198 = vpack.c.bf16 %v197, %v197
    %v199 = vld [vmem:[%s5] sm:$0xf]
    %v200 = vld [vmem:[%s5 + $0x4] sm:$0xf]
    %v201 = vld [vmem:[%s5 + $0x8] sm:$0x3]
    %v205 = vunpack.c.l.b16 %v199
    %v206 = vunpack.c.l.b16 %v200
    %v207 = vunpack.c.l.b16 %v201
    %v208 = vpack.c.b16 %v206, %v205
    %v209 = vpack.c.b16 %v207, %v207
    %vm211 = vcmask 162816
    %v213 = vsel %vm211, %v198, 0
    %vm215 = vcmask 1041408
    %v217 = vsel %vm215, %v209, 0
    %219 = vmatprep.subr.bf16.mxu0 0
    %220 = vmatpush1.bf16.msra.mxu0 0
    %221 = vmatprep.subr.bf16.mxu0 0
    %222 = vmatpush1.bf16.msra.mxu0 0
    %223 = vmatprep.subr.bf16.mxu0 0
    %224 = vmatpush1.bf16.msra.mxu0 0
    %225 = vmatprep.subr.bf16.mxu0 0
    %226 = vmatpush1.bf16.msra.mxu0 0
    %227 = vmatprep.subr.bf16.mxu0 0
    %228 = vmatpush1.bf16.msra.mxu0 0
    %229 = vmatprep.subr.bf16.mxu0 0
    %230 = vmatpush1.bf16.msra.mxu0 0
    %231 = vmatprep.subr.bf16.mxu0 0
    %232 = vmatpush1.bf16.msra.mxu0 %v217
    %233 = vmatprep.subr.bf16.mxu0 0
    %234 = vmatpush1.bf16.msra.mxu0 %v208
    %235 = vmatprep.subr.bf16.mxu0 0
    %236 = vmatpush2.bf16.msra.mxu0 0
    %237 = vmatprep.subr.bf16.mxu0 0
    %238 = vmatpush2.bf16.msra.mxu0 0
    %239 = vmatprep.subr.bf16.mxu0 0
    %240 = vmatpush2.bf16.msra.mxu0 0
    %241 = vmatprep.subr.bf16.mxu0 0
    %242 = vmatpush2.bf16.msra.mxu0 0
    %243 = vmatprep.subr.bf16.mxu0 0
    %244 = vmatpush2.bf16.msra.mxu0 0
    %245 = vmatprep.subr.bf16.mxu0 0
    %246 = vmatpush2.bf16.msra.mxu0 0
    %247 = vmatprep.subr.bf16.mxu0 0
    %248 = vmatpush2.bf16.msra.mxu0 0
    %249 = vmatprep.subr.bf16.mxu0 0
    %250 = vmatpush2.bf16.msra.mxu0 0
    %251 = vmatprep.mubr.bf16.mxu0 0
    %252 = vmatmul.mubr.bf16.gmra.mxu0 %v213
    %v253 = vpop.f32.mrf.mxu0
    %v254 = vadd.f32 0.0, %v253
    %v255 = vpop.f32.mrf.mxu0
    %v256 = vpop.f32.mrf.mxu0
    %v257 = vpop.f32.mrf.mxu0
    %258 = vdwg.mxu0
    %v259 = vld [vmem:[%s6] sm:$0x1]
    %v260 = vld [vmem:[%s7] sm:$0x1]
    %vm261 = vcmask 261120
    %v262 = vsel %vm261, %v254, 0.0
    %263 = vadd.xlane.f32.xlu0 %v262
    %v264 = vpop.xlane.xlu0 %263
    %v265 = vmul.f32 %v254, %v254
    %v266 = vsel %vm261, %v265, 0.0
    %267 = vadd.xlane.f32.xlu0 %v266
    %v268 = vpop.xlane.xlu0 %267
    %v269 = vmul.f32 %v264, 0.03125
    %v270 = vmul.f32 %v268, 0.03125
    %v271 = vmul.f32 %v269, %v269
    %v272 = vsub.f32 %v270, %v271
    %v273 = vsub.f32 %v254, %v269
    %v274 = vadd.f32 %v272, 1e-05
    %v275 = vrsqrt.pop %v274
    %v276 = vmul.f32 %v273, %v275
    %v278 = vlaneseq
    %v279 = vshrl.u32 %v278, 7
    %v280 = vsub.s32 0, %v279
    %v281 = vrot.slane %v259, %v280
    %v283 = vmul.f32 %v276, %v281
    %v285 = vlaneseq
    %v286 = vshrl.u32 %v285, 7
    %v287 = vsub.s32 0, %v286
    %v288 = vrot.slane %v260, %v287
    %v290 = vadd.f32 %v283, %v288
    %v291 = vld [vmem:[%s4] sm:$0xff]
    %v292 = vld [vmem:[%s4 + $0x8] sm:$0xff]
    %v293 = vld [vmem:[%s4 + $0x10] sm:$0xff]
    %v294 = vld [vmem:[%s4 + $0x18] sm:$0xff]
    %v295 = vld [vmem:[%s4 + $0x20] sm:$0xff]
    %v296 = vld [vmem:[%s4 + $0x28] sm:$0xff]
    %v297 = vld [vmem:[%s4 + $0x30] sm:$0xff]
    %v298 = vpack.c.bf16 %v292, %v291
    %v299 = vpack.c.bf16 %v294, %v293
    %v300 = vpack.c.bf16 %v296, %v295
    %v301 = vpack.c.bf16 %v297, %v297
    %v302 = vld [vmem:[%s8] sm:$0x3]
    %v303 = vld [vmem:[%s9] sm:$0x1]
    %v305 = vlaneseq
    %v306 = vshrl.u32 %v305, 7
    %v307 = vsub.s32 0, %v306
    %v308 = vrot.slane %v303, %v307
    %vm310 = vcmask 31744
    %v312 = vsel %vm310, %v298, 0
    %v315 = vsel %vm310, %v299, 0
    %v318 = vsel %vm310, %v300, 0
    %v321 = vsel %vm310, %v301, 0
    %v324 = vsel %vm215, %v302, 0
    %326 = vmatprep.subr.bf16.mxu0 0
    %327 = vmatpush1.bf16.msra.mxu0 0
    %328 = vmatprep.subr.bf16.mxu0 0
    %329 = vmatpush1.bf16.msra.mxu0 0
    %330 = vmatprep.subr.bf16.mxu0 0
    %331 = vmatpush1.bf16.msra.mxu0 0
    %332 = vmatprep.subr.bf16.mxu0 0
    %333 = vmatpush1.bf16.msra.mxu0 0
    %334 = vmatprep.subr.bf16.mxu0 0
    %335 = vmatpush1.bf16.msra.mxu0 0
    %336 = vmatprep.subr.bf16.mxu0 0
    %337 = vmatpush1.bf16.msra.mxu0 0
    %338 = vmatprep.subr.bf16.mxu0 0
    %339 = vmatpush1.bf16.msra.mxu0 0
    %340 = vmatprep.subr.bf16.mxu0 0
    %341 = vmatpush1.bf16.msra.mxu0 %v324
    %342 = vmatprep.subr.bf16.mxu0 0
    %343 = vmatpush2.bf16.msra.mxu0 0
    %344 = vmatprep.subr.bf16.mxu0 0
    %345 = vmatpush2.bf16.msra.mxu0 0
    %346 = vmatprep.subr.bf16.mxu0 0
    %347 = vmatpush2.bf16.msra.mxu0 0
    %348 = vmatprep.subr.bf16.mxu0 0
    %349 = vmatpush2.bf16.msra.mxu0 0
    %350 = vmatprep.subr.bf16.mxu0 0
    %351 = vmatpush2.bf16.msra.mxu0 0
    %352 = vmatprep.subr.bf16.mxu0 0
    %353 = vmatpush2.bf16.msra.mxu0 0
    %354 = vmatprep.subr.bf16.mxu0 0
    %355 = vmatpush2.bf16.msra.mxu0 0
    %356 = vmatprep.subr.bf16.mxu0 0
    %357 = vmatpush2.bf16.msra.mxu0 0
    %358 = vmatprep.mubr.bf16.mxu0 0
    %359 = vmatmul.mubr.bf16.gmra.mxu0 %v312
    %v360 = vpop.f32.mrf.mxu0
    %v361 = vadd.f32 %v308, %v360
    %v362 = vpop.f32.mrf.mxu0
    %v363 = vpop.f32.mrf.mxu0
    %v364 = vadd.f32 %v308, %v363
    %v365 = vpop.f32.mrf.mxu0
    %366 = vmatprep.mubr.bf16.mxu0 0
    %367 = vmatmul.mubr.bf16.gmra.mxu0 %v315
    %v368 = vpop.f32.mrf.mxu0
    %v369 = vadd.f32 %v308, %v368
    %v370 = vpop.f32.mrf.mxu0
    %v371 = vpop.f32.mrf.mxu0
    %v372 = vadd.f32 %v308, %v371
    %v373 = vpop.f32.mrf.mxu0
    %374 = vmatprep.mubr.bf16.mxu0 0
    %375 = vmatmul.mubr.bf16.gmra.mxu0 %v318
    %v376 = vpop.f32.mrf.mxu0
    %v377 = vadd.f32 %v308, %v376
    %v378 = vpop.f32.mrf.mxu0
    %v379 = vpop.f32.mrf.mxu0
    %v380 = vadd.f32 %v308, %v379
    %v381 = vpop.f32.mrf.mxu0
    %382 = vmatprep.mubr.bf16.mxu0 0
    %383 = vmatmul.mubr.bf16.gmra.mxu0 %v321
    %v384 = vpop.f32.mrf.mxu0
    %v385 = vadd.f32 %v308, %v384
    %v386 = vpop.f32.mrf.mxu0
    %v387 = vpop.f32.mrf.mxu0
    %v388 = vpop.f32.mrf.mxu0
    %389 = vdwg.mxu0
    %v390 = vmax.f32 %v361, 0.0
    %v391 = vmax.f32 %v364, 0.0
    %v392 = vmax.f32 %v369, 0.0
    %v393 = vmax.f32 %v372, 0.0
    %v394 = vmax.f32 %v377, 0.0
    %v395 = vmax.f32 %v380, 0.0
    %v396 = vmax.f32 %v385, 0.0
    %v397 = vpack.c.bf16 %v391, %v390
    %v398 = vpack.c.bf16 %v393, %v392
    %v399 = vpack.c.bf16 %v395, %v394
    %v400 = vpack.c.bf16 %v396, %v396
    %v401 = vld [vmem:[%s10] sm:$0xf]
    %v402 = vld [vmem:[%s10 + $0x4] sm:$0xf]
    %v403 = vld [vmem:[%s10 + $0x8] sm:$0xf]
    %v404 = vld [vmem:[%s10 + $0xc] sm:$0xf]
    %v405 = vld [vmem:[%s11] sm:$0x1]
    %v407 = vlaneseq
    %v408 = vshrl.u32 %v407, 7
    %v409 = vsub.s32 0, %v408
    %v410 = vrot.slane %v405, %v409
    %v416 = vunpack.c.l.b16 %v401
    %v417 = vunpack.c.l.b16 %v402
    %v418 = vunpack.c.l.b16 %v403
    %v419 = vunpack.c.l.b16 %v404
    %v420 = vpack.c.b16 %v417, %v416
    %v421 = vpack.c.b16 %v419, %v418
    %v425 = vsel %vm261, %v397, 0
    %v428 = vsel %vm261, %v398, 0
    %v431 = vsel %vm261, %v399, 0
    %v434 = vsel %vm261, %v400, 0
    %436 = vmatprep.subr.bf16.mxu0 0
    %437 = vmatpush1.bf16.msra.mxu0 0
    %438 = vmatprep.subr.bf16.mxu0 0
    %439 = vmatpush1.bf16.msra.mxu0 0
    %440 = vmatprep.subr.bf16.mxu0 0
    %441 = vmatpush1.bf16.msra.mxu0 0
    %442 = vmatprep.subr.bf16.mxu0 0
    %443 = vmatpush1.bf16.msra.mxu0 0
    %444 = vmatprep.subr.bf16.mxu0 0
    %445 = vmatpush1.bf16.msra.mxu0 0
    %446 = vmatprep.subr.bf16.mxu0 0
    %447 = vmatpush1.bf16.msra.mxu0 0
    %448 = vmatprep.subr.bf16.mxu0 0
    %449 = vmatpush1.bf16.msra.mxu0 %v421
    %450 = vmatprep.subr.bf16.mxu0 0
    %451 = vmatpush1.bf16.msra.mxu0 %v420
    %452 = vmatprep.subr.bf16.mxu0 0
    %453 = vmatpush2.bf16.msra.mxu0 0
    %454 = vmatprep.subr.bf16.mxu0 0
    %455 = vmatpush2.bf16.msra.mxu0 0
    %456 = vmatprep.subr.bf16.mxu0 0
    %457 = vmatpush2.bf16.msra.mxu0 0
    %458 = vmatprep.subr.bf16.mxu0 0
    %459 = vmatpush2.bf16.msra.mxu0 0
    %460 = vmatprep.subr.bf16.mxu0 0
    %461 = vmatpush2.bf16.msra.mxu0 0
    %462 = vmatprep.subr.bf16.mxu0 0
    %463 = vmatpush2.bf16.msra.mxu0 0
    %464 = vmatprep.subr.bf16.mxu0 0
    %465 = vmatpush2.bf16.msra.mxu0 0
    %466 = vmatprep.subr.bf16.mxu0 0
    %467 = vmatpush2.bf16.msra.mxu0 0
    %468 = vmatprep.mubr.bf16.mxu0 0
    %469 = vmatmul.mubr.bf16.gmra.mxu0 %v425
    %v470 = vpop.f32.mrf.mxu0
    %v471 = vadd.f32 %v410, %v470
    %v472 = vpop.f32.mrf.mxu0
    %v473 = vpop.f32.mrf.mxu0
    %v474 = vadd.f32 %v410, %v473
    %v475 = vpop.f32.mrf.mxu0
    %476 = vmatprep.mubr.bf16.mxu0 0
    %477 = vmatmul.mubr.bf16.gmra.mxu0 %v428
    %v478 = vpop.f32.mrf.mxu0
    %v479 = vadd.f32 %v410, %v478
    %v480 = vpop.f32.mrf.mxu0
    %v481 = vpop.f32.mrf.mxu0
    %v482 = vadd.f32 %v410, %v481
    %v483 = vpop.f32.mrf.mxu0
    %484 = vmatprep.mubr.bf16.mxu0 0
    %485 = vmatmul.mubr.bf16.gmra.mxu0 %v431
    %v486 = vpop.f32.mrf.mxu0
    %v487 = vadd.f32 %v410, %v486
    %v488 = vpop.f32.mrf.mxu0
    %v489 = vpop.f32.mrf.mxu0
    %v490 = vadd.f32 %v410, %v489
    %v491 = vpop.f32.mrf.mxu0
    %492 = vmatprep.mubr.bf16.mxu0 0
    %493 = vmatmul.mubr.bf16.gmra.mxu0 %v434
    %v494 = vpop.f32.mrf.mxu0
    %v495 = vadd.f32 %v410, %v494
    %v496 = vpop.f32.mrf.mxu0
    %v497 = vpop.f32.mrf.mxu0
    %v498 = vpop.f32.mrf.mxu0
    %499 = vdwg.mxu0
    %v500 = vld [vmem:[%s12] sm:$0x1]
    %v501 = vld [vmem:[%s13] sm:$0x1]
    %v502 = vsel %vm261, %v471, 0.0
    %503 = vadd.xlane.f32.xlu0 %v502
    %v504 = vpop.xlane.xlu0 %503
    %v505 = vsel %vm261, %v474, 0.0
    %506 = vadd.xlane.f32.xlu0 %v505
    %v507 = vpop.xlane.xlu0 %506
    %v508 = vsel %vm261, %v479, 0.0
    %509 = vadd.xlane.f32.xlu0 %v508
    %v510 = vpop.xlane.xlu0 %509
    %v511 = vsel %vm261, %v482, 0.0
    %512 = vadd.xlane.f32.xlu0 %v511
    %v513 = vpop.xlane.xlu0 %512
    %v514 = vsel %vm261, %v487, 0.0
    %515 = vadd.xlane.f32.xlu0 %v514
    %v516 = vpop.xlane.xlu0 %515
    %v517 = vsel %vm261, %v490, 0.0
    %518 = vadd.xlane.f32.xlu0 %v517
    %v519 = vpop.xlane.xlu0 %518
    %v520 = vsel %vm261, %v495, 0.0
    %521 = vadd.xlane.f32.xlu0 %v520
    %v522 = vpop.xlane.xlu0 %521
    %v523 = vmul.f32 %v471, %v471
    %v524 = vmul.f32 %v474, %v474
    %v525 = vmul.f32 %v479, %v479
    %v526 = vmul.f32 %v482, %v482
    %v527 = vmul.f32 %v487, %v487
    %v528 = vmul.f32 %v490, %v490
    %v529 = vmul.f32 %v495, %v495
    %v530 = vsel %vm261, %v523, 0.0
    %531 = vadd.xlane.f32.xlu0 %v530
    %v532 = vpop.xlane.xlu0 %531
    %v533 = vsel %vm261, %v524, 0.0
    %534 = vadd.xlane.f32.xlu0 %v533
    %v535 = vpop.xlane.xlu0 %534
    %v536 = vsel %vm261, %v525, 0.0
    %537 = vadd.xlane.f32.xlu0 %v536
    %v538 = vpop.xlane.xlu0 %537
    %v539 = vsel %vm261, %v526, 0.0
    %540 = vadd.xlane.f32.xlu0 %v539
    %v541 = vpop.xlane.xlu0 %540
    %v542 = vsel %vm261, %v527, 0.0
    %543 = vadd.xlane.f32.xlu0 %v542
    %v544 = vpop.xlane.xlu0 %543
    %v545 = vsel %vm261, %v528, 0.0
    %546 = vadd.xlane.f32.xlu0 %v545
    %v547 = vpop.xlane.xlu0 %546
    %v548 = vsel %vm261, %v529, 0.0
    %549 = vadd.xlane.f32.xlu0 %v548
    %v550 = vpop.xlane.xlu0 %549
    %v551 = vmul.f32 %v504, 0.03125
    %v552 = vmul.f32 %v507, 0.03125
    %v553 = vmul.f32 %v510, 0.03125
    %v554 = vmul.f32 %v513, 0.03125
    %v555 = vmul.f32 %v516, 0.03125
    %v556 = vmul.f32 %v519, 0.03125
    %v557 = vmul.f32 %v522, 0.03125
    %v558 = vmul.f32 %v532, 0.03125
    %v559 = vmul.f32 %v535, 0.03125
    %v560 = vmul.f32 %v538, 0.03125
    %v561 = vmul.f32 %v541, 0.03125
    %v562 = vmul.f32 %v544, 0.03125
    %v563 = vmul.f32 %v547, 0.03125
    %v564 = vmul.f32 %v550, 0.03125
    %v565 = vmul.f32 %v551, %v551
    %v566 = vmul.f32 %v552, %v552
    %v567 = vmul.f32 %v553, %v553
    %v568 = vmul.f32 %v554, %v554
    %v569 = vmul.f32 %v555, %v555
    %v570 = vmul.f32 %v556, %v556
    %v571 = vmul.f32 %v557, %v557
    %v572 = vsub.f32 %v558, %v565
    %v573 = vsub.f32 %v559, %v566
    %v574 = vsub.f32 %v560, %v567
    %v575 = vsub.f32 %v561, %v568
    %v576 = vsub.f32 %v562, %v569
    %v577 = vsub.f32 %v563, %v570
    %v578 = vsub.f32 %v564, %v571
    %v579 = vsub.f32 %v471, %v551
    %v580 = vsub.f32 %v474, %v552
    %v581 = vsub.f32 %v479, %v553
    %v582 = vsub.f32 %v482, %v554
    %v583 = vsub.f32 %v487, %v555
    %v584 = vsub.f32 %v490, %v556
    %v585 = vsub.f32 %v495, %v557
    %v586 = vadd.f32 %v572, 1e-05
    %v587 = vadd.f32 %v573, 1e-05
    %v588 = vadd.f32 %v574, 1e-05
    %v589 = vadd.f32 %v575, 1e-05
    %v590 = vadd.f32 %v576, 1e-05
    %v591 = vadd.f32 %v577, 1e-05
    %v592 = vadd.f32 %v578, 1e-05
    %v593 = vrsqrt.pop %v586
    %v594 = vrsqrt.pop %v587
    %v595 = vrsqrt.pop %v588
    %v596 = vrsqrt.pop %v589
    %v597 = vrsqrt.pop %v590
    %v598 = vrsqrt.pop %v591
    %v599 = vrsqrt.pop %v592
    %v600 = vmul.f32 %v579, %v593
    %v601 = vmul.f32 %v580, %v594
    %v602 = vmul.f32 %v581, %v595
    %v603 = vmul.f32 %v582, %v596
    %v604 = vmul.f32 %v583, %v597
    %v605 = vmul.f32 %v584, %v598
    %v606 = vmul.f32 %v585, %v599
    %v608 = vlaneseq
    %v609 = vshrl.u32 %v608, 7
    %v610 = vsub.s32 0, %v609
    %v611 = vrot.slane %v500, %v610
    %v613 = vmul.f32 %v600, %v611
    %v614 = vmul.f32 %v601, %v611
    %v615 = vmul.f32 %v602, %v611
    %v616 = vmul.f32 %v603, %v611
    %v617 = vmul.f32 %v604, %v611
    %v618 = vmul.f32 %v605, %v611
    %v619 = vmul.f32 %v606, %v611
    %v621 = vlaneseq
    %v622 = vshrl.u32 %v621, 7
    %v623 = vsub.s32 0, %v622
    %v624 = vrot.slane %v501, %v623
    %v626 = vadd.f32 %v613, %v624
    %v627 = vadd.f32 %v614, %v624
    %v628 = vadd.f32 %v615, %v624
    %v629 = vadd.f32 %v616, %v624
    %v630 = vadd.f32 %v617, %v624
    %v631 = vadd.f32 %v618, %v624
    %v632 = vadd.f32 %v619, %v624
    %v633 = vpack.c.bf16 %v290, %v290
    %v634 = vld [vmem:[%s14] sm:$0xf]
    %v635 = vld [vmem:[%s14 + $0x4] sm:$0xf]
    %v636 = vld [vmem:[%s14 + $0x8] sm:$0xf]
    %v637 = vld [vmem:[%s14 + $0xc] sm:$0xf]
    %v642 = vunpack.c.l.b16 %v634
    %v643 = vunpack.c.l.b16 %v635
    %v644 = vunpack.c.l.b16 %v636
    %v645 = vunpack.c.l.b16 %v637
    %v646 = vpack.c.b16 %v643, %v642
    %v647 = vpack.c.b16 %v645, %v644
    %v651 = vsel %vm261, %v633, 0
    %653 = vmatprep.subr.bf16.mxu0 0
    %654 = vmatpush1.bf16.msra.mxu0 0
    %655 = vmatprep.subr.bf16.mxu0 0
    %656 = vmatpush1.bf16.msra.mxu0 0
    %657 = vmatprep.subr.bf16.mxu0 0
    %658 = vmatpush1.bf16.msra.mxu0 0
    %659 = vmatprep.subr.bf16.mxu0 0
    %660 = vmatpush1.bf16.msra.mxu0 0
    %661 = vmatprep.subr.bf16.mxu0 0
    %662 = vmatpush1.bf16.msra.mxu0 0
    %663 = vmatprep.subr.bf16.mxu0 0
    %664 = vmatpush1.bf16.msra.mxu0 0
    %665 = vmatprep.subr.bf16.mxu0 0
    %666 = vmatpush1.bf16.msra.mxu0 %v647
    %667 = vmatprep.subr.bf16.mxu0 0
    %668 = vmatpush1.bf16.msra.mxu0 %v646
    %669 = vmatprep.subr.bf16.mxu0 0
    %670 = vmatpush2.bf16.msra.mxu0 0
    %671 = vmatprep.subr.bf16.mxu0 0
    %672 = vmatpush2.bf16.msra.mxu0 0
    %673 = vmatprep.subr.bf16.mxu0 0
    %674 = vmatpush2.bf16.msra.mxu0 0
    %675 = vmatprep.subr.bf16.mxu0 0
    %676 = vmatpush2.bf16.msra.mxu0 0
    %677 = vmatprep.subr.bf16.mxu0 0
    %678 = vmatpush2.bf16.msra.mxu0 0
    %679 = vmatprep.subr.bf16.mxu0 0
    %680 = vmatpush2.bf16.msra.mxu0 0
    %681 = vmatprep.subr.bf16.mxu0 0
    %682 = vmatpush2.bf16.msra.mxu0 0
    %683 = vmatprep.subr.bf16.mxu0 0
    %684 = vmatpush2.bf16.msra.mxu0 0
    %685 = vmatprep.mubr.bf16.mxu0 0
    %686 = vmatmul.mubr.bf16.gmra.mxu0 %v651
    %v687 = vpop.f32.mrf.mxu0
    %v688 = vadd.f32 0.0, %v687
    %v689 = vpop.f32.mrf.mxu0
    %v690 = vpop.f32.mrf.mxu0
    %v691 = vpop.f32.mrf.mxu0
    %692 = vdwg.mxu0
    %693 = vrot.lane.b32.xlu0 %v688, 64
    %v694 = vpop.permute.xlu0 %693
    %v695 = vpack.c.bf16 %v694, %v688
    %v696 = vpack.c.bf16 %v627, %v626
    %v697 = vpack.c.bf16 %v629, %v628
    %v698 = vpack.c.bf16 %v631, %v630
    %v699 = vpack.c.bf16 %v632, %v632
    %v700 = vld [vmem:[%s15] sm:$0xf]
    %v701 = vld [vmem:[%s15 + $0x4] sm:$0xf]
    %v702 = vld [vmem:[%s15 + $0x8] sm:$0xf]
    %v703 = vld [vmem:[%s15 + $0xc] sm:$0xf]
    %v708 = vunpack.c.l.b16 %v700
    %v709 = vunpack.c.l.b16 %v701
    %v710 = vunpack.c.l.b16 %v702
    %v711 = vunpack.c.l.b16 %v703
    %v712 = vpack.c.b16 %v709, %v708
    %v713 = vpack.c.b16 %v711, %v710
    %v717 = vsel %vm261, %v696, 0
    %v720 = vsel %vm261, %v697, 0
    %v723 = vsel %vm261, %v698, 0
    %v726 = vsel %vm261, %v699, 0
    %728 = vmatprep.subr.bf16.mxu0 0
    %729 = vmatpush1.bf16.msra.mxu0 0
    %730 = vmatprep.subr.bf16.mxu0 0
    %731 = vmatpush1.bf16.msra.mxu0 0
    %732 = vmatprep.subr.bf16.mxu0 0
    %733 = vmatpush1.bf16.msra.mxu0 0
    %734 = vmatprep.subr.bf16.mxu0 0
    %735 = vmatpush1.bf16.msra.mxu0 0
    %736 = vmatprep.subr.bf16.mxu0 0
    %737 = vmatpush1.bf16.msra.mxu0 0
    %738 = vmatprep.subr.bf16.mxu0 0
    %739 = vmatpush1.bf16.msra.mxu0 0
    %740 = vmatprep.subr.bf16.mxu0 0
    %741 = vmatpush1.bf16.msra.mxu0 %v713
    %742 = vmatprep.subr.bf16.mxu0 0
    %743 = vmatpush1.bf16.msra.mxu0 %v712
    %744 = vmatprep.subr.bf16.mxu0 0
    %745 = vmatpush2.bf16.msra.mxu0 0
    %746 = vmatprep.subr.bf16.mxu0 0
    %747 = vmatpush2.bf16.msra.mxu0 0
    %748 = vmatprep.subr.bf16.mxu0 0
    %749 = vmatpush2.bf16.msra.mxu0 0
    %750 = vmatprep.subr.bf16.mxu0 0
    %751 = vmatpush2.bf16.msra.mxu0 0
    %752 = vmatprep.subr.bf16.mxu0 0
    %753 = vmatpush2.bf16.msra.mxu0 0
    %754 = vmatprep.subr.bf16.mxu0 0
    %755 = vmatpush2.bf16.msra.mxu0 0
    %756 = vmatprep.subr.bf16.mxu0 0
    %757 = vmatpush2.bf16.msra.mxu0 0
    %758 = vmatprep.subr.bf16.mxu0 0
    %759 = vmatpush2.bf16.msra.mxu0 0
    %760 = vmatprep.mubr.bf16.mxu0 0
    %761 = vmatmul.mubr.bf16.gmra.mxu0 %v717
    %v762 = vpop.f32.mrf.mxu0
    %v763 = vadd.f32 0.0, %v762
    %v764 = vpop.f32.mrf.mxu0
    %v765 = vpop.f32.mrf.mxu0
    %v766 = vadd.f32 0.0, %v765
    %v767 = vpop.f32.mrf.mxu0
    %768 = vmatprep.mubr.bf16.mxu0 0
    %769 = vmatmul.mubr.bf16.gmra.mxu0 %v720
    %v770 = vpop.f32.mrf.mxu0
    %v771 = vadd.f32 0.0, %v770
    %v772 = vpop.f32.mrf.mxu0
    %v773 = vpop.f32.mrf.mxu0
    %v774 = vadd.f32 0.0, %v773
    %v775 = vpop.f32.mrf.mxu0
    %776 = vmatprep.mubr.bf16.mxu0 0
    %777 = vmatmul.mubr.bf16.gmra.mxu0 %v723
    %v778 = vpop.f32.mrf.mxu0
    %v779 = vadd.f32 0.0, %v778
    %v780 = vpop.f32.mrf.mxu0
    %v781 = vpop.f32.mrf.mxu0
    %v782 = vadd.f32 0.0, %v781
    %v783 = vpop.f32.mrf.mxu0
    %784 = vmatprep.mubr.bf16.mxu0 0
    %785 = vmatmul.mubr.bf16.gmra.mxu0 %v726
    %v786 = vpop.f32.mrf.mxu0
    %v787 = vadd.f32 0.0, %v786
    %v788 = vpop.f32.mrf.mxu0
    %v789 = vpop.f32.mrf.mxu0
    %v790 = vpop.f32.mrf.mxu0
    %791 = vdwg.mxu0
    %vm792 = vcmask 130048
    %v794 = vsel %vm792, %v176, 0
    %v797 = vsel %vm792, %v177, 0
    %v800 = vsel %vm792, %v178, 0
    %v803 = vsel %vm792, %v179, 0
    %805 = vmatprep.subr.bf16.mxu0 0
    %806 = vmatpush1.bf16.msra.mxu0 0
    %807 = vmatprep.subr.bf16.mxu0 0
    %808 = vmatpush1.bf16.msra.mxu0 0
    %809 = vmatprep.subr.bf16.mxu0 0
    %810 = vmatpush1.bf16.msra.mxu0 0
    %811 = vmatprep.subr.bf16.mxu0 0
    %812 = vmatpush1.bf16.msra.mxu0 0
    %813 = vmatprep.subr.bf16.mxu0 0
    %814 = vmatpush1.bf16.msra.mxu0 0
    %815 = vmatprep.subr.bf16.mxu0 0
    %816 = vmatpush1.bf16.msra.mxu0 0
    %817 = vmatprep.subr.bf16.mxu0 0
    %818 = vmatpush1.bf16.msra.mxu0 0
    %819 = vmatprep.subr.bf16.mxu0 0
    %820 = vmatpush1.bf16.msra.mxu0 %v695
    %821 = vmatprep.subr.bf16.mxu0 0
    %822 = vmatpush2.bf16.msra.mxu0 0
    %823 = vmatprep.subr.bf16.mxu0 0
    %824 = vmatpush2.bf16.msra.mxu0 0
    %825 = vmatprep.subr.bf16.mxu0 0
    %826 = vmatpush2.bf16.msra.mxu0 0
    %827 = vmatprep.subr.bf16.mxu0 0
    %828 = vmatpush2.bf16.msra.mxu0 0
    %829 = vmatprep.subr.bf16.mxu0 0
    %830 = vmatpush2.bf16.msra.mxu0 0
    %831 = vmatprep.subr.bf16.mxu0 0
    %832 = vmatpush2.bf16.msra.mxu0 0
    %833 = vmatprep.subr.bf16.mxu0 0
    %834 = vmatpush2.bf16.msra.mxu0 0
    %835 = vmatprep.subr.bf16.mxu0 0
    %836 = vmatpush2.bf16.msra.mxu0 0
    %837 = vmatprep.mubr.bf16.mxu0 0
    %838 = vmatmul.mubr.bf16.gmra.mxu0 %v794
    %v839 = vpop.f32.mrf.mxu0
    %v840 = vadd.f32 %v763, %v839
    %v841 = vpop.f32.mrf.mxu0
    %v842 = vpop.f32.mrf.mxu0
    %v843 = vadd.f32 %v766, %v842
    %v844 = vpop.f32.mrf.mxu0
    %845 = vmatprep.mubr.bf16.mxu0 0
    %846 = vmatmul.mubr.bf16.gmra.mxu0 %v797
    %v847 = vpop.f32.mrf.mxu0
    %v848 = vadd.f32 %v771, %v847
    %v849 = vpop.f32.mrf.mxu0
    %v850 = vpop.f32.mrf.mxu0
    %v851 = vadd.f32 %v774, %v850
    %v852 = vpop.f32.mrf.mxu0
    %853 = vmatprep.mubr.bf16.mxu0 0
    %854 = vmatmul.mubr.bf16.gmra.mxu0 %v800
    %v855 = vpop.f32.mrf.mxu0
    %v856 = vadd.f32 %v779, %v855
    %v857 = vpop.f32.mrf.mxu0
    %v858 = vpop.f32.mrf.mxu0
    %v859 = vadd.f32 %v782, %v858
    %v860 = vpop.f32.mrf.mxu0
    %861 = vmatprep.mubr.bf16.mxu0 0
    %862 = vmatmul.mubr.bf16.gmra.mxu0 %v803
    %v863 = vpop.f32.mrf.mxu0
    %v864 = vadd.f32 %v787, %v863
    %v865 = vpop.f32.mrf.mxu0
    %v866 = vpop.f32.mrf.mxu0
    %v867 = vpop.f32.mrf.mxu0
    %868 = vdwg.mxu0
    %v869 = vld [vmem:[%s16] sm:$0x1]
    %v871 = vlaneseq
    %v872 = vshrl.u32 %v871, 7
    %v873 = vsub.s32 0, %v872
    %v874 = vrot.slane %v869, %v873
    %v876 = vadd.f32 %v840, %v874
    %v877 = vadd.f32 %v843, %v874
    %v878 = vadd.f32 %v848, %v874
    %v879 = vadd.f32 %v851, %v874
    %v880 = vadd.f32 %v856, %v874
    %v881 = vadd.f32 %v859, %v874
    %v882 = vadd.f32 %v864, %v874
    %v883 = vmax.f32 %v876, 0.0
    %v884 = vmax.f32 %v877, 0.0
    %v885 = vmax.f32 %v878, 0.0
    %v886 = vmax.f32 %v879, 0.0
    %v887 = vmax.f32 %v880, 0.0
    %v888 = vmax.f32 %v881, 0.0
    %v889 = vmax.f32 %v882, 0.0
    %v890 = vpack.c.bf16 %v884, %v883
    %v891 = vpack.c.bf16 %v886, %v885
    %v892 = vpack.c.bf16 %v888, %v887
    %v893 = vpack.c.bf16 %v889, %v889
    %v894 = vld [vmem:[%s17] sm:$0xf]
    %v895 = vld [vmem:[%s17 + $0x4] sm:$0xf]
    %v896 = vld [vmem:[%s17 + $0x8] sm:$0xf]
    %v897 = vld [vmem:[%s17 + $0xc] sm:$0xf]
    %v898 = vld [vmem:[%s17 + $0x10] sm:$0xf]
    %v899 = vld [vmem:[%s17 + $0x14] sm:$0xf]
    %v900 = vld [vmem:[%s17 + $0x18] sm:$0xf]
    %v901 = vld [vmem:[%s17 + $0x1c] sm:$0xf]
    %v902 = vld [vmem:[%s18] sm:$0x1]
    %v904 = vlaneseq
    %v905 = vshrl.u32 %v904, 7
    %v906 = vsub.s32 0, %v905
    %v907 = vrot.slane %v902, %v906
    %v917 = vunpack.c.l.b16 %v894
    %v918 = vunpack.c.l.b16 %v895
    %v919 = vunpack.c.l.b16 %v896
    %v920 = vunpack.c.l.b16 %v897
    %v921 = vunpack.c.l.b16 %v898
    %v922 = vunpack.c.l.b16 %v899
    %v923 = vunpack.c.l.b16 %v900
    %v924 = vunpack.c.l.b16 %v901
    %v925 = vpack.c.b16 %v918, %v917
    %v926 = vpack.c.b16 %v920, %v919
    %v927 = vpack.c.b16 %v922, %v921
    %v928 = vpack.c.b16 %v924, %v923
    %vm933 = vcmask 523264
    %v935 = vsel %vm933, %v890, 0
    %v938 = vsel %vm933, %v891, 0
    %v941 = vsel %vm933, %v892, 0
    %v944 = vsel %vm933, %v893, 0
    %946 = vmatprep.subr.bf16.mxu0 0
    %947 = vmatpush1.bf16.msra.mxu0 0
    %948 = vmatprep.subr.bf16.mxu0 0
    %949 = vmatpush1.bf16.msra.mxu0 0
    %950 = vmatprep.subr.bf16.mxu0 0
    %951 = vmatpush1.bf16.msra.mxu0 0
    %952 = vmatprep.subr.bf16.mxu0 0
    %953 = vmatpush1.bf16.msra.mxu0 0
    %954 = vmatprep.subr.bf16.mxu0 0
    %955 = vmatpush1.bf16.msra.mxu0 %v928
    %956 = vmatprep.subr.bf16.mxu0 0
    %957 = vmatpush1.bf16.msra.mxu0 %v927
    %958 = vmatprep.subr.bf16.mxu0 0
    %959 = vmatpush1.bf16.msra.mxu0 %v926
    %960 = vmatprep.subr.bf16.mxu0 0
    %961 = vmatpush1.bf16.msra.mxu0 %v925
    %962 = vmatprep.subr.bf16.mxu0 0
    %963 = vmatpush2.bf16.msra.mxu0 0
    %964 = vmatprep.subr.bf16.mxu0 0
    %965 = vmatpush2.bf16.msra.mxu0 0
    %966 = vmatprep.subr.bf16.mxu0 0
    %967 = vmatpush2.bf16.msra.mxu0 0
    %968 = vmatprep.subr.bf16.mxu0 0
    %969 = vmatpush2.bf16.msra.mxu0 0
    %970 = vmatprep.subr.bf16.mxu0 0
    %971 = vmatpush2.bf16.msra.mxu0 0
    %972 = vmatprep.subr.bf16.mxu0 0
    %973 = vmatpush2.bf16.msra.mxu0 0
    %974 = vmatprep.subr.bf16.mxu0 0
    %975 = vmatpush2.bf16.msra.mxu0 0
    %976 = vmatprep.subr.bf16.mxu0 0
    %977 = vmatpush2.bf16.msra.mxu0 0
    %978 = vmatprep.mubr.bf16.mxu0 0
    %979 = vmatmul.mubr.bf16.gmra.mxu0 %v935
    %v980 = vpop.f32.mrf.mxu0
    %v981 = vadd.f32 %v907, %v980
    %v982 = vpop.f32.mrf.mxu0
    %v983 = vpop.f32.mrf.mxu0
    %v984 = vadd.f32 %v907, %v983
    %v985 = vpop.f32.mrf.mxu0
    %986 = vmatprep.mubr.bf16.mxu0 0
    %987 = vmatmul.mubr.bf16.gmra.mxu0 %v938
    %v988 = vpop.f32.mrf.mxu0
    %v989 = vadd.f32 %v907, %v988
    %v990 = vpop.f32.mrf.mxu0
    %v991 = vpop.f32.mrf.mxu0
    %v992 = vadd.f32 %v907, %v991
    %v993 = vpop.f32.mrf.mxu0
    %994 = vmatprep.mubr.bf16.mxu0 0
    %995 = vmatmul.mubr.bf16.gmra.mxu0 %v941
    %v996 = vpop.f32.mrf.mxu0
    %v997 = vadd.f32 %v907, %v996
    %v998 = vpop.f32.mrf.mxu0
    %v999 = vpop.f32.mrf.mxu0
    %v1000 = vadd.f32 %v907, %v999
    %v1001 = vpop.f32.mrf.mxu0
    %1002 = vmatprep.mubr.bf16.mxu0 0
    %1003 = vmatmul.mubr.bf16.gmra.mxu0 %v944
    %v1004 = vpop.f32.mrf.mxu0
    %v1005 = vadd.f32 %v907, %v1004
    %v1006 = vpop.f32.mrf.mxu0
    %v1007 = vpop.f32.mrf.mxu0
    %v1008 = vpop.f32.mrf.mxu0
    %1009 = vdwg.mxu0
    %v1010 = vpack.c.bf16 %v984, %v981
    %v1011 = vpack.c.bf16 %v992, %v989
    %v1012 = vpack.c.bf16 %v1000, %v997
    %v1013 = vpack.c.bf16 %v1005, %v1005
    %vm1014 = vcmask 457728
    %v1016 = vsel %vm1014, %v190, 0
    %vm1018 = vcmask 1043456
    %v1020 = vsel %vm1018, %v1013, 0
    %1022 = vmatprep.subr.bf16.mxu0 0
    %1023 = vmatpush1.bf16.msra.mxu0 0
    %1024 = vmatprep.subr.bf16.mxu0 0
    %1025 = vmatpush1.bf16.msra.mxu0 0
    %1026 = vmatprep.subr.bf16.mxu0 0
    %1027 = vmatpush1.bf16.msra.mxu0 0
    %1028 = vmatprep.subr.bf16.mxu0 0
    %1029 = vmatpush1.bf16.msra.mxu0 0
    %1030 = vmatprep.subr.bf16.mxu0 0
    %1031 = vmatpush1.bf16.msra.mxu0 %v1020
    %1032 = vmatprep.subr.bf16.mxu0 0
    %1033 = vmatpush1.bf16.msra.mxu0 %v1012
    %1034 = vmatprep.subr.bf16.mxu0 0
    %1035 = vmatpush1.bf16.msra.mxu0 %v1011
    %1036 = vmatprep.subr.bf16.mxu0 0
    %1037 = vmatpush1.bf16.msra.mxu0 %v1010
    %1038 = vmatprep.subr.bf16.mxu0 0
    %1039 = vmatpush2.bf16.msra.mxu0 0
    %1040 = vmatprep.subr.bf16.mxu0 0
    %1041 = vmatpush2.bf16.msra.mxu0 0
    %1042 = vmatprep.subr.bf16.mxu0 0
    %1043 = vmatpush2.bf16.msra.mxu0 0
    %1044 = vmatprep.subr.bf16.mxu0 0
    %1045 = vmatpush2.bf16.msra.mxu0 0
    %1046 = vmatprep.subr.bf16.mxu0 0
    %1047 = vmatpush2.bf16.msra.mxu0 0
    %1048 = vmatprep.subr.bf16.mxu0 0
    %1049 = vmatpush2.bf16.msra.mxu0 0
    %1050 = vmatprep.subr.bf16.mxu0 0
    %1051 = vmatpush2.bf16.msra.mxu0 0
    %1052 = vmatprep.subr.bf16.mxu0 0
    %1053 = vmatpush2.bf16.msra.mxu0 0
    %1054 = vmatprep.mubr.bf16.mxu0 0
    %1055 = vmatmul.mubr.bf16.gmra.mxu0 %v1016
    %v1056 = vpop.f32.mrf.mxu0
    %v1057 = vadd.f32 0.0, %v1056
    %v1058 = vpop.f32.mrf.mxu0
    %v1059 = vpop.f32.mrf.mxu0
    %v1060 = vpop.f32.mrf.mxu0
    %1061 = vdwg.mxu0
    %v1062 = vld [vmem:[%s19] sm:$0x1]
    %v1063 = vld [vmem:[%s20] sm:$0x1]
    %v1064 = vsel %vm261, %v1057, 0.0
    %1065 = vadd.xlane.f32.xlu0 %v1064
    %v1066 = vpop.xlane.xlu0 %1065
    %v1067 = vmul.f32 %v1057, %v1057
    %v1068 = vsel %vm261, %v1067, 0.0
    %1069 = vadd.xlane.f32.xlu0 %v1068
    %v1070 = vpop.xlane.xlu0 %1069
    %v1071 = vmul.f32 %v1066, 0.03125
    %v1072 = vmul.f32 %v1070, 0.03125
    %v1073 = vmul.f32 %v1071, %v1071
    %v1074 = vsub.f32 %v1072, %v1073
    %v1075 = vsub.f32 %v1057, %v1071
    %v1076 = vadd.f32 %v1074, 1e-05
    %v1077 = vrsqrt.pop %v1076
    %v1078 = vmul.f32 %v1075, %v1077
    %v1080 = vlaneseq
    %v1081 = vshrl.u32 %v1080, 7
    %v1082 = vsub.s32 0, %v1081
    %v1083 = vrot.slane %v1062, %v1082
    %v1085 = vmul.f32 %v1078, %v1083
    %v1087 = vlaneseq
    %v1088 = vshrl.u32 %v1087, 7
    %v1089 = vsub.s32 0, %v1088
    %v1090 = vrot.slane %v1063, %v1089
    %v1092 = vadd.f32 %v1085, %v1090
    %v1093 = vadd.f32 %v290, %v1092
    %v1094 = vld [vmem:[%s21] sm:$0x1]
    %v1095 = vld [vmem:[%s22] sm:$0x1]
    %v1096 = vsel %vm261, %v981, 0.0
    %1097 = vadd.xlane.f32.xlu0 %v1096
    %v1098 = vpop.xlane.xlu0 %1097
    %v1099 = vsel %vm261, %v984, 0.0
    %1100 = vadd.xlane.f32.xlu0 %v1099
    %v1101 = vpop.xlane.xlu0 %1100
    %v1102 = vsel %vm261, %v989, 0.0
    %1103 = vadd.xlane.f32.xlu0 %v1102
    %v1104 = vpop.xlane.xlu0 %1103
    %v1105 = vsel %vm261, %v992, 0.0
    %1106 = vadd.xlane.f32.xlu0 %v1105
    %v1107 = vpop.xlane.xlu0 %1106
    %v1108 = vsel %vm261, %v997, 0.0
    %1109 = vadd.xlane.f32.xlu0 %v1108
    %v1110 = vpop.xlane.xlu0 %1109
    %v1111 = vsel %vm261, %v1000, 0.0
    %1112 = vadd.xlane.f32.xlu0 %v1111
    %v1113 = vpop.xlane.xlu0 %1112
    %v1114 = vsel %vm261, %v1005, 0.0
    %1115 = vadd.xlane.f32.xlu0 %v1114
    %v1116 = vpop.xlane.xlu0 %1115
    %v1117 = vmul.f32 %v981, %v981
    %v1118 = vmul.f32 %v984, %v984
    %v1119 = vmul.f32 %v989, %v989
    %v1120 = vmul.f32 %v992, %v992
    %v1121 = vmul.f32 %v997, %v997
    %v1122 = vmul.f32 %v1000, %v1000
    %v1123 = vmul.f32 %v1005, %v1005
    %v1124 = vsel %vm261, %v1117, 0.0
    %1125 = vadd.xlane.f32.xlu0 %v1124
    %v1126 = vpop.xlane.xlu0 %1125
    %v1127 = vsel %vm261, %v1118, 0.0
    %1128 = vadd.xlane.f32.xlu0 %v1127
    %v1129 = vpop.xlane.xlu0 %1128
    %v1130 = vsel %vm261, %v1119, 0.0
    %1131 = vadd.xlane.f32.xlu0 %v1130
    %v1132 = vpop.xlane.xlu0 %1131
    %v1133 = vsel %vm261, %v1120, 0.0
    %1134 = vadd.xlane.f32.xlu0 %v1133
    %v1135 = vpop.xlane.xlu0 %1134
    %v1136 = vsel %vm261, %v1121, 0.0
    %1137 = vadd.xlane.f32.xlu0 %v1136
    %v1138 = vpop.xlane.xlu0 %1137
    %v1139 = vsel %vm261, %v1122, 0.0
    %1140 = vadd.xlane.f32.xlu0 %v1139
    %v1141 = vpop.xlane.xlu0 %1140
    %v1142 = vsel %vm261, %v1123, 0.0
    %1143 = vadd.xlane.f32.xlu0 %v1142
    %v1144 = vpop.xlane.xlu0 %1143
    %v1145 = vmul.f32 %v1098, 0.03125
    %v1146 = vmul.f32 %v1101, 0.03125
    %v1147 = vmul.f32 %v1104, 0.03125
    %v1148 = vmul.f32 %v1107, 0.03125
    %v1149 = vmul.f32 %v1110, 0.03125
    %v1150 = vmul.f32 %v1113, 0.03125
    %v1151 = vmul.f32 %v1116, 0.03125
    %v1152 = vmul.f32 %v1126, 0.03125
    %v1153 = vmul.f32 %v1129, 0.03125
    %v1154 = vmul.f32 %v1132, 0.03125
    %v1155 = vmul.f32 %v1135, 0.03125
    %v1156 = vmul.f32 %v1138, 0.03125
    %v1157 = vmul.f32 %v1141, 0.03125
    %v1158 = vmul.f32 %v1144, 0.03125
    %v1159 = vmul.f32 %v1145, %v1145
    %v1160 = vmul.f32 %v1146, %v1146
    %v1161 = vmul.f32 %v1147, %v1147
    %v1162 = vmul.f32 %v1148, %v1148
    %v1163 = vmul.f32 %v1149, %v1149
    %v1164 = vmul.f32 %v1150, %v1150
    %v1165 = vmul.f32 %v1151, %v1151
    %v1166 = vsub.f32 %v1152, %v1159
    %v1167 = vsub.f32 %v1153, %v1160
    %v1168 = vsub.f32 %v1154, %v1161
    %v1169 = vsub.f32 %v1155, %v1162
    %v1170 = vsub.f32 %v1156, %v1163
    %v1171 = vsub.f32 %v1157, %v1164
    %v1172 = vsub.f32 %v1158, %v1165
    %v1173 = vsub.f32 %v981, %v1145
    %v1174 = vsub.f32 %v984, %v1146
    %v1175 = vsub.f32 %v989, %v1147
    %v1176 = vsub.f32 %v992, %v1148
    %v1177 = vsub.f32 %v997, %v1149
    %v1178 = vsub.f32 %v1000, %v1150
    %v1179 = vsub.f32 %v1005, %v1151
    %v1180 = vadd.f32 %v1166, 1e-05
    %v1181 = vadd.f32 %v1167, 1e-05
    %v1182 = vadd.f32 %v1168, 1e-05
    %v1183 = vadd.f32 %v1169, 1e-05
    %v1184 = vadd.f32 %v1170, 1e-05
    %v1185 = vadd.f32 %v1171, 1e-05
    %v1186 = vadd.f32 %v1172, 1e-05
    %v1187 = vrsqrt.pop %v1180
    %v1188 = vrsqrt.pop %v1181
    %v1189 = vrsqrt.pop %v1182
    %v1190 = vrsqrt.pop %v1183
    %v1191 = vrsqrt.pop %v1184
    %v1192 = vrsqrt.pop %v1185
    %v1193 = vrsqrt.pop %v1186
    %v1194 = vmul.f32 %v1173, %v1187
    %v1195 = vmul.f32 %v1174, %v1188
    %v1196 = vmul.f32 %v1175, %v1189
    %v1197 = vmul.f32 %v1176, %v1190
    %v1198 = vmul.f32 %v1177, %v1191
    %v1199 = vmul.f32 %v1178, %v1192
    %v1200 = vmul.f32 %v1179, %v1193
    %v1202 = vlaneseq
    %v1203 = vshrl.u32 %v1202, 7
    %v1204 = vsub.s32 0, %v1203
    %v1205 = vrot.slane %v1094, %v1204
    %v1207 = vmul.f32 %v1194, %v1205
    %v1208 = vmul.f32 %v1195, %v1205
    %v1209 = vmul.f32 %v1196, %v1205
    %v1210 = vmul.f32 %v1197, %v1205
    %v1211 = vmul.f32 %v1198, %v1205
    %v1212 = vmul.f32 %v1199, %v1205
    %v1213 = vmul.f32 %v1200, %v1205
    %v1215 = vlaneseq
    %v1216 = vshrl.u32 %v1215, 7
    %v1217 = vsub.s32 0, %v1216
    %v1218 = vrot.slane %v1095, %v1217
    %v1220 = vadd.f32 %v1207, %v1218
    %v1221 = vadd.f32 %v1208, %v1218
    %v1222 = vadd.f32 %v1209, %v1218
    %v1223 = vadd.f32 %v1210, %v1218
    %v1224 = vadd.f32 %v1211, %v1218
    %v1225 = vadd.f32 %v1212, %v1218
    %v1226 = vadd.f32 %v1213, %v1218
    %v1227 = vadd.f32 %v626, %v1220
    %v1228 = vadd.f32 %v627, %v1221
    %v1229 = vadd.f32 %v628, %v1222
    %v1230 = vadd.f32 %v629, %v1223
    %v1231 = vadd.f32 %v630, %v1224
    %v1232 = vadd.f32 %v631, %v1225
    %v1233 = vadd.f32 %v632, %v1226
    %v1234 = vmax.f32 %v1093, 0.0
    %v1235 = vmax.f32 %v1227, 0.0
    %v1236 = vmax.f32 %v1228, 0.0
    %v1237 = vmax.f32 %v1229, 0.0
    %v1238 = vmax.f32 %v1230, 0.0
    %v1239 = vmax.f32 %v1231, 0.0
    %v1240 = vmax.f32 %v1232, 0.0
    %v1241 = vmax.f32 %v1233, 0.0
    %v1242 = vpack.c.bf16 %v1234, %v1234
    %s1243 = scalar_lea.vmem %s14, 16
    %v1244 = vld [vmem:[%s1243] sm:$0xf]
    %v1245 = vld [vmem:[%s1243 + $0x4] sm:$0xf]
    %v1246 = vld [vmem:[%s1243 + $0x8] sm:$0xf]
    %v1247 = vld [vmem:[%s1243 + $0xc] sm:$0xf]
    %v1252 = vunpack.c.l.b16 %v1244
    %v1253 = vunpack.c.l.b16 %v1245
    %v1254 = vunpack.c.l.b16 %v1246
    %v1255 = vunpack.c.l.b16 %v1247
    %v1256 = vpack.c.b16 %v1253, %v1252
    %v1257 = vpack.c.b16 %v1255, %v1254
    %v1261 = vsel %vm261, %v1242, 0
    %1263 = vmatprep.subr.bf16.mxu0 0
    %1264 = vmatpush1.bf16.msra.mxu0 0
    %1265 = vmatprep.subr.bf16.mxu0 0
    %1266 = vmatpush1.bf16.msra.mxu0 0
    %1267 = vmatprep.subr.bf16.mxu0 0
    %1268 = vmatpush1.bf16.msra.mxu0 0
    %1269 = vmatprep.subr.bf16.mxu0 0
    %1270 = vmatpush1.bf16.msra.mxu0 0
    %1271 = vmatprep.subr.bf16.mxu0 0
    %1272 = vmatpush1.bf16.msra.mxu0 0
    %1273 = vmatprep.subr.bf16.mxu0 0
    %1274 = vmatpush1.bf16.msra.mxu0 0
    %1275 = vmatprep.subr.bf16.mxu0 0
    %1276 = vmatpush1.bf16.msra.mxu0 %v1257
    %1277 = vmatprep.subr.bf16.mxu0 0
    %1278 = vmatpush1.bf16.msra.mxu0 %v1256
    %1279 = vmatprep.subr.bf16.mxu0 0
    %1280 = vmatpush2.bf16.msra.mxu0 0
    %1281 = vmatprep.subr.bf16.mxu0 0
    %1282 = vmatpush2.bf16.msra.mxu0 0
    %1283 = vmatprep.subr.bf16.mxu0 0
    %1284 = vmatpush2.bf16.msra.mxu0 0
    %1285 = vmatprep.subr.bf16.mxu0 0
    %1286 = vmatpush2.bf16.msra.mxu0 0
    %1287 = vmatprep.subr.bf16.mxu0 0
    %1288 = vmatpush2.bf16.msra.mxu0 0
    %1289 = vmatprep.subr.bf16.mxu0 0
    %1290 = vmatpush2.bf16.msra.mxu0 0
    %1291 = vmatprep.subr.bf16.mxu0 0
    %1292 = vmatpush2.bf16.msra.mxu0 0
    %1293 = vmatprep.subr.bf16.mxu0 0
    %1294 = vmatpush2.bf16.msra.mxu0 0
    %1295 = vmatprep.mubr.bf16.mxu0 0
    %1296 = vmatmul.mubr.bf16.gmra.mxu0 %v1261
    %v1297 = vpop.f32.mrf.mxu0
    %v1298 = vadd.f32 0.0, %v1297
    %v1299 = vpop.f32.mrf.mxu0
    %v1300 = vpop.f32.mrf.mxu0
    %v1301 = vpop.f32.mrf.mxu0
    %1302 = vdwg.mxu0
    %1303 = vrot.lane.b32.xlu0 %v1298, 64
    %v1304 = vpop.permute.xlu0 %1303
    %v1305 = vpack.c.bf16 %v1304, %v1298
    %v1306 = vpack.c.bf16 %v1236, %v1235
    %v1307 = vpack.c.bf16 %v1238, %v1237
    %v1308 = vpack.c.bf16 %v1240, %v1239
    %v1309 = vpack.c.bf16 %v1241, %v1241
    %s1310 = scalar_lea.vmem %s15, 16
    %v1311 = vld [vmem:[%s1310] sm:$0xf]
    %v1312 = vld [vmem:[%s1310 + $0x4] sm:$0xf]
    %v1313 = vld [vmem:[%s1310 + $0x8] sm:$0xf]
    %v1314 = vld [vmem:[%s1310 + $0xc] sm:$0xf]
    %v1319 = vunpack.c.l.b16 %v1311
    %v1320 = vunpack.c.l.b16 %v1312
    %v1321 = vunpack.c.l.b16 %v1313
    %v1322 = vunpack.c.l.b16 %v1314
    %v1323 = vpack.c.b16 %v1320, %v1319
    %v1324 = vpack.c.b16 %v1322, %v1321
    %v1328 = vsel %vm261, %v1306, 0
    %v1331 = vsel %vm261, %v1307, 0
    %v1334 = vsel %vm261, %v1308, 0
    %v1337 = vsel %vm261, %v1309, 0
    %1339 = vmatprep.subr.bf16.mxu0 0
    %1340 = vmatpush1.bf16.msra.mxu0 0
    %1341 = vmatprep.subr.bf16.mxu0 0
    %1342 = vmatpush1.bf16.msra.mxu0 0
    %1343 = vmatprep.subr.bf16.mxu0 0
    %1344 = vmatpush1.bf16.msra.mxu0 0
    %1345 = vmatprep.subr.bf16.mxu0 0
    %1346 = vmatpush1.bf16.msra.mxu0 0
    %1347 = vmatprep.subr.bf16.mxu0 0
    %1348 = vmatpush1.bf16.msra.mxu0 0
    %1349 = vmatprep.subr.bf16.mxu0 0
    %1350 = vmatpush1.bf16.msra.mxu0 0
    %1351 = vmatprep.subr.bf16.mxu0 0
    %1352 = vmatpush1.bf16.msra.mxu0 %v1324
    %1353 = vmatprep.subr.bf16.mxu0 0
    %1354 = vmatpush1.bf16.msra.mxu0 %v1323
    %1355 = vmatprep.subr.bf16.mxu0 0
    %1356 = vmatpush2.bf16.msra.mxu0 0
    %1357 = vmatprep.subr.bf16.mxu0 0
    %1358 = vmatpush2.bf16.msra.mxu0 0
    %1359 = vmatprep.subr.bf16.mxu0 0
    %1360 = vmatpush2.bf16.msra.mxu0 0
    %1361 = vmatprep.subr.bf16.mxu0 0
    %1362 = vmatpush2.bf16.msra.mxu0 0
    %1363 = vmatprep.subr.bf16.mxu0 0
    %1364 = vmatpush2.bf16.msra.mxu0 0
    %1365 = vmatprep.subr.bf16.mxu0 0
    %1366 = vmatpush2.bf16.msra.mxu0 0
    %1367 = vmatprep.subr.bf16.mxu0 0
    %1368 = vmatpush2.bf16.msra.mxu0 0
    %1369 = vmatprep.subr.bf16.mxu0 0
    %1370 = vmatpush2.bf16.msra.mxu0 0
    %1371 = vmatprep.mubr.bf16.mxu0 0
    %1372 = vmatmul.mubr.bf16.gmra.mxu0 %v1328
    %v1373 = vpop.f32.mrf.mxu0
    %v1374 = vadd.f32 0.0, %v1373
    %v1375 = vpop.f32.mrf.mxu0
    %v1376 = vpop.f32.mrf.mxu0
    %v1377 = vadd.f32 0.0, %v1376
    %v1378 = vpop.f32.mrf.mxu0
    %1379 = vmatprep.mubr.bf16.mxu0 0
    %1380 = vmatmul.mubr.bf16.gmra.mxu0 %v1331
    %v1381 = vpop.f32.mrf.mxu0
    %v1382 = vadd.f32 0.0, %v1381
    %v1383 = vpop.f32.mrf.mxu0
    %v1384 = vpop.f32.mrf.mxu0
    %v1385 = vadd.f32 0.0, %v1384
    %v1386 = vpop.f32.mrf.mxu0
    %1387 = vmatprep.mubr.bf16.mxu0 0
    %1388 = vmatmul.mubr.bf16.gmra.mxu0 %v1334
    %v1389 = vpop.f32.mrf.mxu0
    %v1390 = vadd.f32 0.0, %v1389
    %v1391 = vpop.f32.mrf.mxu0
    %v1392 = vpop.f32.mrf.mxu0
    %v1393 = vadd.f32 0.0, %v1392
    %v1394 = vpop.f32.mrf.mxu0
    %1395 = vmatprep.mubr.bf16.mxu0 0
    %1396 = vmatmul.mubr.bf16.gmra.mxu0 %v1337
    %v1397 = vpop.f32.mrf.mxu0
    %v1398 = vadd.f32 0.0, %v1397
    %v1399 = vpop.f32.mrf.mxu0
    %v1400 = vpop.f32.mrf.mxu0
    %v1401 = vpop.f32.mrf.mxu0
    %1402 = vdwg.mxu0
    %1403 = vmatprep.subr.bf16.mxu0 0
    %1404 = vmatpush1.bf16.msra.mxu0 0
    %1405 = vmatprep.subr.bf16.mxu0 0
    %1406 = vmatpush1.bf16.msra.mxu0 0
    %1407 = vmatprep.subr.bf16.mxu0 0
    %1408 = vmatpush1.bf16.msra.mxu0 0
    %1409 = vmatprep.subr.bf16.mxu0 0
    %1410 = vmatpush1.bf16.msra.mxu0 0
    %1411 = vmatprep.subr.bf16.mxu0 0
    %1412 = vmatpush1.bf16.msra.mxu0 0
    %1413 = vmatprep.subr.bf16.mxu0 0
    %1414 = vmatpush1.bf16.msra.mxu0 0
    %1415 = vmatprep.subr.bf16.mxu0 0
    %1416 = vmatpush1.bf16.msra.mxu0 0
    %1417 = vmatprep.subr.bf16.mxu0 0
    %1418 = vmatpush1.bf16.msra.mxu0 %v1305
    %1419 = vmatprep.subr.bf16.mxu0 0
    %1420 = vmatpush2.bf16.msra.mxu0 0
    %1421 = vmatprep.subr.bf16.mxu0 0
    %1422 = vmatpush2.bf16.msra.mxu0 0
    %1423 = vmatprep.subr.bf16.mxu0 0
    %1424 = vmatpush2.bf16.msra.mxu0 0
    %1425 = vmatprep.subr.bf16.mxu0 0
    %1426 = vmatpush2.bf16.msra.mxu0 0
    %1427 = vmatprep.subr.bf16.mxu0 0
    %1428 = vmatpush2.bf16.msra.mxu0 0
    %1429 = vmatprep.subr.bf16.mxu0 0
    %1430 = vmatpush2.bf16.msra.mxu0 0
    %1431 = vmatprep.subr.bf16.mxu0 0
    %1432 = vmatpush2.bf16.msra.mxu0 0
    %1433 = vmatprep.subr.bf16.mxu0 0
    %1434 = vmatpush2.bf16.msra.mxu0 0
    %1435 = vmatprep.mubr.bf16.mxu0 0
    %1436 = vmatmul.mubr.bf16.gmra.mxu0 %v794
    %v1437 = vpop.f32.mrf.mxu0
    %v1438 = vadd.f32 %v1374, %v1437
    %v1439 = vpop.f32.mrf.mxu0
    %v1440 = vpop.f32.mrf.mxu0
    %v1441 = vadd.f32 %v1377, %v1440
    %v1442 = vpop.f32.mrf.mxu0
    %1443 = vmatprep.mubr.bf16.mxu0 0
    %1444 = vmatmul.mubr.bf16.gmra.mxu0 %v797
    %v1445 = vpop.f32.mrf.mxu0
    %v1446 = vadd.f32 %v1382, %v1445
    %v1447 = vpop.f32.mrf.mxu0
    %v1448 = vpop.f32.mrf.mxu0
    %v1449 = vadd.f32 %v1385, %v1448
    %v1450 = vpop.f32.mrf.mxu0
    %1451 = vmatprep.mubr.bf16.mxu0 0
    %1452 = vmatmul.mubr.bf16.gmra.mxu0 %v800
    %v1453 = vpop.f32.mrf.mxu0
    %v1454 = vadd.f32 %v1390, %v1453
    %v1455 = vpop.f32.mrf.mxu0
    %v1456 = vpop.f32.mrf.mxu0
    %v1457 = vadd.f32 %v1393, %v1456
    %v1458 = vpop.f32.mrf.mxu0
    %1459 = vmatprep.mubr.bf16.mxu0 0
    %1460 = vmatmul.mubr.bf16.gmra.mxu0 %v803
    %v1461 = vpop.f32.mrf.mxu0
    %v1462 = vadd.f32 %v1398, %v1461
    %v1463 = vpop.f32.mrf.mxu0
    %v1464 = vpop.f32.mrf.mxu0
    %v1465 = vpop.f32.mrf.mxu0
    %1466 = vdwg.mxu0
    %s1467 = scalar_lea.vmem %s16, 1
    %v1468 = vld [vmem:[%s1467] sm:$0x1]
    %v1470 = vlaneseq
    %v1471 = vshrl.u32 %v1470, 7
    %v1472 = vsub.s32 0, %v1471
    %v1473 = vrot.slane %v1468, %v1472
    %v1475 = vadd.f32 %v1438, %v1473
    %v1476 = vadd.f32 %v1441, %v1473
    %v1477 = vadd.f32 %v1446, %v1473
    %v1478 = vadd.f32 %v1449, %v1473
    %v1479 = vadd.f32 %v1454, %v1473
    %v1480 = vadd.f32 %v1457, %v1473
    %v1481 = vadd.f32 %v1462, %v1473
    %v1482 = vmax.f32 %v1475, 0.0
    %v1483 = vmax.f32 %v1476, 0.0
    %v1484 = vmax.f32 %v1477, 0.0
    %v1485 = vmax.f32 %v1478, 0.0
    %v1486 = vmax.f32 %v1479, 0.0
    %v1487 = vmax.f32 %v1480, 0.0
    %v1488 = vmax.f32 %v1481, 0.0
    %v1489 = vpack.c.bf16 %v1483, %v1482
    %v1490 = vpack.c.bf16 %v1485, %v1484
    %v1491 = vpack.c.bf16 %v1487, %v1486
    %v1492 = vpack.c.bf16 %v1488, %v1488
    %s1493 = scalar_lea.vmem %s17, 32
    %v1494 = vld [vmem:[%s1493] sm:$0xf]
    %v1495 = vld [vmem:[%s1493 + $0x4] sm:$0xf]
    %v1496 = vld [vmem:[%s1493 + $0x8] sm:$0xf]
    %v1497 = vld [vmem:[%s1493 + $0xc] sm:$0xf]
    %v1498 = vld [vmem:[%s1493 + $0x10] sm:$0xf]
    %v1499 = vld [vmem:[%s1493 + $0x14] sm:$0xf]
    %v1500 = vld [vmem:[%s1493 + $0x18] sm:$0xf]
    %v1501 = vld [vmem:[%s1493 + $0x1c] sm:$0xf]
    %s1502 = scalar_lea.vmem %s18, 1
    %v1503 = vld [vmem:[%s1502] sm:$0x1]
    %v1505 = vlaneseq
    %v1506 = vshrl.u32 %v1505, 7
    %v1507 = vsub.s32 0, %v1506
    %v1508 = vrot.slane %v1503, %v1507
    %v1518 = vunpack.c.l.b16 %v1494
    %v1519 = vunpack.c.l.b16 %v1495
    %v1520 = vunpack.c.l.b16 %v1496
    %v1521 = vunpack.c.l.b16 %v1497
    %v1522 = vunpack.c.l.b16 %v1498
    %v1523 = vunpack.c.l.b16 %v1499
    %v1524 = vunpack.c.l.b16 %v1500
    %v1525 = vunpack.c.l.b16 %v1501
    %v1526 = vpack.c.b16 %v1519, %v1518
    %v1527 = vpack.c.b16 %v1521, %v1520
    %v1528 = vpack.c.b16 %v1523, %v1522
    %v1529 = vpack.c.b16 %v1525, %v1524
    %v1535 = vsel %vm933, %v1489, 0
    %v1538 = vsel %vm933, %v1490, 0
    %v1541 = vsel %vm933, %v1491, 0
    %v1544 = vsel %vm933, %v1492, 0
    %1546 = vmatprep.subr.bf16.mxu0 0
    %1547 = vmatpush1.bf16.msra.mxu0 0
    %1548 = vmatprep.subr.bf16.mxu0 0
    %1549 = vmatpush1.bf16.msra.mxu0 0
    %1550 = vmatprep.subr.bf16.mxu0 0
    %1551 = vmatpush1.bf16.msra.mxu0 0
    %1552 = vmatprep.subr.bf16.mxu0 0
    %1553 = vmatpush1.bf16.msra.mxu0 0
    %1554 = vmatprep.subr.bf16.mxu0 0
    %1555 = vmatpush1.bf16.msra.mxu0 %v1529
    %1556 = vmatprep.subr.bf16.mxu0 0
    %1557 = vmatpush1.bf16.msra.mxu0 %v1528
    %1558 = vmatprep.subr.bf16.mxu0 0
    %1559 = vmatpush1.bf16.msra.mxu0 %v1527
    %1560 = vmatprep.subr.bf16.mxu0 0
    %1561 = vmatpush1.bf16.msra.mxu0 %v1526
    %1562 = vmatprep.subr.bf16.mxu0 0
    %1563 = vmatpush2.bf16.msra.mxu0 0
    %1564 = vmatprep.subr.bf16.mxu0 0
    %1565 = vmatpush2.bf16.msra.mxu0 0
    %1566 = vmatprep.subr.bf16.mxu0 0
    %1567 = vmatpush2.bf16.msra.mxu0 0
    %1568 = vmatprep.subr.bf16.mxu0 0
    %1569 = vmatpush2.bf16.msra.mxu0 0
    %1570 = vmatprep.subr.bf16.mxu0 0
    %1571 = vmatpush2.bf16.msra.mxu0 0
    %1572 = vmatprep.subr.bf16.mxu0 0
    %1573 = vmatpush2.bf16.msra.mxu0 0
    %1574 = vmatprep.subr.bf16.mxu0 0
    %1575 = vmatpush2.bf16.msra.mxu0 0
    %1576 = vmatprep.subr.bf16.mxu0 0
    %1577 = vmatpush2.bf16.msra.mxu0 0
    %1578 = vmatprep.mubr.bf16.mxu0 0
    %1579 = vmatmul.mubr.bf16.gmra.mxu0 %v1535
    %v1580 = vpop.f32.mrf.mxu0
    %v1581 = vadd.f32 %v1508, %v1580
    %v1582 = vpop.f32.mrf.mxu0
    %v1583 = vpop.f32.mrf.mxu0
    %v1584 = vadd.f32 %v1508, %v1583
    %v1585 = vpop.f32.mrf.mxu0
    %1586 = vmatprep.mubr.bf16.mxu0 0
    %1587 = vmatmul.mubr.bf16.gmra.mxu0 %v1538
    %v1588 = vpop.f32.mrf.mxu0
    %v1589 = vadd.f32 %v1508, %v1588
    %v1590 = vpop.f32.mrf.mxu0
    %v1591 = vpop.f32.mrf.mxu0
    %v1592 = vadd.f32 %v1508, %v1591
    %v1593 = vpop.f32.mrf.mxu0
    %1594 = vmatprep.mubr.bf16.mxu0 0
    %1595 = vmatmul.mubr.bf16.gmra.mxu0 %v1541
    %v1596 = vpop.f32.mrf.mxu0
    %v1597 = vadd.f32 %v1508, %v1596
    %v1598 = vpop.f32.mrf.mxu0
    %v1599 = vpop.f32.mrf.mxu0
    %v1600 = vadd.f32 %v1508, %v1599
    %v1601 = vpop.f32.mrf.mxu0
    %1602 = vmatprep.mubr.bf16.mxu0 0
    %1603 = vmatmul.mubr.bf16.gmra.mxu0 %v1544
    %v1604 = vpop.f32.mrf.mxu0
    %v1605 = vadd.f32 %v1508, %v1604
    %v1606 = vpop.f32.mrf.mxu0
    %v1607 = vpop.f32.mrf.mxu0
    %v1608 = vpop.f32.mrf.mxu0
    %1609 = vdwg.mxu0
    %v1610 = vpack.c.bf16 %v1584, %v1581
    %v1611 = vpack.c.bf16 %v1592, %v1589
    %v1612 = vpack.c.bf16 %v1600, %v1597
    %v1613 = vpack.c.bf16 %v1605, %v1605
    %v1615 = vsel %vm1018, %v1613, 0
    %1617 = vmatprep.subr.bf16.mxu0 0
    %1618 = vmatpush1.bf16.msra.mxu0 0
    %1619 = vmatprep.subr.bf16.mxu0 0
    %1620 = vmatpush1.bf16.msra.mxu0 0
    %1621 = vmatprep.subr.bf16.mxu0 0
    %1622 = vmatpush1.bf16.msra.mxu0 0
    %1623 = vmatprep.subr.bf16.mxu0 0
    %1624 = vmatpush1.bf16.msra.mxu0 0
    %1625 = vmatprep.subr.bf16.mxu0 0
    %1626 = vmatpush1.bf16.msra.mxu0 %v1615
    %1627 = vmatprep.subr.bf16.mxu0 0
    %1628 = vmatpush1.bf16.msra.mxu0 %v1612
    %1629 = vmatprep.subr.bf16.mxu0 0
    %1630 = vmatpush1.bf16.msra.mxu0 %v1611
    %1631 = vmatprep.subr.bf16.mxu0 0
    %1632 = vmatpush1.bf16.msra.mxu0 %v1610
    %1633 = vmatprep.subr.bf16.mxu0 0
    %1634 = vmatpush2.bf16.msra.mxu0 0
    %1635 = vmatprep.subr.bf16.mxu0 0
    %1636 = vmatpush2.bf16.msra.mxu0 0
    %1637 = vmatprep.subr.bf16.mxu0 0
    %1638 = vmatpush2.bf16.msra.mxu0 0
    %1639 = vmatprep.subr.bf16.mxu0 0
    %1640 = vmatpush2.bf16.msra.mxu0 0
    %1641 = vmatprep.subr.bf16.mxu0 0
    %1642 = vmatpush2.bf16.msra.mxu0 0
    %1643 = vmatprep.subr.bf16.mxu0 0
    %1644 = vmatpush2.bf16.msra.mxu0 0
    %1645 = vmatprep.subr.bf16.mxu0 0
    %1646 = vmatpush2.bf16.msra.mxu0 0
    %1647 = vmatprep.subr.bf16.mxu0 0
    %1648 = vmatpush2.bf16.msra.mxu0 0
    %1649 = vmatprep.mubr.bf16.mxu0 0
    %1650 = vmatmul.mubr.bf16.gmra.mxu0 %v1016
    %v1651 = vpop.f32.mrf.mxu0
    %v1652 = vadd.f32 0.0, %v1651
    %v1653 = vpop.f32.mrf.mxu0
    %v1654 = vpop.f32.mrf.mxu0
    %v1655 = vpop.f32.mrf.mxu0
    %1656 = vdwg.mxu0
    %s1657 = scalar_lea.vmem %s19, 1
    %v1658 = vld [vmem:[%s1657] sm:$0x1]
    %s1659 = scalar_lea.vmem %s20, 1
    %v1660 = vld [vmem:[%s1659] sm:$0x1]
    %v1661 = vsel %vm261, %v1652, 0.0
    %1662 = vadd.xlane.f32.xlu0 %v1661
    %v1663 = vpop.xlane.xlu0 %1662
    %v1664 = vmul.f32 %v1652, %v1652
    %v1665 = vsel %vm261, %v1664, 0.0
    %1666 = vadd.xlane.f32.xlu0 %v1665
    %v1667 = vpop.xlane.xlu0 %1666
    %v1668 = vmul.f32 %v1663, 0.03125
    %v1669 = vmul.f32 %v1667, 0.03125
    %v1670 = vmul.f32 %v1668, %v1668
    %v1671 = vsub.f32 %v1669, %v1670
    %v1672 = vsub.f32 %v1652, %v1668
    %v1673 = vadd.f32 %v1671, 1e-05
    %v1674 = vrsqrt.pop %v1673
    %v1675 = vmul.f32 %v1672, %v1674
    %v1677 = vlaneseq
    %v1678 = vshrl.u32 %v1677, 7
    %v1679 = vsub.s32 0, %v1678
    %v1680 = vrot.slane %v1658, %v1679
    %v1682 = vmul.f32 %v1675, %v1680
    %v1684 = vlaneseq
    %v1685 = vshrl.u32 %v1684, 7
    %v1686 = vsub.s32 0, %v1685
    %v1687 = vrot.slane %v1660, %v1686
    %v1689 = vadd.f32 %v1682, %v1687
    %v1690 = vadd.f32 %v1234, %v1689
    %s1691 = scalar_lea.vmem %s21, 1
    %v1692 = vld [vmem:[%s1691] sm:$0x1]
    %s1693 = scalar_lea.vmem %s22, 1
    %v1694 = vld [vmem:[%s1693] sm:$0x1]
    %v1695 = vsel %vm261, %v1581, 0.0
    %1696 = vadd.xlane.f32.xlu0 %v1695
    %v1697 = vpop.xlane.xlu0 %1696
    %v1698 = vsel %vm261, %v1584, 0.0
    %1699 = vadd.xlane.f32.xlu0 %v1698
    %v1700 = vpop.xlane.xlu0 %1699
    %v1701 = vsel %vm261, %v1589, 0.0
    %1702 = vadd.xlane.f32.xlu0 %v1701
    %v1703 = vpop.xlane.xlu0 %1702
    %v1704 = vsel %vm261, %v1592, 0.0
    %1705 = vadd.xlane.f32.xlu0 %v1704
    %v1706 = vpop.xlane.xlu0 %1705
    %v1707 = vsel %vm261, %v1597, 0.0
    %1708 = vadd.xlane.f32.xlu0 %v1707
    %v1709 = vpop.xlane.xlu0 %1708
    %v1710 = vsel %vm261, %v1600, 0.0
    %1711 = vadd.xlane.f32.xlu0 %v1710
    %v1712 = vpop.xlane.xlu0 %1711
    %v1713 = vsel %vm261, %v1605, 0.0
    %1714 = vadd.xlane.f32.xlu0 %v1713
    %v1715 = vpop.xlane.xlu0 %1714
    %v1716 = vmul.f32 %v1581, %v1581
    %v1717 = vmul.f32 %v1584, %v1584
    %v1718 = vmul.f32 %v1589, %v1589
    %v1719 = vmul.f32 %v1592, %v1592
    %v1720 = vmul.f32 %v1597, %v1597
    %v1721 = vmul.f32 %v1600, %v1600
    %v1722 = vmul.f32 %v1605, %v1605
    %v1723 = vsel %vm261, %v1716, 0.0
    %1724 = vadd.xlane.f32.xlu0 %v1723
    %v1725 = vpop.xlane.xlu0 %1724
    %v1726 = vsel %vm261, %v1717, 0.0
    %1727 = vadd.xlane.f32.xlu0 %v1726
    %v1728 = vpop.xlane.xlu0 %1727
    %v1729 = vsel %vm261, %v1718, 0.0
    %1730 = vadd.xlane.f32.xlu0 %v1729
    %v1731 = vpop.xlane.xlu0 %1730
    %v1732 = vsel %vm261, %v1719, 0.0
    %1733 = vadd.xlane.f32.xlu0 %v1732
    %v1734 = vpop.xlane.xlu0 %1733
    %v1735 = vsel %vm261, %v1720, 0.0
    %1736 = vadd.xlane.f32.xlu0 %v1735
    %v1737 = vpop.xlane.xlu0 %1736
    %v1738 = vsel %vm261, %v1721, 0.0
    %1739 = vadd.xlane.f32.xlu0 %v1738
    %v1740 = vpop.xlane.xlu0 %1739
    %v1741 = vsel %vm261, %v1722, 0.0
    %1742 = vadd.xlane.f32.xlu0 %v1741
    %v1743 = vpop.xlane.xlu0 %1742
    %v1744 = vmul.f32 %v1697, 0.03125
    %v1745 = vmul.f32 %v1700, 0.03125
    %v1746 = vmul.f32 %v1703, 0.03125
    %v1747 = vmul.f32 %v1706, 0.03125
    %v1748 = vmul.f32 %v1709, 0.03125
    %v1749 = vmul.f32 %v1712, 0.03125
    %v1750 = vmul.f32 %v1715, 0.03125
    %v1751 = vmul.f32 %v1725, 0.03125
    %v1752 = vmul.f32 %v1728, 0.03125
    %v1753 = vmul.f32 %v1731, 0.03125
    %v1754 = vmul.f32 %v1734, 0.03125
    %v1755 = vmul.f32 %v1737, 0.03125
    %v1756 = vmul.f32 %v1740, 0.03125
    %v1757 = vmul.f32 %v1743, 0.03125
    %v1758 = vmul.f32 %v1744, %v1744
    %v1759 = vmul.f32 %v1745, %v1745
    %v1760 = vmul.f32 %v1746, %v1746
    %v1761 = vmul.f32 %v1747, %v1747
    %v1762 = vmul.f32 %v1748, %v1748
    %v1763 = vmul.f32 %v1749, %v1749
    %v1764 = vmul.f32 %v1750, %v1750
    %v1765 = vsub.f32 %v1751, %v1758
    %v1766 = vsub.f32 %v1752, %v1759
    %v1767 = vsub.f32 %v1753, %v1760
    %v1768 = vsub.f32 %v1754, %v1761
    %v1769 = vsub.f32 %v1755, %v1762
    %v1770 = vsub.f32 %v1756, %v1763
    %v1771 = vsub.f32 %v1757, %v1764
    %v1772 = vsub.f32 %v1581, %v1744
    %v1773 = vsub.f32 %v1584, %v1745
    %v1774 = vsub.f32 %v1589, %v1746
    %v1775 = vsub.f32 %v1592, %v1747
    %v1776 = vsub.f32 %v1597, %v1748
    %v1777 = vsub.f32 %v1600, %v1749
    %v1778 = vsub.f32 %v1605, %v1750
    %v1779 = vadd.f32 %v1765, 1e-05
    %v1780 = vadd.f32 %v1766, 1e-05
    %v1781 = vadd.f32 %v1767, 1e-05
    %v1782 = vadd.f32 %v1768, 1e-05
    %v1783 = vadd.f32 %v1769, 1e-05
    %v1784 = vadd.f32 %v1770, 1e-05
    %v1785 = vadd.f32 %v1771, 1e-05
    %v1786 = vrsqrt.pop %v1779
    %v1787 = vrsqrt.pop %v1780
    %v1788 = vrsqrt.pop %v1781
    %v1789 = vrsqrt.pop %v1782
    %v1790 = vrsqrt.pop %v1783
    %v1791 = vrsqrt.pop %v1784
    %v1792 = vrsqrt.pop %v1785
    %v1793 = vmul.f32 %v1772, %v1786
    %v1794 = vmul.f32 %v1773, %v1787
    %v1795 = vmul.f32 %v1774, %v1788
    %v1796 = vmul.f32 %v1775, %v1789
    %v1797 = vmul.f32 %v1776, %v1790
    %v1798 = vmul.f32 %v1777, %v1791
    %v1799 = vmul.f32 %v1778, %v1792
    %v1801 = vlaneseq
    %v1802 = vshrl.u32 %v1801, 7
    %v1803 = vsub.s32 0, %v1802
    %v1804 = vrot.slane %v1692, %v1803
    %v1806 = vmul.f32 %v1793, %v1804
    %v1807 = vmul.f32 %v1794, %v1804
    %v1808 = vmul.f32 %v1795, %v1804
    %v1809 = vmul.f32 %v1796, %v1804
    %v1810 = vmul.f32 %v1797, %v1804
    %v1811 = vmul.f32 %v1798, %v1804
    %v1812 = vmul.f32 %v1799, %v1804
    %v1814 = vlaneseq
    %v1815 = vshrl.u32 %v1814, 7
    %v1816 = vsub.s32 0, %v1815
    %v1817 = vrot.slane %v1694, %v1816
    %v1819 = vadd.f32 %v1806, %v1817
    %v1820 = vadd.f32 %v1807, %v1817
    %v1821 = vadd.f32 %v1808, %v1817
    %v1822 = vadd.f32 %v1809, %v1817
    %v1823 = vadd.f32 %v1810, %v1817
    %v1824 = vadd.f32 %v1811, %v1817
    %v1825 = vadd.f32 %v1812, %v1817
    %v1826 = vadd.f32 %v1235, %v1819
    %v1827 = vadd.f32 %v1236, %v1820
    %v1828 = vadd.f32 %v1237, %v1821
    %v1829 = vadd.f32 %v1238, %v1822
    %v1830 = vadd.f32 %v1239, %v1823
    %v1831 = vadd.f32 %v1240, %v1824
    %v1832 = vadd.f32 %v1241, %v1825
    %v1833 = vmax.f32 %v1690, 0.0
    %v1834 = vmax.f32 %v1826, 0.0
    %v1835 = vmax.f32 %v1827, 0.0
    %v1836 = vmax.f32 %v1828, 0.0
    %v1837 = vmax.f32 %v1829, 0.0
    %v1838 = vmax.f32 %v1830, 0.0
    %v1839 = vmax.f32 %v1831, 0.0
    %v1840 = vmax.f32 %v1832, 0.0
    %v1841 = vpack.c.bf16 %v1833, %v1833
    %s1842 = scalar_lea.vmem %s14, 32
    %v1843 = vld [vmem:[%s1842] sm:$0xf]
    %v1844 = vld [vmem:[%s1842 + $0x4] sm:$0xf]
    %v1845 = vld [vmem:[%s1842 + $0x8] sm:$0xf]
    %v1846 = vld [vmem:[%s1842 + $0xc] sm:$0xf]
    %v1851 = vunpack.c.l.b16 %v1843
    %v1852 = vunpack.c.l.b16 %v1844
    %v1853 = vunpack.c.l.b16 %v1845
    %v1854 = vunpack.c.l.b16 %v1846
    %v1855 = vpack.c.b16 %v1852, %v1851
    %v1856 = vpack.c.b16 %v1854, %v1853
    %v1860 = vsel %vm261, %v1841, 0
    %1862 = vmatprep.subr.bf16.mxu0 0
    %1863 = vmatpush1.bf16.msra.mxu0 0
    %1864 = vmatprep.subr.bf16.mxu0 0
    %1865 = vmatpush1.bf16.msra.mxu0 0
    %1866 = vmatprep.subr.bf16.mxu0 0
    %1867 = vmatpush1.bf16.msra.mxu0 0
    %1868 = vmatprep.subr.bf16.mxu0 0
    %1869 = vmatpush1.bf16.msra.mxu0 0
    %1870 = vmatprep.subr.bf16.mxu0 0
    %1871 = vmatpush1.bf16.msra.mxu0 0
    %1872 = vmatprep.subr.bf16.mxu0 0
    %1873 = vmatpush1.bf16.msra.mxu0 0
    %1874 = vmatprep.subr.bf16.mxu0 0
    %1875 = vmatpush1.bf16.msra.mxu0 %v1856
    %1876 = vmatprep.subr.bf16.mxu0 0
    %1877 = vmatpush1.bf16.msra.mxu0 %v1855
    %1878 = vmatprep.subr.bf16.mxu0 0
    %1879 = vmatpush2.bf16.msra.mxu0 0
    %1880 = vmatprep.subr.bf16.mxu0 0
    %1881 = vmatpush2.bf16.msra.mxu0 0
    %1882 = vmatprep.subr.bf16.mxu0 0
    %1883 = vmatpush2.bf16.msra.mxu0 0
    %1884 = vmatprep.subr.bf16.mxu0 0
    %1885 = vmatpush2.bf16.msra.mxu0 0
    %1886 = vmatprep.subr.bf16.mxu0 0
    %1887 = vmatpush2.bf16.msra.mxu0 0
    %1888 = vmatprep.subr.bf16.mxu0 0
    %1889 = vmatpush2.bf16.msra.mxu0 0
    %1890 = vmatprep.subr.bf16.mxu0 0
    %1891 = vmatpush2.bf16.msra.mxu0 0
    %1892 = vmatprep.subr.bf16.mxu0 0
    %1893 = vmatpush2.bf16.msra.mxu0 0
    %1894 = vmatprep.mubr.bf16.mxu0 0
    %1895 = vmatmul.mubr.bf16.gmra.mxu0 %v1860
    %v1896 = vpop.f32.mrf.mxu0
    %v1897 = vadd.f32 0.0, %v1896
    %v1898 = vpop.f32.mrf.mxu0
    %v1899 = vpop.f32.mrf.mxu0
    %v1900 = vpop.f32.mrf.mxu0
    %1901 = vdwg.mxu0
    %1902 = vrot.lane.b32.xlu0 %v1897, 64
    %v1903 = vpop.permute.xlu0 %1902
    %v1904 = vpack.c.bf16 %v1903, %v1897
    %v1905 = vpack.c.bf16 %v1835, %v1834
    %v1906 = vpack.c.bf16 %v1837, %v1836
    %v1907 = vpack.c.bf16 %v1839, %v1838
    %v1908 = vpack.c.bf16 %v1840, %v1840
    %s1909 = scalar_lea.vmem %s15, 32
    %v1910 = vld [vmem:[%s1909] sm:$0xf]
    %v1911 = vld [vmem:[%s1909 + $0x4] sm:$0xf]
    %v1912 = vld [vmem:[%s1909 + $0x8] sm:$0xf]
    %v1913 = vld [vmem:[%s1909 + $0xc] sm:$0xf]
    %v1918 = vunpack.c.l.b16 %v1910
    %v1919 = vunpack.c.l.b16 %v1911
    %v1920 = vunpack.c.l.b16 %v1912
    %v1921 = vunpack.c.l.b16 %v1913
    %v1922 = vpack.c.b16 %v1919, %v1918
    %v1923 = vpack.c.b16 %v1921, %v1920
    %v1927 = vsel %vm261, %v1905, 0
    %v1930 = vsel %vm261, %v1906, 0
    %v1933 = vsel %vm261, %v1907, 0
    %v1936 = vsel %vm261, %v1908, 0
    %1938 = vmatprep.subr.bf16.mxu0 0
    %1939 = vmatpush1.bf16.msra.mxu0 0
    %1940 = vmatprep.subr.bf16.mxu0 0
    %1941 = vmatpush1.bf16.msra.mxu0 0
    %1942 = vmatprep.subr.bf16.mxu0 0
    %1943 = vmatpush1.bf16.msra.mxu0 0
    %1944 = vmatprep.subr.bf16.mxu0 0
    %1945 = vmatpush1.bf16.msra.mxu0 0
    %1946 = vmatprep.subr.bf16.mxu0 0
    %1947 = vmatpush1.bf16.msra.mxu0 0
    %1948 = vmatprep.subr.bf16.mxu0 0
    %1949 = vmatpush1.bf16.msra.mxu0 0
    %1950 = vmatprep.subr.bf16.mxu0 0
    %1951 = vmatpush1.bf16.msra.mxu0 %v1923
    %1952 = vmatprep.subr.bf16.mxu0 0
    %1953 = vmatpush1.bf16.msra.mxu0 %v1922
    %1954 = vmatprep.subr.bf16.mxu0 0
    %1955 = vmatpush2.bf16.msra.mxu0 0
    %1956 = vmatprep.subr.bf16.mxu0 0
    %1957 = vmatpush2.bf16.msra.mxu0 0
    %1958 = vmatprep.subr.bf16.mxu0 0
    %1959 = vmatpush2.bf16.msra.mxu0 0
    %1960 = vmatprep.subr.bf16.mxu0 0
    %1961 = vmatpush2.bf16.msra.mxu0 0
    %1962 = vmatprep.subr.bf16.mxu0 0
    %1963 = vmatpush2.bf16.msra.mxu0 0
    %1964 = vmatprep.subr.bf16.mxu0 0
    %1965 = vmatpush2.bf16.msra.mxu0 0
    %1966 = vmatprep.subr.bf16.mxu0 0
    %1967 = vmatpush2.bf16.msra.mxu0 0
    %1968 = vmatprep.subr.bf16.mxu0 0
    %1969 = vmatpush2.bf16.msra.mxu0 0
    %1970 = vmatprep.mubr.bf16.mxu0 0
    %1971 = vmatmul.mubr.bf16.gmra.mxu0 %v1927
    %v1972 = vpop.f32.mrf.mxu0
    %v1973 = vadd.f32 0.0, %v1972
    %v1974 = vpop.f32.mrf.mxu0
    %v1975 = vpop.f32.mrf.mxu0
    %v1976 = vadd.f32 0.0, %v1975
    %v1977 = vpop.f32.mrf.mxu0
    %1978 = vmatprep.mubr.bf16.mxu0 0
    %1979 = vmatmul.mubr.bf16.gmra.mxu0 %v1930
    %v1980 = vpop.f32.mrf.mxu0
    %v1981 = vadd.f32 0.0, %v1980
    %v1982 = vpop.f32.mrf.mxu0
    %v1983 = vpop.f32.mrf.mxu0
    %v1984 = vadd.f32 0.0, %v1983
    %v1985 = vpop.f32.mrf.mxu0
    %1986 = vmatprep.mubr.bf16.mxu0 0
    %1987 = vmatmul.mubr.bf16.gmra.mxu0 %v1933
    %v1988 = vpop.f32.mrf.mxu0
    %v1989 = vadd.f32 0.0, %v1988
    %v1990 = vpop.f32.mrf.mxu0
    %v1991 = vpop.f32.mrf.mxu0
    %v1992 = vadd.f32 0.0, %v1991
    %v1993 = vpop.f32.mrf.mxu0
    %1994 = vmatprep.mubr.bf16.mxu0 0
    %1995 = vmatmul.mubr.bf16.gmra.mxu0 %v1936
    %v1996 = vpop.f32.mrf.mxu0
    %v1997 = vadd.f32 0.0, %v1996
    %v1998 = vpop.f32.mrf.mxu0
    %v1999 = vpop.f32.mrf.mxu0
    %v2000 = vpop.f32.mrf.mxu0
    %2001 = vdwg.mxu0
    %2002 = vmatprep.subr.bf16.mxu0 0
    %2003 = vmatpush1.bf16.msra.mxu0 0
    %2004 = vmatprep.subr.bf16.mxu0 0
    %2005 = vmatpush1.bf16.msra.mxu0 0
    %2006 = vmatprep.subr.bf16.mxu0 0
    %2007 = vmatpush1.bf16.msra.mxu0 0
    %2008 = vmatprep.subr.bf16.mxu0 0
    %2009 = vmatpush1.bf16.msra.mxu0 0
    %2010 = vmatprep.subr.bf16.mxu0 0
    %2011 = vmatpush1.bf16.msra.mxu0 0
    %2012 = vmatprep.subr.bf16.mxu0 0
    %2013 = vmatpush1.bf16.msra.mxu0 0
    %2014 = vmatprep.subr.bf16.mxu0 0
    %2015 = vmatpush1.bf16.msra.mxu0 0
    %2016 = vmatprep.subr.bf16.mxu0 0
    %2017 = vmatpush1.bf16.msra.mxu0 %v1904
    %2018 = vmatprep.subr.bf16.mxu0 0
    %2019 = vmatpush2.bf16.msra.mxu0 0
    %2020 = vmatprep.subr.bf16.mxu0 0
    %2021 = vmatpush2.bf16.msra.mxu0 0
    %2022 = vmatprep.subr.bf16.mxu0 0
    %2023 = vmatpush2.bf16.msra.mxu0 0
    %2024 = vmatprep.subr.bf16.mxu0 0
    %2025 = vmatpush2.bf16.msra.mxu0 0
    %2026 = vmatprep.subr.bf16.mxu0 0
    %2027 = vmatpush2.bf16.msra.mxu0 0
    %2028 = vmatprep.subr.bf16.mxu0 0
    %2029 = vmatpush2.bf16.msra.mxu0 0
    %2030 = vmatprep.subr.bf16.mxu0 0
    %2031 = vmatpush2.bf16.msra.mxu0 0
    %2032 = vmatprep.subr.bf16.mxu0 0
    %2033 = vmatpush2.bf16.msra.mxu0 0
    %2034 = vmatprep.mubr.bf16.mxu0 0
    %2035 = vmatmul.mubr.bf16.gmra.mxu0 %v794
    %v2036 = vpop.f32.mrf.mxu0
    %v2037 = vadd.f32 %v1973, %v2036
    %v2038 = vpop.f32.mrf.mxu0
    %v2039 = vpop.f32.mrf.mxu0
    %v2040 = vadd.f32 %v1976, %v2039
    %v2041 = vpop.f32.mrf.mxu0
    %2042 = vmatprep.mubr.bf16.mxu0 0
    %2043 = vmatmul.mubr.bf16.gmra.mxu0 %v797
    %v2044 = vpop.f32.mrf.mxu0
    %v2045 = vadd.f32 %v1981, %v2044
    %v2046 = vpop.f32.mrf.mxu0
    %v2047 = vpop.f32.mrf.mxu0
    %v2048 = vadd.f32 %v1984, %v2047
    %v2049 = vpop.f32.mrf.mxu0
    %2050 = vmatprep.mubr.bf16.mxu0 0
    %2051 = vmatmul.mubr.bf16.gmra.mxu0 %v800
    %v2052 = vpop.f32.mrf.mxu0
    %v2053 = vadd.f32 %v1989, %v2052
    %v2054 = vpop.f32.mrf.mxu0
    %v2055 = vpop.f32.mrf.mxu0
    %v2056 = vadd.f32 %v1992, %v2055
    %v2057 = vpop.f32.mrf.mxu0
    %2058 = vmatprep.mubr.bf16.mxu0 0
    %2059 = vmatmul.mubr.bf16.gmra.mxu0 %v803
    %v2060 = vpop.f32.mrf.mxu0
    %v2061 = vadd.f32 %v1997, %v2060
    %v2062 = vpop.f32.mrf.mxu0
    %v2063 = vpop.f32.mrf.mxu0
    %v2064 = vpop.f32.mrf.mxu0
    %2065 = vdwg.mxu0
    %s2066 = scalar_lea.vmem %s16, 2
    %v2067 = vld [vmem:[%s2066] sm:$0x1]
    %v2069 = vlaneseq
    %v2070 = vshrl.u32 %v2069, 7
    %v2071 = vsub.s32 0, %v2070
    %v2072 = vrot.slane %v2067, %v2071
    %v2074 = vadd.f32 %v2037, %v2072
    %v2075 = vadd.f32 %v2040, %v2072
    %v2076 = vadd.f32 %v2045, %v2072
    %v2077 = vadd.f32 %v2048, %v2072
    %v2078 = vadd.f32 %v2053, %v2072
    %v2079 = vadd.f32 %v2056, %v2072
    %v2080 = vadd.f32 %v2061, %v2072
    %v2081 = vmax.f32 %v2074, 0.0
    %v2082 = vmax.f32 %v2075, 0.0
    %v2083 = vmax.f32 %v2076, 0.0
    %v2084 = vmax.f32 %v2077, 0.0
    %v2085 = vmax.f32 %v2078, 0.0
    %v2086 = vmax.f32 %v2079, 0.0
    %v2087 = vmax.f32 %v2080, 0.0
    %v2088 = vpack.c.bf16 %v2082, %v2081
    %v2089 = vpack.c.bf16 %v2084, %v2083
    %v2090 = vpack.c.bf16 %v2086, %v2085
    %v2091 = vpack.c.bf16 %v2087, %v2087
    %s2092 = scalar_lea.vmem %s17, 64
    %v2093 = vld [vmem:[%s2092] sm:$0xf]
    %v2094 = vld [vmem:[%s2092 + $0x4] sm:$0xf]
    %v2095 = vld [vmem:[%s2092 + $0x8] sm:$0xf]
    %v2096 = vld [vmem:[%s2092 + $0xc] sm:$0xf]
    %v2097 = vld [vmem:[%s2092 + $0x10] sm:$0xf]
    %v2098 = vld [vmem:[%s2092 + $0x14] sm:$0xf]
    %v2099 = vld [vmem:[%s2092 + $0x18] sm:$0xf]
    %v2100 = vld [vmem:[%s2092 + $0x1c] sm:$0xf]
    %s2101 = scalar_lea.vmem %s18, 2
    %v2102 = vld [vmem:[%s2101] sm:$0x1]
    %v2104 = vlaneseq
    %v2105 = vshrl.u32 %v2104, 7
    %v2106 = vsub.s32 0, %v2105
    %v2107 = vrot.slane %v2102, %v2106
    %v2117 = vunpack.c.l.b16 %v2093
    %v2118 = vunpack.c.l.b16 %v2094
    %v2119 = vunpack.c.l.b16 %v2095
    %v2120 = vunpack.c.l.b16 %v2096
    %v2121 = vunpack.c.l.b16 %v2097
    %v2122 = vunpack.c.l.b16 %v2098
    %v2123 = vunpack.c.l.b16 %v2099
    %v2124 = vunpack.c.l.b16 %v2100
    %v2125 = vpack.c.b16 %v2118, %v2117
    %v2126 = vpack.c.b16 %v2120, %v2119
    %v2127 = vpack.c.b16 %v2122, %v2121
    %v2128 = vpack.c.b16 %v2124, %v2123
    %v2134 = vsel %vm933, %v2088, 0
    %v2137 = vsel %vm933, %v2089, 0
    %v2140 = vsel %vm933, %v2090, 0
    %v2143 = vsel %vm933, %v2091, 0
    %2145 = vmatprep.subr.bf16.mxu0 0
    %2146 = vmatpush1.bf16.msra.mxu0 0
    %2147 = vmatprep.subr.bf16.mxu0 0
    %2148 = vmatpush1.bf16.msra.mxu0 0
    %2149 = vmatprep.subr.bf16.mxu0 0
    %2150 = vmatpush1.bf16.msra.mxu0 0
    %2151 = vmatprep.subr.bf16.mxu0 0
    %2152 = vmatpush1.bf16.msra.mxu0 0
    %2153 = vmatprep.subr.bf16.mxu0 0
    %2154 = vmatpush1.bf16.msra.mxu0 %v2128
    %2155 = vmatprep.subr.bf16.mxu0 0
    %2156 = vmatpush1.bf16.msra.mxu0 %v2127
    %2157 = vmatprep.subr.bf16.mxu0 0
    %2158 = vmatpush1.bf16.msra.mxu0 %v2126
    %2159 = vmatprep.subr.bf16.mxu0 0
    %2160 = vmatpush1.bf16.msra.mxu0 %v2125
    %2161 = vmatprep.subr.bf16.mxu0 0
    %2162 = vmatpush2.bf16.msra.mxu0 0
    %2163 = vmatprep.subr.bf16.mxu0 0
    %2164 = vmatpush2.bf16.msra.mxu0 0
    %2165 = vmatprep.subr.bf16.mxu0 0
    %2166 = vmatpush2.bf16.msra.mxu0 0
    %2167 = vmatprep.subr.bf16.mxu0 0
    %2168 = vmatpush2.bf16.msra.mxu0 0
    %2169 = vmatprep.subr.bf16.mxu0 0
    %2170 = vmatpush2.bf16.msra.mxu0 0
    %2171 = vmatprep.subr.bf16.mxu0 0
    %2172 = vmatpush2.bf16.msra.mxu0 0
    %2173 = vmatprep.subr.bf16.mxu0 0
    %2174 = vmatpush2.bf16.msra.mxu0 0
    %2175 = vmatprep.subr.bf16.mxu0 0
    %2176 = vmatpush2.bf16.msra.mxu0 0
    %2177 = vmatprep.mubr.bf16.mxu0 0
    %2178 = vmatmul.mubr.bf16.gmra.mxu0 %v2134
    %v2179 = vpop.f32.mrf.mxu0
    %v2180 = vadd.f32 %v2107, %v2179
    %v2181 = vpop.f32.mrf.mxu0
    %v2182 = vpop.f32.mrf.mxu0
    %v2183 = vadd.f32 %v2107, %v2182
    %v2184 = vpop.f32.mrf.mxu0
    %2185 = vmatprep.mubr.bf16.mxu0 0
    %2186 = vmatmul.mubr.bf16.gmra.mxu0 %v2137
    %v2187 = vpop.f32.mrf.mxu0
    %v2188 = vadd.f32 %v2107, %v2187
    %v2189 = vpop.f32.mrf.mxu0
    %v2190 = vpop.f32.mrf.mxu0
    %v2191 = vadd.f32 %v2107, %v2190
    %v2192 = vpop.f32.mrf.mxu0
    %2193 = vmatprep.mubr.bf16.mxu0 0
    %2194 = vmatmul.mubr.bf16.gmra.mxu0 %v2140
    %v2195 = vpop.f32.mrf.mxu0
    %v2196 = vadd.f32 %v2107, %v2195
    %v2197 = vpop.f32.mrf.mxu0
    %v2198 = vpop.f32.mrf.mxu0
    %v2199 = vadd.f32 %v2107, %v2198
    %v2200 = vpop.f32.mrf.mxu0
    %2201 = vmatprep.mubr.bf16.mxu0 0
    %2202 = vmatmul.mubr.bf16.gmra.mxu0 %v2143
    %v2203 = vpop.f32.mrf.mxu0
    %v2204 = vadd.f32 %v2107, %v2203
    %v2205 = vpop.f32.mrf.mxu0
    %v2206 = vpop.f32.mrf.mxu0
    %v2207 = vpop.f32.mrf.mxu0
    %2208 = vdwg.mxu0
    %v2209 = vpack.c.bf16 %v2183, %v2180
    %v2210 = vpack.c.bf16 %v2191, %v2188
    %v2211 = vpack.c.bf16 %v2199, %v2196
    %v2212 = vpack.c.bf16 %v2204, %v2204
    %v2214 = vsel %vm1018, %v2212, 0
    %2216 = vmatprep.subr.bf16.mxu0 0
    %2217 = vmatpush1.bf16.msra.mxu0 0
    %2218 = vmatprep.subr.bf16.mxu0 0
    %2219 = vmatpush1.bf16.msra.mxu0 0
    %2220 = vmatprep.subr.bf16.mxu0 0
    %2221 = vmatpush1.bf16.msra.mxu0 0
    %2222 = vmatprep.subr.bf16.mxu0 0
    %2223 = vmatpush1.bf16.msra.mxu0 0
    %2224 = vmatprep.subr.bf16.mxu0 0
    %2225 = vmatpush1.bf16.msra.mxu0 %v2214
    %2226 = vmatprep.subr.bf16.mxu0 0
    %2227 = vmatpush1.bf16.msra.mxu0 %v2211
    %2228 = vmatprep.subr.bf16.mxu0 0
    %2229 = vmatpush1.bf16.msra.mxu0 %v2210
    %2230 = vmatprep.subr.bf16.mxu0 0
    %2231 = vmatpush1.bf16.msra.mxu0 %v2209
    %2232 = vmatprep.subr.bf16.mxu0 0
    %2233 = vmatpush2.bf16.msra.mxu0 0
    %2234 = vmatprep.subr.bf16.mxu0 0
    %2235 = vmatpush2.bf16.msra.mxu0 0
    %2236 = vmatprep.subr.bf16.mxu0 0
    %2237 = vmatpush2.bf16.msra.mxu0 0
    %2238 = vmatprep.subr.bf16.mxu0 0
    %2239 = vmatpush2.bf16.msra.mxu0 0
    %2240 = vmatprep.subr.bf16.mxu0 0
    %2241 = vmatpush2.bf16.msra.mxu0 0
    %2242 = vmatprep.subr.bf16.mxu0 0
    %2243 = vmatpush2.bf16.msra.mxu0 0
    %2244 = vmatprep.subr.bf16.mxu0 0
    %2245 = vmatpush2.bf16.msra.mxu0 0
    %2246 = vmatprep.subr.bf16.mxu0 0
    %2247 = vmatpush2.bf16.msra.mxu0 0
    %2248 = vmatprep.mubr.bf16.mxu0 0
    %2249 = vmatmul.mubr.bf16.gmra.mxu0 %v1016
    %v2250 = vpop.f32.mrf.mxu0
    %v2251 = vadd.f32 0.0, %v2250
    %v2252 = vpop.f32.mrf.mxu0
    %v2253 = vpop.f32.mrf.mxu0
    %v2254 = vpop.f32.mrf.mxu0
    %2255 = vdwg.mxu0
    %s2256 = scalar_lea.vmem %s19, 2
    %v2257 = vld [vmem:[%s2256] sm:$0x1]
    %s2258 = scalar_lea.vmem %s20, 2
    %v2259 = vld [vmem:[%s2258] sm:$0x1]
    %v2260 = vsel %vm261, %v2251, 0.0
    %2261 = vadd.xlane.f32.xlu0 %v2260
    %v2262 = vpop.xlane.xlu0 %2261
    %v2263 = vmul.f32 %v2251, %v2251
    %v2264 = vsel %vm261, %v2263, 0.0
    %2265 = vadd.xlane.f32.xlu0 %v2264
    %v2266 = vpop.xlane.xlu0 %2265
    %v2267 = vmul.f32 %v2262, 0.03125
    %v2268 = vmul.f32 %v2266, 0.03125
    %v2269 = vmul.f32 %v2267, %v2267
    %v2270 = vsub.f32 %v2268, %v2269
    %v2271 = vsub.f32 %v2251, %v2267
    %v2272 = vadd.f32 %v2270, 1e-05
    %v2273 = vrsqrt.pop %v2272
    %v2274 = vmul.f32 %v2271, %v2273
    %v2276 = vlaneseq
    %v2277 = vshrl.u32 %v2276, 7
    %v2278 = vsub.s32 0, %v2277
    %v2279 = vrot.slane %v2257, %v2278
    %v2281 = vmul.f32 %v2274, %v2279
    %v2283 = vlaneseq
    %v2284 = vshrl.u32 %v2283, 7
    %v2285 = vsub.s32 0, %v2284
    %v2286 = vrot.slane %v2259, %v2285
    %v2288 = vadd.f32 %v2281, %v2286
    %v2289 = vadd.f32 %v1833, %v2288
    %s2290 = scalar_lea.vmem %s21, 2
    %v2291 = vld [vmem:[%s2290] sm:$0x1]
    %s2292 = scalar_lea.vmem %s22, 2
    %v2293 = vld [vmem:[%s2292] sm:$0x1]
    %v2294 = vsel %vm261, %v2180, 0.0
    %2295 = vadd.xlane.f32.xlu0 %v2294
    %v2296 = vpop.xlane.xlu0 %2295
    %v2297 = vsel %vm261, %v2183, 0.0
    %2298 = vadd.xlane.f32.xlu0 %v2297
    %v2299 = vpop.xlane.xlu0 %2298
    %v2300 = vsel %vm261, %v2188, 0.0
    %2301 = vadd.xlane.f32.xlu0 %v2300
    %v2302 = vpop.xlane.xlu0 %2301
    %v2303 = vsel %vm261, %v2191, 0.0
    %2304 = vadd.xlane.f32.xlu0 %v2303
    %v2305 = vpop.xlane.xlu0 %2304
    %v2306 = vsel %vm261, %v2196, 0.0
    %2307 = vadd.xlane.f32.xlu0 %v2306
    %v2308 = vpop.xlane.xlu0 %2307
    %v2309 = vsel %vm261, %v2199, 0.0
    %2310 = vadd.xlane.f32.xlu0 %v2309
    %v2311 = vpop.xlane.xlu0 %2310
    %v2312 = vsel %vm261, %v2204, 0.0
    %2313 = vadd.xlane.f32.xlu0 %v2312
    %v2314 = vpop.xlane.xlu0 %2313
    %v2315 = vmul.f32 %v2180, %v2180
    %v2316 = vmul.f32 %v2183, %v2183
    %v2317 = vmul.f32 %v2188, %v2188
    %v2318 = vmul.f32 %v2191, %v2191
    %v2319 = vmul.f32 %v2196, %v2196
    %v2320 = vmul.f32 %v2199, %v2199
    %v2321 = vmul.f32 %v2204, %v2204
    %v2322 = vsel %vm261, %v2315, 0.0
    %2323 = vadd.xlane.f32.xlu0 %v2322
    %v2324 = vpop.xlane.xlu0 %2323
    %v2325 = vsel %vm261, %v2316, 0.0
    %2326 = vadd.xlane.f32.xlu0 %v2325
    %v2327 = vpop.xlane.xlu0 %2326
    %v2328 = vsel %vm261, %v2317, 0.0
    %2329 = vadd.xlane.f32.xlu0 %v2328
    %v2330 = vpop.xlane.xlu0 %2329
    %v2331 = vsel %vm261, %v2318, 0.0
    %2332 = vadd.xlane.f32.xlu0 %v2331
    %v2333 = vpop.xlane.xlu0 %2332
    %v2334 = vsel %vm261, %v2319, 0.0
    %2335 = vadd.xlane.f32.xlu0 %v2334
    %v2336 = vpop.xlane.xlu0 %2335
    %v2337 = vsel %vm261, %v2320, 0.0
    %2338 = vadd.xlane.f32.xlu0 %v2337
    %v2339 = vpop.xlane.xlu0 %2338
    %v2340 = vsel %vm261, %v2321, 0.0
    %2341 = vadd.xlane.f32.xlu0 %v2340
    %v2342 = vpop.xlane.xlu0 %2341
    %v2343 = vmul.f32 %v2296, 0.03125
    %v2344 = vmul.f32 %v2299, 0.03125
    %v2345 = vmul.f32 %v2302, 0.03125
    %v2346 = vmul.f32 %v2305, 0.03125
    %v2347 = vmul.f32 %v2308, 0.03125
    %v2348 = vmul.f32 %v2311, 0.03125
    %v2349 = vmul.f32 %v2314, 0.03125
    %v2350 = vmul.f32 %v2324, 0.03125
    %v2351 = vmul.f32 %v2327, 0.03125
    %v2352 = vmul.f32 %v2330, 0.03125
    %v2353 = vmul.f32 %v2333, 0.03125
    %v2354 = vmul.f32 %v2336, 0.03125
    %v2355 = vmul.f32 %v2339, 0.03125
    %v2356 = vmul.f32 %v2342, 0.03125
    %v2357 = vmul.f32 %v2343, %v2343
    %v2358 = vmul.f32 %v2344, %v2344
    %v2359 = vmul.f32 %v2345, %v2345
    %v2360 = vmul.f32 %v2346, %v2346
    %v2361 = vmul.f32 %v2347, %v2347
    %v2362 = vmul.f32 %v2348, %v2348
    %v2363 = vmul.f32 %v2349, %v2349
    %v2364 = vsub.f32 %v2350, %v2357
    %v2365 = vsub.f32 %v2351, %v2358
    %v2366 = vsub.f32 %v2352, %v2359
    %v2367 = vsub.f32 %v2353, %v2360
    %v2368 = vsub.f32 %v2354, %v2361
    %v2369 = vsub.f32 %v2355, %v2362
    %v2370 = vsub.f32 %v2356, %v2363
    %v2371 = vsub.f32 %v2180, %v2343
    %v2372 = vsub.f32 %v2183, %v2344
    %v2373 = vsub.f32 %v2188, %v2345
    %v2374 = vsub.f32 %v2191, %v2346
    %v2375 = vsub.f32 %v2196, %v2347
    %v2376 = vsub.f32 %v2199, %v2348
    %v2377 = vsub.f32 %v2204, %v2349
    %v2378 = vadd.f32 %v2364, 1e-05
    %v2379 = vadd.f32 %v2365, 1e-05
    %v2380 = vadd.f32 %v2366, 1e-05
    %v2381 = vadd.f32 %v2367, 1e-05
    %v2382 = vadd.f32 %v2368, 1e-05
    %v2383 = vadd.f32 %v2369, 1e-05
    %v2384 = vadd.f32 %v2370, 1e-05
    %v2385 = vrsqrt.pop %v2378
    %v2386 = vrsqrt.pop %v2379
    %v2387 = vrsqrt.pop %v2380
    %v2388 = vrsqrt.pop %v2381
    %v2389 = vrsqrt.pop %v2382
    %v2390 = vrsqrt.pop %v2383
    %v2391 = vrsqrt.pop %v2384
    %v2392 = vmul.f32 %v2371, %v2385
    %v2393 = vmul.f32 %v2372, %v2386
    %v2394 = vmul.f32 %v2373, %v2387
    %v2395 = vmul.f32 %v2374, %v2388
    %v2396 = vmul.f32 %v2375, %v2389
    %v2397 = vmul.f32 %v2376, %v2390
    %v2398 = vmul.f32 %v2377, %v2391
    %v2400 = vlaneseq
    %v2401 = vshrl.u32 %v2400, 7
    %v2402 = vsub.s32 0, %v2401
    %v2403 = vrot.slane %v2291, %v2402
    %v2405 = vmul.f32 %v2392, %v2403
    %v2406 = vmul.f32 %v2393, %v2403
    %v2407 = vmul.f32 %v2394, %v2403
    %v2408 = vmul.f32 %v2395, %v2403
    %v2409 = vmul.f32 %v2396, %v2403
    %v2410 = vmul.f32 %v2397, %v2403
    %v2411 = vmul.f32 %v2398, %v2403
    %v2413 = vlaneseq
    %v2414 = vshrl.u32 %v2413, 7
    %v2415 = vsub.s32 0, %v2414
    %v2416 = vrot.slane %v2293, %v2415
    %v2418 = vadd.f32 %v2405, %v2416
    %v2419 = vadd.f32 %v2406, %v2416
    %v2420 = vadd.f32 %v2407, %v2416
    %v2421 = vadd.f32 %v2408, %v2416
    %v2422 = vadd.f32 %v2409, %v2416
    %v2423 = vadd.f32 %v2410, %v2416
    %v2424 = vadd.f32 %v2411, %v2416
    %v2425 = vadd.f32 %v1834, %v2418
    %v2426 = vadd.f32 %v1835, %v2419
    %v2427 = vadd.f32 %v1836, %v2420
    %v2428 = vadd.f32 %v1837, %v2421
    %v2429 = vadd.f32 %v1838, %v2422
    %v2430 = vadd.f32 %v1839, %v2423
    %v2431 = vadd.f32 %v1840, %v2424
    %v2432 = vmax.f32 %v2289, 0.0
    %v2433 = vmax.f32 %v2425, 0.0
    %v2434 = vmax.f32 %v2426, 0.0
    %v2435 = vmax.f32 %v2427, 0.0
    %v2436 = vmax.f32 %v2428, 0.0
    %v2437 = vmax.f32 %v2429, 0.0
    %v2438 = vmax.f32 %v2430, 0.0
    %v2439 = vmax.f32 %v2431, 0.0
    %v2440 = vpack.c.bf16 %v2432, %v2432
    %s2441 = scalar_lea.vmem %s14, 48
    %v2442 = vld [vmem:[%s2441] sm:$0xf]
    %v2443 = vld [vmem:[%s2441 + $0x4] sm:$0xf]
    %v2444 = vld [vmem:[%s2441 + $0x8] sm:$0xf]
    %v2445 = vld [vmem:[%s2441 + $0xc] sm:$0xf]
    %v2450 = vunpack.c.l.b16 %v2442
    %v2451 = vunpack.c.l.b16 %v2443
    %v2452 = vunpack.c.l.b16 %v2444
    %v2453 = vunpack.c.l.b16 %v2445
    %v2454 = vpack.c.b16 %v2451, %v2450
    %v2455 = vpack.c.b16 %v2453, %v2452
    %v2459 = vsel %vm261, %v2440, 0
    %2461 = vmatprep.subr.bf16.mxu0 0
    %2462 = vmatpush1.bf16.msra.mxu0 0
    %2463 = vmatprep.subr.bf16.mxu0 0
    %2464 = vmatpush1.bf16.msra.mxu0 0
    %2465 = vmatprep.subr.bf16.mxu0 0
    %2466 = vmatpush1.bf16.msra.mxu0 0
    %2467 = vmatprep.subr.bf16.mxu0 0
    %2468 = vmatpush1.bf16.msra.mxu0 0
    %2469 = vmatprep.subr.bf16.mxu0 0
    %2470 = vmatpush1.bf16.msra.mxu0 0
    %2471 = vmatprep.subr.bf16.mxu0 0
    %2472 = vmatpush1.bf16.msra.mxu0 0
    %2473 = vmatprep.subr.bf16.mxu0 0
    %2474 = vmatpush1.bf16.msra.mxu0 %v2455
    %2475 = vmatprep.subr.bf16.mxu0 0
    %2476 = vmatpush1.bf16.msra.mxu0 %v2454
    %2477 = vmatprep.subr.bf16.mxu0 0
    %2478 = vmatpush2.bf16.msra.mxu0 0
    %2479 = vmatprep.subr.bf16.mxu0 0
    %2480 = vmatpush2.bf16.msra.mxu0 0
    %2481 = vmatprep.subr.bf16.mxu0 0
    %2482 = vmatpush2.bf16.msra.mxu0 0
    %2483 = vmatprep.subr.bf16.mxu0 0
    %2484 = vmatpush2.bf16.msra.mxu0 0
    %2485 = vmatprep.subr.bf16.mxu0 0
    %2486 = vmatpush2.bf16.msra.mxu0 0
    %2487 = vmatprep.subr.bf16.mxu0 0
    %2488 = vmatpush2.bf16.msra.mxu0 0
    %2489 = vmatprep.subr.bf16.mxu0 0
    %2490 = vmatpush2.bf16.msra.mxu0 0
    %2491 = vmatprep.subr.bf16.mxu0 0
    %2492 = vmatpush2.bf16.msra.mxu0 0
    %2493 = vmatprep.mubr.bf16.mxu0 0
    %2494 = vmatmul.mubr.bf16.gmra.mxu0 %v2459
    %v2495 = vpop.f32.mrf.mxu0
    %v2496 = vadd.f32 0.0, %v2495
    %v2497 = vpop.f32.mrf.mxu0
    %v2498 = vpop.f32.mrf.mxu0
    %v2499 = vpop.f32.mrf.mxu0
    %2500 = vdwg.mxu0
    %2501 = vrot.lane.b32.xlu0 %v2496, 64
    %v2502 = vpop.permute.xlu0 %2501
    %v2503 = vpack.c.bf16 %v2502, %v2496
    %v2504 = vpack.c.bf16 %v2434, %v2433
    %v2505 = vpack.c.bf16 %v2436, %v2435
    %v2506 = vpack.c.bf16 %v2438, %v2437
    %v2507 = vpack.c.bf16 %v2439, %v2439
    %s2508 = scalar_lea.vmem %s15, 48
    %v2509 = vld [vmem:[%s2508] sm:$0xf]
    %v2510 = vld [vmem:[%s2508 + $0x4] sm:$0xf]
    %v2511 = vld [vmem:[%s2508 + $0x8] sm:$0xf]
    %v2512 = vld [vmem:[%s2508 + $0xc] sm:$0xf]
    %v2517 = vunpack.c.l.b16 %v2509
    %v2518 = vunpack.c.l.b16 %v2510
    %v2519 = vunpack.c.l.b16 %v2511
    %v2520 = vunpack.c.l.b16 %v2512
    %v2521 = vpack.c.b16 %v2518, %v2517
    %v2522 = vpack.c.b16 %v2520, %v2519
    %v2526 = vsel %vm261, %v2504, 0
    %v2529 = vsel %vm261, %v2505, 0
    %v2532 = vsel %vm261, %v2506, 0
    %v2535 = vsel %vm261, %v2507, 0
    %2537 = vmatprep.subr.bf16.mxu0 0
    %2538 = vmatpush1.bf16.msra.mxu0 0
    %2539 = vmatprep.subr.bf16.mxu0 0
    %2540 = vmatpush1.bf16.msra.mxu0 0
    %2541 = vmatprep.subr.bf16.mxu0 0
    %2542 = vmatpush1.bf16.msra.mxu0 0
    %2543 = vmatprep.subr.bf16.mxu0 0
    %2544 = vmatpush1.bf16.msra.mxu0 0
    %2545 = vmatprep.subr.bf16.mxu0 0
    %2546 = vmatpush1.bf16.msra.mxu0 0
    %2547 = vmatprep.subr.bf16.mxu0 0
    %2548 = vmatpush1.bf16.msra.mxu0 0
    %2549 = vmatprep.subr.bf16.mxu0 0
    %2550 = vmatpush1.bf16.msra.mxu0 %v2522
    %2551 = vmatprep.subr.bf16.mxu0 0
    %2552 = vmatpush1.bf16.msra.mxu0 %v2521
    %2553 = vmatprep.subr.bf16.mxu0 0
    %2554 = vmatpush2.bf16.msra.mxu0 0
    %2555 = vmatprep.subr.bf16.mxu0 0
    %2556 = vmatpush2.bf16.msra.mxu0 0
    %2557 = vmatprep.subr.bf16.mxu0 0
    %2558 = vmatpush2.bf16.msra.mxu0 0
    %2559 = vmatprep.subr.bf16.mxu0 0
    %2560 = vmatpush2.bf16.msra.mxu0 0
    %2561 = vmatprep.subr.bf16.mxu0 0
    %2562 = vmatpush2.bf16.msra.mxu0 0
    %2563 = vmatprep.subr.bf16.mxu0 0
    %2564 = vmatpush2.bf16.msra.mxu0 0
    %2565 = vmatprep.subr.bf16.mxu0 0
    %2566 = vmatpush2.bf16.msra.mxu0 0
    %2567 = vmatprep.subr.bf16.mxu0 0
    %2568 = vmatpush2.bf16.msra.mxu0 0
    %2569 = vmatprep.mubr.bf16.mxu0 0
    %2570 = vmatmul.mubr.bf16.gmra.mxu0 %v2526
    %v2571 = vpop.f32.mrf.mxu0
    %v2572 = vadd.f32 0.0, %v2571
    %v2573 = vpop.f32.mrf.mxu0
    %v2574 = vpop.f32.mrf.mxu0
    %v2575 = vadd.f32 0.0, %v2574
    %v2576 = vpop.f32.mrf.mxu0
    %2577 = vmatprep.mubr.bf16.mxu0 0
    %2578 = vmatmul.mubr.bf16.gmra.mxu0 %v2529
    %v2579 = vpop.f32.mrf.mxu0
    %v2580 = vadd.f32 0.0, %v2579
    %v2581 = vpop.f32.mrf.mxu0
    %v2582 = vpop.f32.mrf.mxu0
    %v2583 = vadd.f32 0.0, %v2582
    %v2584 = vpop.f32.mrf.mxu0
    %2585 = vmatprep.mubr.bf16.mxu0 0
    %2586 = vmatmul.mubr.bf16.gmra.mxu0 %v2532
    %v2587 = vpop.f32.mrf.mxu0
    %v2588 = vadd.f32 0.0, %v2587
    %v2589 = vpop.f32.mrf.mxu0
    %v2590 = vpop.f32.mrf.mxu0
    %v2591 = vadd.f32 0.0, %v2590
    %v2592 = vpop.f32.mrf.mxu0
    %2593 = vmatprep.mubr.bf16.mxu0 0
    %2594 = vmatmul.mubr.bf16.gmra.mxu0 %v2535
    %v2595 = vpop.f32.mrf.mxu0
    %v2596 = vadd.f32 0.0, %v2595
    %v2597 = vpop.f32.mrf.mxu0
    %v2598 = vpop.f32.mrf.mxu0
    %v2599 = vpop.f32.mrf.mxu0
    %2600 = vdwg.mxu0
    %2601 = vmatprep.subr.bf16.mxu0 0
    %2602 = vmatpush1.bf16.msra.mxu0 0
    %2603 = vmatprep.subr.bf16.mxu0 0
    %2604 = vmatpush1.bf16.msra.mxu0 0
    %2605 = vmatprep.subr.bf16.mxu0 0
    %2606 = vmatpush1.bf16.msra.mxu0 0
    %2607 = vmatprep.subr.bf16.mxu0 0
    %2608 = vmatpush1.bf16.msra.mxu0 0
    %2609 = vmatprep.subr.bf16.mxu0 0
    %2610 = vmatpush1.bf16.msra.mxu0 0
    %2611 = vmatprep.subr.bf16.mxu0 0
    %2612 = vmatpush1.bf16.msra.mxu0 0
    %2613 = vmatprep.subr.bf16.mxu0 0
    %2614 = vmatpush1.bf16.msra.mxu0 0
    %2615 = vmatprep.subr.bf16.mxu0 0
    %2616 = vmatpush1.bf16.msra.mxu0 %v2503
    %2617 = vmatprep.subr.bf16.mxu0 0
    %2618 = vmatpush2.bf16.msra.mxu0 0
    %2619 = vmatprep.subr.bf16.mxu0 0
    %2620 = vmatpush2.bf16.msra.mxu0 0
    %2621 = vmatprep.subr.bf16.mxu0 0
    %2622 = vmatpush2.bf16.msra.mxu0 0
    %2623 = vmatprep.subr.bf16.mxu0 0
    %2624 = vmatpush2.bf16.msra.mxu0 0
    %2625 = vmatprep.subr.bf16.mxu0 0
    %2626 = vmatpush2.bf16.msra.mxu0 0
    %2627 = vmatprep.subr.bf16.mxu0 0
    %2628 = vmatpush2.bf16.msra.mxu0 0
    %2629 = vmatprep.subr.bf16.mxu0 0
    %2630 = vmatpush2.bf16.msra.mxu0 0
    %2631 = vmatprep.subr.bf16.mxu0 0
    %2632 = vmatpush2.bf16.msra.mxu0 0
    %2633 = vmatprep.mubr.bf16.mxu0 0
    %2634 = vmatmul.mubr.bf16.gmra.mxu0 %v794
    %v2635 = vpop.f32.mrf.mxu0
    %v2636 = vadd.f32 %v2572, %v2635
    %v2637 = vpop.f32.mrf.mxu0
    %v2638 = vpop.f32.mrf.mxu0
    %v2639 = vadd.f32 %v2575, %v2638
    %v2640 = vpop.f32.mrf.mxu0
    %2641 = vmatprep.mubr.bf16.mxu0 0
    %2642 = vmatmul.mubr.bf16.gmra.mxu0 %v797
    %v2643 = vpop.f32.mrf.mxu0
    %v2644 = vadd.f32 %v2580, %v2643
    %v2645 = vpop.f32.mrf.mxu0
    %v2646 = vpop.f32.mrf.mxu0
    %v2647 = vadd.f32 %v2583, %v2646
    %v2648 = vpop.f32.mrf.mxu0
    %2649 = vmatprep.mubr.bf16.mxu0 0
    %2650 = vmatmul.mubr.bf16.gmra.mxu0 %v800
    %v2651 = vpop.f32.mrf.mxu0
    %v2652 = vadd.f32 %v2588, %v2651
    %v2653 = vpop.f32.mrf.mxu0
    %v2654 = vpop.f32.mrf.mxu0
    %v2655 = vadd.f32 %v2591, %v2654
    %v2656 = vpop.f32.mrf.mxu0
    %2657 = vmatprep.mubr.bf16.mxu0 0
    %2658 = vmatmul.mubr.bf16.gmra.mxu0 %v803
    %v2659 = vpop.f32.mrf.mxu0
    %v2660 = vadd.f32 %v2596, %v2659
    %v2661 = vpop.f32.mrf.mxu0
    %v2662 = vpop.f32.mrf.mxu0
    %v2663 = vpop.f32.mrf.mxu0
    %2664 = vdwg.mxu0
    %s2665 = scalar_lea.vmem %s16, 3
    %v2666 = vld [vmem:[%s2665] sm:$0x1]
    %v2668 = vlaneseq
    %v2669 = vshrl.u32 %v2668, 7
    %v2670 = vsub.s32 0, %v2669
    %v2671 = vrot.slane %v2666, %v2670
    %v2673 = vadd.f32 %v2636, %v2671
    %v2674 = vadd.f32 %v2639, %v2671
    %v2675 = vadd.f32 %v2644, %v2671
    %v2676 = vadd.f32 %v2647, %v2671
    %v2677 = vadd.f32 %v2652, %v2671
    %v2678 = vadd.f32 %v2655, %v2671
    %v2679 = vadd.f32 %v2660, %v2671
    %v2680 = vmax.f32 %v2673, 0.0
    %v2681 = vmax.f32 %v2674, 0.0
    %v2682 = vmax.f32 %v2675, 0.0
    %v2683 = vmax.f32 %v2676, 0.0
    %v2684 = vmax.f32 %v2677, 0.0
    %v2685 = vmax.f32 %v2678, 0.0
    %v2686 = vmax.f32 %v2679, 0.0
    %v2687 = vpack.c.bf16 %v2681, %v2680
    %v2688 = vpack.c.bf16 %v2683, %v2682
    %v2689 = vpack.c.bf16 %v2685, %v2684
    %v2690 = vpack.c.bf16 %v2686, %v2686
    %s2691 = scalar_lea.vmem %s17, 96
    %v2692 = vld [vmem:[%s2691] sm:$0xf]
    %v2693 = vld [vmem:[%s2691 + $0x4] sm:$0xf]
    %v2694 = vld [vmem:[%s2691 + $0x8] sm:$0xf]
    %v2695 = vld [vmem:[%s2691 + $0xc] sm:$0xf]
    %v2696 = vld [vmem:[%s2691 + $0x10] sm:$0xf]
    %v2697 = vld [vmem:[%s2691 + $0x14] sm:$0xf]
    %v2698 = vld [vmem:[%s2691 + $0x18] sm:$0xf]
    %v2699 = vld [vmem:[%s2691 + $0x1c] sm:$0xf]
    %s2700 = scalar_lea.vmem %s18, 3
    %v2701 = vld [vmem:[%s2700] sm:$0x1]
    %v2703 = vlaneseq
    %v2704 = vshrl.u32 %v2703, 7
    %v2705 = vsub.s32 0, %v2704
    %v2706 = vrot.slane %v2701, %v2705
    %v2716 = vunpack.c.l.b16 %v2692
    %v2717 = vunpack.c.l.b16 %v2693
    %v2718 = vunpack.c.l.b16 %v2694
    %v2719 = vunpack.c.l.b16 %v2695
    %v2720 = vunpack.c.l.b16 %v2696
    %v2721 = vunpack.c.l.b16 %v2697
    %v2722 = vunpack.c.l.b16 %v2698
    %v2723 = vunpack.c.l.b16 %v2699
    %v2724 = vpack.c.b16 %v2717, %v2716
    %v2725 = vpack.c.b16 %v2719, %v2718
    %v2726 = vpack.c.b16 %v2721, %v2720
    %v2727 = vpack.c.b16 %v2723, %v2722
    %v2733 = vsel %vm933, %v2687, 0
    %v2736 = vsel %vm933, %v2688, 0
    %v2739 = vsel %vm933, %v2689, 0
    %v2742 = vsel %vm933, %v2690, 0
    %2744 = vmatprep.subr.bf16.mxu0 0
    %2745 = vmatpush1.bf16.msra.mxu0 0
    %2746 = vmatprep.subr.bf16.mxu0 0
    %2747 = vmatpush1.bf16.msra.mxu0 0
    %2748 = vmatprep.subr.bf16.mxu0 0
    %2749 = vmatpush1.bf16.msra.mxu0 0
    %2750 = vmatprep.subr.bf16.mxu0 0
    %2751 = vmatpush1.bf16.msra.mxu0 0
    %2752 = vmatprep.subr.bf16.mxu0 0
    %2753 = vmatpush1.bf16.msra.mxu0 %v2727
    %2754 = vmatprep.subr.bf16.mxu0 0
    %2755 = vmatpush1.bf16.msra.mxu0 %v2726
    %2756 = vmatprep.subr.bf16.mxu0 0
    %2757 = vmatpush1.bf16.msra.mxu0 %v2725
    %2758 = vmatprep.subr.bf16.mxu0 0
    %2759 = vmatpush1.bf16.msra.mxu0 %v2724
    %2760 = vmatprep.subr.bf16.mxu0 0
    %2761 = vmatpush2.bf16.msra.mxu0 0
    %2762 = vmatprep.subr.bf16.mxu0 0
    %2763 = vmatpush2.bf16.msra.mxu0 0
    %2764 = vmatprep.subr.bf16.mxu0 0
    %2765 = vmatpush2.bf16.msra.mxu0 0
    %2766 = vmatprep.subr.bf16.mxu0 0
    %2767 = vmatpush2.bf16.msra.mxu0 0
    %2768 = vmatprep.subr.bf16.mxu0 0
    %2769 = vmatpush2.bf16.msra.mxu0 0
    %2770 = vmatprep.subr.bf16.mxu0 0
    %2771 = vmatpush2.bf16.msra.mxu0 0
    %2772 = vmatprep.subr.bf16.mxu0 0
    %2773 = vmatpush2.bf16.msra.mxu0 0
    %2774 = vmatprep.subr.bf16.mxu0 0
    %2775 = vmatpush2.bf16.msra.mxu0 0
    %2776 = vmatprep.mubr.bf16.mxu0 0
    %2777 = vmatmul.mubr.bf16.gmra.mxu0 %v2733
    %v2778 = vpop.f32.mrf.mxu0
    %v2779 = vadd.f32 %v2706, %v2778
    %v2780 = vpop.f32.mrf.mxu0
    %v2781 = vpop.f32.mrf.mxu0
    %v2782 = vadd.f32 %v2706, %v2781
    %v2783 = vpop.f32.mrf.mxu0
    %2784 = vmatprep.mubr.bf16.mxu0 0
    %2785 = vmatmul.mubr.bf16.gmra.mxu0 %v2736
    %v2786 = vpop.f32.mrf.mxu0
    %v2787 = vadd.f32 %v2706, %v2786
    %v2788 = vpop.f32.mrf.mxu0
    %v2789 = vpop.f32.mrf.mxu0
    %v2790 = vadd.f32 %v2706, %v2789
    %v2791 = vpop.f32.mrf.mxu0
    %2792 = vmatprep.mubr.bf16.mxu0 0
    %2793 = vmatmul.mubr.bf16.gmra.mxu0 %v2739
    %v2794 = vpop.f32.mrf.mxu0
    %v2795 = vadd.f32 %v2706, %v2794
    %v2796 = vpop.f32.mrf.mxu0
    %v2797 = vpop.f32.mrf.mxu0
    %v2798 = vadd.f32 %v2706, %v2797
    %v2799 = vpop.f32.mrf.mxu0
    %2800 = vmatprep.mubr.bf16.mxu0 0
    %2801 = vmatmul.mubr.bf16.gmra.mxu0 %v2742
    %v2802 = vpop.f32.mrf.mxu0
    %v2803 = vadd.f32 %v2706, %v2802
    %v2804 = vpop.f32.mrf.mxu0
    %v2805 = vpop.f32.mrf.mxu0
    %v2806 = vpop.f32.mrf.mxu0
    %2807 = vdwg.mxu0
    %v2808 = vpack.c.bf16 %v2782, %v2779
    %v2809 = vpack.c.bf16 %v2790, %v2787
    %v2810 = vpack.c.bf16 %v2798, %v2795
    %v2811 = vpack.c.bf16 %v2803, %v2803
    %v2813 = vsel %vm1018, %v2811, 0
    %2815 = vmatprep.subr.bf16.mxu0 0
    %2816 = vmatpush1.bf16.msra.mxu0 0
    %2817 = vmatprep.subr.bf16.mxu0 0
    %2818 = vmatpush1.bf16.msra.mxu0 0
    %2819 = vmatprep.subr.bf16.mxu0 0
    %2820 = vmatpush1.bf16.msra.mxu0 0
    %2821 = vmatprep.subr.bf16.mxu0 0
    %2822 = vmatpush1.bf16.msra.mxu0 0
    %2823 = vmatprep.subr.bf16.mxu0 0
    %2824 = vmatpush1.bf16.msra.mxu0 %v2813
    %2825 = vmatprep.subr.bf16.mxu0 0
    %2826 = vmatpush1.bf16.msra.mxu0 %v2810
    %2827 = vmatprep.subr.bf16.mxu0 0
    %2828 = vmatpush1.bf16.msra.mxu0 %v2809
    %2829 = vmatprep.subr.bf16.mxu0 0
    %2830 = vmatpush1.bf16.msra.mxu0 %v2808
    %2831 = vmatprep.subr.bf16.mxu0 0
    %2832 = vmatpush2.bf16.msra.mxu0 0
    %2833 = vmatprep.subr.bf16.mxu0 0
    %2834 = vmatpush2.bf16.msra.mxu0 0
    %2835 = vmatprep.subr.bf16.mxu0 0
    %2836 = vmatpush2.bf16.msra.mxu0 0
    %2837 = vmatprep.subr.bf16.mxu0 0
    %2838 = vmatpush2.bf16.msra.mxu0 0
    %2839 = vmatprep.subr.bf16.mxu0 0
    %2840 = vmatpush2.bf16.msra.mxu0 0
    %2841 = vmatprep.subr.bf16.mxu0 0
    %2842 = vmatpush2.bf16.msra.mxu0 0
    %2843 = vmatprep.subr.bf16.mxu0 0
    %2844 = vmatpush2.bf16.msra.mxu0 0
    %2845 = vmatprep.subr.bf16.mxu0 0
    %2846 = vmatpush2.bf16.msra.mxu0 0
    %2847 = vmatprep.mubr.bf16.mxu0 0
    %2848 = vmatmul.mubr.bf16.gmra.mxu0 %v1016
    %v2849 = vpop.f32.mrf.mxu0
    %v2850 = vadd.f32 0.0, %v2849
    %v2851 = vpop.f32.mrf.mxu0
    %v2852 = vpop.f32.mrf.mxu0
    %v2853 = vpop.f32.mrf.mxu0
    %2854 = vdwg.mxu0
    %s2855 = scalar_lea.vmem %s19, 3
    %v2856 = vld [vmem:[%s2855] sm:$0x1]
    %s2857 = scalar_lea.vmem %s20, 3
    %v2858 = vld [vmem:[%s2857] sm:$0x1]
    %v2859 = vsel %vm261, %v2850, 0.0
    %2860 = vadd.xlane.f32.xlu0 %v2859
    %v2861 = vpop.xlane.xlu0 %2860
    %v2862 = vmul.f32 %v2850, %v2850
    %v2863 = vsel %vm261, %v2862, 0.0
    %2864 = vadd.xlane.f32.xlu0 %v2863
    %v2865 = vpop.xlane.xlu0 %2864
    %v2866 = vmul.f32 %v2861, 0.03125
    %v2867 = vmul.f32 %v2865, 0.03125
    %v2868 = vmul.f32 %v2866, %v2866
    %v2869 = vsub.f32 %v2867, %v2868
    %v2870 = vsub.f32 %v2850, %v2866
    %v2871 = vadd.f32 %v2869, 1e-05
    %v2872 = vrsqrt.pop %v2871
    %v2873 = vmul.f32 %v2870, %v2872
    %v2875 = vlaneseq
    %v2876 = vshrl.u32 %v2875, 7
    %v2877 = vsub.s32 0, %v2876
    %v2878 = vrot.slane %v2856, %v2877
    %v2880 = vmul.f32 %v2873, %v2878
    %v2882 = vlaneseq
    %v2883 = vshrl.u32 %v2882, 7
    %v2884 = vsub.s32 0, %v2883
    %v2885 = vrot.slane %v2858, %v2884
    %v2887 = vadd.f32 %v2880, %v2885
    %v2888 = vadd.f32 %v2432, %v2887
    %v2889 = vpack.c.bf16 %v2888, %v2888
    %v2890 = vld [vmem:[%s23] sm:$0xf]
    %v2891 = vld [vmem:[%s23 + $0x4] sm:$0xf]
    %v2892 = vld [vmem:[%s23 + $0x8] sm:$0xf]
    %v2893 = vld [vmem:[%s23 + $0xc] sm:$0xf]
    %v2894 = vld [vmem:[%s24] sm:$0x1]
    %v2896 = vlaneseq
    %v2897 = vshrl.u32 %v2896, 7
    %v2898 = vsub.s32 0, %v2897
    %v2899 = vrot.slane %v2894, %v2898
    %v2905 = vunpack.c.l.b16 %v2890
    %v2906 = vunpack.c.l.b16 %v2891
    %v2907 = vunpack.c.l.b16 %v2892
    %v2908 = vunpack.c.l.b16 %v2893
    %v2909 = vpack.c.b16 %v2906, %v2905
    %v2910 = vpack.c.b16 %v2908, %v2907
    %v2914 = vsel %vm261, %v2889, 0
    %2916 = vmatprep.subr.bf16.mxu0 0
    %2917 = vmatpush1.bf16.msra.mxu0 0
    %2918 = vmatprep.subr.bf16.mxu0 0
    %2919 = vmatpush1.bf16.msra.mxu0 0
    %2920 = vmatprep.subr.bf16.mxu0 0
    %2921 = vmatpush1.bf16.msra.mxu0 0
    %2922 = vmatprep.subr.bf16.mxu0 0
    %2923 = vmatpush1.bf16.msra.mxu0 0
    %2924 = vmatprep.subr.bf16.mxu0 0
    %2925 = vmatpush1.bf16.msra.mxu0 0
    %2926 = vmatprep.subr.bf16.mxu0 0
    %2927 = vmatpush1.bf16.msra.mxu0 0
    %2928 = vmatprep.subr.bf16.mxu0 0
    %2929 = vmatpush1.bf16.msra.mxu0 %v2910
    %2930 = vmatprep.subr.bf16.mxu0 0
    %2931 = vmatpush1.bf16.msra.mxu0 %v2909
    %2932 = vmatprep.subr.bf16.mxu0 0
    %2933 = vmatpush2.bf16.msra.mxu0 0
    %2934 = vmatprep.subr.bf16.mxu0 0
    %2935 = vmatpush2.bf16.msra.mxu0 0
    %2936 = vmatprep.subr.bf16.mxu0 0
    %2937 = vmatpush2.bf16.msra.mxu0 0
    %2938 = vmatprep.subr.bf16.mxu0 0
    %2939 = vmatpush2.bf16.msra.mxu0 0
    %2940 = vmatprep.subr.bf16.mxu0 0
    %2941 = vmatpush2.bf16.msra.mxu0 0
    %2942 = vmatprep.subr.bf16.mxu0 0
    %2943 = vmatpush2.bf16.msra.mxu0 0
    %2944 = vmatprep.subr.bf16.mxu0 0
    %2945 = vmatpush2.bf16.msra.mxu0 0
    %2946 = vmatprep.subr.bf16.mxu0 0
    %2947 = vmatpush2.bf16.msra.mxu0 0
    %2948 = vmatprep.mubr.bf16.mxu0 0
    %2949 = vmatmul.mubr.bf16.gmra.mxu0 %v2914
    %v2950 = vpop.f32.mrf.mxu0
    %v2951 = vadd.f32 %v2899, %v2950
    %v2952 = vpop.f32.mrf.mxu0
    %v2953 = vpop.f32.mrf.mxu0
    %v2954 = vpop.f32.mrf.mxu0
    %2955 = vdwg.mxu0
    %2956 = vst [vmem:[#allocation2] sm:$0xff] %v2951
    // Predicated region
    $region102: #{tpu_custom_call.1} parent=1 // pred_check
      _
    $region103: #{tpu_custom_call.1} parent=1 // pred_check_branch
      %2958 = sbr.rel (0) target = $region105
    $region104: #{tpu_custom_call.1} parent=1 // pred_region
      %s2960 = ssub.s32 128, 128
      %2961 = vsyncadd [#allocation3], %s2960
      %s2963 = sshll.u32 [#allocation2], 4
      %s2964 = int_to_ptr.vmem [resolvable:$true] %s2963
      %2966 = dma.vmem_to_hbm [thread:$0]  %s2964, 128, %s25, [#allocation3]
    $region105: #{tpu_custom_call.1} parent=1 // pred_fallthru
      _
    // Predicated region
    $region106: #{tpu_custom_call.1} parent=1 // pred_check
      _
    $region107: #{tpu_custom_call.1} parent=1 // pred_check_branch
      %2968 = sbr.rel (0) target = $region109
    $region108: #{tpu_custom_call.1} parent=1 // pred_region
      %2969 = dma.done [#allocation3], 128
    $region109: #{tpu_custom_call.1} parent=1 // pred_fallthru
      _
    %2970 = vsyncpa [#allocation3], 1

</llo_original>
